<compile_context>
chip_gen: v7x
topology: tpu7x:2x2x1
jax: 0.10.0
libtpu: 0.0.40
codegen_flags: <defaults>
</compile_context>

<pallas_src>
import functools

import jax
import jax.numpy as jnp
from jax import lax
from jax.experimental import pallas as pl
from jax.experimental.pallas import tpu as pltpu


# ---------------------------------------------------------------------------
# In-kernel helpers (all f32 element-wise math)
# ---------------------------------------------------------------------------
def _gelu_tanh(x):
    c = 0.7978845608028654  # sqrt(2/pi)
    return 0.5 * x * (1.0 + jnp.tanh(c * (x + 0.044715 * x * x * x)))


def _layernorm(x, gamma, beta, eps):
    mu = jnp.mean(x, axis=-1, keepdims=True)
    xc = x - mu
    var = jnp.mean(xc * xc, axis=-1, keepdims=True)
    return xc * lax.rsqrt(var + eps) * gamma + beta


# ---------------------------------------------------------------------------
# Fused transformer-layer kernel.
# One grid step processes `bb` batch elements = bb*seq flattened rows.
# ---------------------------------------------------------------------------
def _transformer_layer_kernel(x_ref,
                              ln1_g_ref, ln1_b_ref,
                              wq_ref, wk_ref, wv_ref, wo_ref, bo_ref,
                              ln2_g_ref, ln2_b_ref,
                              w1_ref, b1_ref, w2_ref, b2_ref,
                              out_ref,
                              *, bb, seq, heads, eps):
    x = x_ref[...]                                                  # (bb*seq, D) f32

    # ---------------- PreNorm + Attention ----------------
    xn = _layernorm(x, ln1_g_ref[...], ln1_b_ref[...], eps)         # f32
    xn_b = xn.astype(jnp.bfloat16)                                  # matmul operand

    dim = x.shape[-1]
    att_rows = [jnp.zeros((seq, dim), jnp.float32) for _ in range(bb)]

    for h in range(heads):                                          # static unroll
        # Head-major projections: full D=128 contraction, no lane slicing.
        q = jnp.dot(xn_b, wq_ref[h], preferred_element_type=jnp.float32)  # (R, dh); scale folded
        k = jnp.dot(xn_b, wk_ref[h], preferred_element_type=jnp.float32)
        v = jnp.dot(xn_b, wv_ref[h], preferred_element_type=jnp.float32)
        q_b = q.astype(jnp.bfloat16)
        k_b = k.astype(jnp.bfloat16)
        v_b = v.astype(jnp.bfloat16)
        wo_h = wo_ref[h]                                            # (dh, D) bf16

        for b in range(bb):                                         # static sublane row slices
            r0 = b * seq
            qb = q_b[r0:r0 + seq]
            kb = k_b[r0:r0 + seq]
            vb = v_b[r0:r0 + seq]
            # q @ k.T without an explicit transpose (contract last dims).
            dots = lax.dot_general(qb, kb, (((1,), (1,)), ((), ())),
                                   preferred_element_type=jnp.float32)     # (seq, seq) f32
            m = jnp.max(dots, axis=-1, keepdims=True)
            p = jnp.exp(dots - m)
            inv_l = pl.reciprocal(jnp.sum(p, axis=-1, keepdims=True), approx=True)
            attn = p * inv_l
            ho = jnp.dot(attn.astype(jnp.bfloat16), vb,
                         preferred_element_type=jnp.float32)               # (seq, dh)
            # Per-head out-projection accumulation (no lane concat of heads).
            att_rows[b] = att_rows[b] + jnp.dot(ho.astype(jnp.bfloat16), wo_h,
                                                preferred_element_type=jnp.float32)

    att = att_rows[0] if bb == 1 else jnp.concatenate(att_rows, axis=0)    # (R, D), sublane concat
    x1 = x + att + bo_ref[...]                                             # residual 1 (+ to_out bias)

    # ---------------- PreNorm + FeedForward ----------------
    xn2 = _layernorm(x1, ln2_g_ref[...], ln2_b_ref[...], eps)
    h1 = jnp.dot(xn2.astype(jnp.bfloat16), w1_ref[...],
                 preferred_element_type=jnp.float32) + b1_ref[...]         # (R, M)
    h1 = _gelu_tanh(h1)
    ff = jnp.dot(h1.astype(jnp.bfloat16), w2_ref[...],
                 preferred_element_type=jnp.float32) + b2_ref[...]         # (R, D)

    out_ref[...] = x1 + ff                                                 # residual 2


def _const_spec(arr):
    nd = arr.ndim
    return pl.BlockSpec(arr.shape, lambda i, _nd=nd: (0,) * _nd)


def transformer_forward(x, p, *, heads, dim_head, batch_block=None):
    B, N, D = x.shape
    inner = heads * dim_head
    M = p["ff_w1"].shape[1]
    scale = float(dim_head) ** -0.5

    # One grid step over all batch elements by default (fills MXU rows; the
    # per-step pipeline overhead is paid once).  For multi-TC sharding one
    # would raise the number of blocks and use core-parallel semantics.
    if batch_block is None:
        batch_block = B
    assert B % batch_block == 0, "batch must be divisible by batch_block"
    num_blocks = B // batch_block
    rows_blk = batch_block * N

    # ---- Weight prep (done once per call, outside the kernel) -------------
    # Head-major layouts + bf16 matmul operands; attention scale folded into wq.
    w_qkv = p["w_qkv"]                                        # (D, 3*inner) f32
    wq = w_qkv[:, :inner] * scale
    wk = w_qkv[:, inner:2 * inner]
    wv = w_qkv[:, 2 * inner:]

    def head_major(w):                                        # (D, inner) -> (heads, D, dh)
        return w.reshape(D, heads, dim_head).transpose(1, 0, 2).astype(jnp.bfloat16)

    wq_h = head_major(wq)
    wk_h = head_major(wk)
    wv_h = head_major(wv)
    wo_h = p["w_o"].reshape(heads, dim_head, D).astype(jnp.bfloat16)   # row slices of w_o
    ff_w1 = p["ff_w1"].astype(jnp.bfloat16)
    ff_w2 = p["ff_w2"].astype(jnp.bfloat16)

    x2 = x.reshape(B * N, D)                                  # batch flattened into rows

    operands = (x2,
                p["ln1_g"], p["ln1_b"],
                wq_h, wk_h, wv_h, wo_h, p["b_o"],
                p["ln2_g"], p["ln2_b"],
                ff_w1, p["ff_b1"], ff_w2, p["ff_b2"])

    kernel = functools.partial(_transformer_layer_kernel,
                               bb=batch_block, seq=N, heads=heads, eps=1e-5)

    # Advisory cost estimate (weights counted ONCE per call, not B times).
    flops = 2 * B * N * (D * 3 * inner                 # qkv projections
                         + 2 * heads * N * dim_head    # dots + attn@v
                         + inner * D                   # out projection
                         + D * M + M * D)              # feed-forward
    transcendentals = B * (heads * N * N + heads * N + N * M + 4 * N)
    out_bytes = B * N * D * 4
    bytes_accessed = out_bytes + sum(int(o.size) * o.dtype.itemsize for o in operands)

    in_specs = [pl.BlockSpec((rows_blk, D), lambda i: (i, 0))] + \
               [_const_spec(o) for o in operands[1:]]

    out2 = pl.pallas_call(
        kernel,
        out_shape=jax.ShapeDtypeStruct((B * N, D), jnp.float32),
        grid=(num_blocks,),
        in_specs=in_specs,
        out_specs=pl.BlockSpec((rows_blk, D), lambda i: (i, 0)),
        compiler_params=pltpu.CompilerParams(
            dimension_semantics=("parallel",)),
        cost_estimate=pl.CostEstimate(flops=int(flops),
                                      transcendentals=int(transcendentals),
                                      bytes_accessed=int(bytes_accessed)),
    )(*operands)

    return out2.reshape(B, N, D)


# ---------------------------------------------------------------------------
# Pure-JAX reference (same math, f32 weights) for correctness validation.
# ---------------------------------------------------------------------------
def transformer_reference(x, p, *, heads, dim_head):
    def ln(t, g, b):
        mu = jnp.mean(t, -1, keepdims=True)
        var = jnp.mean((t - mu) ** 2, -1, keepdims=True)
        return (t - mu) / jnp.sqrt(var + 1e-5) * g + b

    B, N, D = x.shape
    inner = heads * dim_head
    xn = ln(x, p["ln1_g"][0], p["ln1_b"][0])
    qkv = xn @ p["w_qkv"]
    q, k, v = jnp.split(qkv, 3, axis=-1)

    def to_heads(t):
        return t.reshape(B, N, heads, dim_head).transpose(0, 2, 1, 3)

    q, k, v = map(to_heads, (q, k, v))
    dots = jnp.einsum("bhnd,bhmd->bhnm", q, k) * (float(dim_head) ** -0.5)
    attn = jax.nn.softmax(dots, axis=-1)
    out = jnp.einsum("bhnm,bhmd->bhnd", attn, v)
    out = out.transpose(0, 2, 1, 3).reshape(B, N, inner)
    att = out @ p["w_o"] + p["b_o"][0]
    x1 = x + att

    xn2 = ln(x1, p["ln2_g"][0], p["ln2_b"][0])
    h = xn2 @ p["ff_w1"] + p["ff_b1"][0]
    h = jax.nn.gelu(h, approximate=True)
    ff = h @ p["ff_w2"] + p["ff_b2"][0]
    return x1 + ff


# ---------------------------------------------------------------------------
# Deterministic synthetic parameters
# ---------------------------------------------------------------------------
def make_params(key, dim, heads, dim_head, mlp_dim):
    inner = heads * dim_head
    ks = jax.random.split(key, 10)

    def w(k, shape, fan_in):
        return jax.random.normal(k, shape, jnp.float32) / jnp.sqrt(float(fan_in))

    p = {}
    p["ln1_g"] = 1.0 + 0.1 * jax.random.normal(ks[0], (1, dim), jnp.float32)
    p["ln1_b"] = 0.1 * jax.random.normal(ks[1], (1, dim), jnp.float32)
    p["w_qkv"] = w(ks[2], (dim, 3 * inner), dim)            # to_qkv (bias=False)
    p["w_o"] = w(ks[3], (inner, dim), inner)                # to_out Linear
    p["b_o"] = 0.02 * jax.random.normal(ks[4], (1, dim), jnp.float32)
    p["ln2_g"] = 1.0 + 0.1 * jax.random.normal(ks[5], (1, dim), jnp.float32)
    p["ln2_b"] = 0.1 * jax.random.normal(ks[6], (1, dim), jnp.float32)
    p["ff_w1"] = w(ks[7], (dim, mlp_dim), dim)
    p["ff_b1"] = 0.02 * jax.random.normal(ks[8], (1, mlp_dim), jnp.float32)
    p["ff_w2"] = w(ks[9], (mlp_dim, dim), mlp_dim)
    p["ff_b2"] = jnp.zeros((1, dim), jnp.float32)
    return p


if __name__ == "__main__":
    # dim=128 / mlp=256 keep the last dim lane-dense (multiples of 128);
    # heads=4, dim_head=32 -> inner_dim=128 (project_out is True as in PyTorch).
    B, SEQ, DIM, HEADS, DIM_HEAD, MLP = 2, 16, 128, 4, 32, 256

    key = jax.random.PRNGKey(0)
    k_params, k_x = jax.random.split(key)
    params = make_params(k_params, DIM, HEADS, DIM_HEAD, MLP)
    x = jax.random.normal(k_x, (B, SEQ, DIM), jnp.float32)

    out = transformer_forward(x, params, heads=HEADS, dim_head=DIM_HEAD)
    out = jax.block_until_ready(out)

    ref = transformer_reference(x, params, heads=HEADS, dim_head=DIM_HEAD)

    assert out.shape == (B, SEQ, DIM), out.shape
    assert bool(jnp.all(jnp.isfinite(out)))
    max_err = float(jnp.max(jnp.abs(out - ref)))
    mean_err = float(jnp.mean(jnp.abs(out - ref)))
    # bf16 matmul operands (f32 accumulate) vs f32 reference -> small mismatch.
    assert max_err < 1e-1, f"max abs error vs reference: {max_err}"
    assert mean_err < 1e-2, f"mean abs error vs reference: {mean_err}"
    print("KERNEL_OK")
</pallas_src>

<mosaic_0001>
module attributes {stable_mosaic.version = 11 : i64} {
  func.func @_transformer_layer_kernel(%arg0: i32, %arg1: memref<32x128xf32, #tpu.memory_space<vmem>>, %arg2: memref<1x128xf32, #tpu.memory_space<vmem>>, %arg3: memref<1x128xf32, #tpu.memory_space<vmem>>, %arg4: memref<4x128x32xbf16, #tpu.memory_space<vmem>>, %arg5: memref<4x128x32xbf16, #tpu.memory_space<vmem>>, %arg6: memref<4x128x32xbf16, #tpu.memory_space<vmem>>, %arg7: memref<4x32x128xbf16, #tpu.memory_space<vmem>>, %arg8: memref<1x128xf32, #tpu.memory_space<vmem>>, %arg9: memref<1x128xf32, #tpu.memory_space<vmem>>, %arg10: memref<1x128xf32, #tpu.memory_space<vmem>>, %arg11: memref<128x256xbf16, #tpu.memory_space<vmem>>, %arg12: memref<1x256xf32, #tpu.memory_space<vmem>>, %arg13: memref<256x128xbf16, #tpu.memory_space<vmem>>, %arg14: memref<1x128xf32, #tpu.memory_space<vmem>>, %arg15: memref<32x128xf32, #tpu.memory_space<vmem>>) attributes {dimension_semantics = [#tpu.dimension_semantics<parallel>], iteration_bounds = array<i64: 1>, scalar_prefetch = 0 : i64, scratch_operands = 0 : i64, tpu.core_type = #tpu.core_type<tc>, window_params = [{transform_indices = @transform_0, window_bounds = array<i64: 32, 128>}, {pipeline_mode = #tpu.pipeline_mode<synchronous>, transform_indices = @transform_1, window_bounds = array<i64: 1, 128>}, {pipeline_mode = #tpu.pipeline_mode<synchronous>, transform_indices = @transform_2, window_bounds = array<i64: 1, 128>}, {pipeline_mode = #tpu.pipeline_mode<synchronous>, transform_indices = @transform_3, window_bounds = array<i64: 4, 128, 32>}, {pipeline_mode = #tpu.pipeline_mode<synchronous>, transform_indices = @transform_4, window_bounds = array<i64: 4, 128, 32>}, {pipeline_mode = #tpu.pipeline_mode<synchronous>, transform_indices = @transform_5, window_bounds = array<i64: 4, 128, 32>}, {pipeline_mode = #tpu.pipeline_mode<synchronous>, transform_indices = @transform_6, window_bounds = array<i64: 4, 32, 128>}, {pipeline_mode = #tpu.pipeline_mode<synchronous>, transform_indices = @transform_7, window_bounds = array<i64: 1, 128>}, {pipeline_mode = #tpu.pipeline_mode<synchronous>, transform_indices = @transform_8, window_bounds = array<i64: 1, 128>}, {pipeline_mode = #tpu.pipeline_mode<synchronous>, transform_indices = @transform_9, window_bounds = array<i64: 1, 128>}, {pipeline_mode = #tpu.pipeline_mode<synchronous>, transform_indices = @transform_10, window_bounds = array<i64: 128, 256>}, {pipeline_mode = #tpu.pipeline_mode<synchronous>, transform_indices = @transform_11, window_bounds = array<i64: 1, 256>}, {pipeline_mode = #tpu.pipeline_mode<synchronous>, transform_indices = @transform_12, window_bounds = array<i64: 256, 128>}, {pipeline_mode = #tpu.pipeline_mode<synchronous>, transform_indices = @transform_13, window_bounds = array<i64: 1, 128>}, {transform_indices = @transform_14, window_bounds = array<i64: 32, 128>}]} {
    %c0 = arith.constant 0 : index
    %c0_0 = arith.constant 0 : index
    %0 = vector.load %arg1[%c0, %c0_0] : memref<32x128xf32, #tpu.memory_space<vmem>>, vector<32x128xf32>
    %c0_1 = arith.constant 0 : index
    %c0_2 = arith.constant 0 : index
    %1 = vector.load %arg2[%c0_1, %c0_2] : memref<1x128xf32, #tpu.memory_space<vmem>>, vector<1x128xf32>
    %c0_3 = arith.constant 0 : index
    %c0_4 = arith.constant 0 : index
    %2 = vector.load %arg3[%c0_3, %c0_4] : memref<1x128xf32, #tpu.memory_space<vmem>>, vector<1x128xf32>
    %cst = arith.constant dense<0.000000e+00> : vector<32xf32>
    %3 = vector.multi_reduction <add>, %0, %cst [1] : vector<32x128xf32> to vector<32xf32>
    %4 = vector.shape_cast %3 : vector<32xf32> to vector<32x1xf32>
    %cst_5 = arith.constant 1.280000e+02 : f32
    %5 = vector.broadcast %cst_5 : f32 to vector<32x1xf32>
    %6 = arith.divf %4, %5 : vector<32x1xf32>
    %7 = vector.broadcast %6 : vector<32x1xf32> to vector<32x128xf32>
    %8 = arith.subf %0, %7 : vector<32x128xf32>
    %9 = arith.mulf %8, %8 : vector<32x128xf32>
    %cst_6 = arith.constant dense<0.000000e+00> : vector<32xf32>
    %10 = vector.multi_reduction <add>, %9, %cst_6 [1] : vector<32x128xf32> to vector<32xf32>
    %11 = vector.shape_cast %10 : vector<32xf32> to vector<32x1xf32>
    %cst_7 = arith.constant 1.280000e+02 : f32
    %12 = vector.broadcast %cst_7 : f32 to vector<32x1xf32>
    %13 = arith.divf %11, %12 : vector<32x1xf32>
    %cst_8 = arith.constant 9.99999974E-6 : f32
    %14 = vector.broadcast %cst_8 : f32 to vector<32x1xf32>
    %15 = arith.addf %13, %14 : vector<32x1xf32>
    %16 = math.rsqrt %15 : vector<32x1xf32>
    %17 = vector.broadcast %16 : vector<32x1xf32> to vector<32x128xf32>
    %18 = arith.mulf %8, %17 : vector<32x128xf32>
    %19 = vector.broadcast %1 : vector<1x128xf32> to vector<32x128xf32>
    %20 = arith.mulf %18, %19 : vector<32x128xf32>
    %21 = vector.broadcast %2 : vector<1x128xf32> to vector<32x128xf32>
    %22 = arith.addf %20, %21 : vector<32x128xf32>
    %23 = arith.truncf %22 : vector<32x128xf32> to vector<32x128xbf16>
    %cst_9 = arith.constant 0.000000e+00 : f32
    %24 = vector.broadcast %cst_9 : f32 to vector<16x128xf32>
    %cst_10 = arith.constant 0.000000e+00 : f32
    %25 = vector.broadcast %cst_10 : f32 to vector<16x128xf32>
    %c0_11 = arith.constant 0 : index
    %c0_12 = arith.constant 0 : index
    %c0_13 = arith.constant 0 : index
    %26 = vector.load %arg4[%c0_11, %c0_12, %c0_13] : memref<4x128x32xbf16, #tpu.memory_space<vmem>>, vector<1x128x32xbf16>
    %27 = vector.shape_cast %26 : vector<1x128x32xbf16> to vector<128x32xbf16>
    %cst_14 = arith.constant dense<0.000000e+00> : vector<32x32xf32>
    %28 = tpu.matmul %23, %27, %cst_14 {dimension_numbers = #tpu.dot_dimension_numbers<[1], [0], [0], [1], [0, 0, 1, 1], [], []>} : vector<32x128xbf16>, vector<128x32xbf16>, vector<32x32xf32> -> vector<32x32xf32>
    %c0_15 = arith.constant 0 : index
    %c0_16 = arith.constant 0 : index
    %c0_17 = arith.constant 0 : index
    %29 = vector.load %arg5[%c0_15, %c0_16, %c0_17] : memref<4x128x32xbf16, #tpu.memory_space<vmem>>, vector<1x128x32xbf16>
    %30 = vector.shape_cast %29 : vector<1x128x32xbf16> to vector<128x32xbf16>
    %cst_18 = arith.constant dense<0.000000e+00> : vector<32x32xf32>
    %31 = tpu.matmul %23, %30, %cst_18 {dimension_numbers = #tpu.dot_dimension_numbers<[1], [0], [0], [1], [0, 0, 1, 1], [], []>} : vector<32x128xbf16>, vector<128x32xbf16>, vector<32x32xf32> -> vector<32x32xf32>
    %c0_19 = arith.constant 0 : index
    %c0_20 = arith.constant 0 : index
    %c0_21 = arith.constant 0 : index
    %32 = vector.load %arg6[%c0_19, %c0_20, %c0_21] : memref<4x128x32xbf16, #tpu.memory_space<vmem>>, vector<1x128x32xbf16>
    %33 = vector.shape_cast %32 : vector<1x128x32xbf16> to vector<128x32xbf16>
    %cst_22 = arith.constant dense<0.000000e+00> : vector<32x32xf32>
    %34 = tpu.matmul %23, %33, %cst_22 {dimension_numbers = #tpu.dot_dimension_numbers<[1], [0], [0], [1], [0, 0, 1, 1], [], []>} : vector<32x128xbf16>, vector<128x32xbf16>, vector<32x32xf32> -> vector<32x32xf32>
    %35 = arith.truncf %28 : vector<32x32xf32> to vector<32x32xbf16>
    %36 = arith.truncf %31 : vector<32x32xf32> to vector<32x32xbf16>
    %37 = arith.truncf %34 : vector<32x32xf32> to vector<32x32xbf16>
    %c0_23 = arith.constant 0 : index
    %c0_24 = arith.constant 0 : index
    %c0_25 = arith.constant 0 : index
    %38 = vector.load %arg7[%c0_23, %c0_24, %c0_25] : memref<4x32x128xbf16, #tpu.memory_space<vmem>>, vector<1x32x128xbf16>
    %39 = vector.shape_cast %38 : vector<1x32x128xbf16> to vector<32x128xbf16>
    %40 = vector.extract_strided_slice %35 {offsets = [0, 0], sizes = [16, 32], strides = [1, 1]} : vector<32x32xbf16> to vector<16x32xbf16>
    %41 = vector.extract_strided_slice %36 {offsets = [0, 0], sizes = [16, 32], strides = [1, 1]} : vector<32x32xbf16> to vector<16x32xbf16>
    %42 = vector.extract_strided_slice %37 {offsets = [0, 0], sizes = [16, 32], strides = [1, 1]} : vector<32x32xbf16> to vector<16x32xbf16>
    %cst_26 = arith.constant dense<0.000000e+00> : vector<16x16xf32>
    %43 = tpu.matmul %40, %41, %cst_26 {dimension_numbers = #tpu.dot_dimension_numbers<[1], [1], [0], [0], [0, 0, 1, 0], [], []>} : vector<16x32xbf16>, vector<16x32xbf16>, vector<16x16xf32> -> vector<16x16xf32>
    %cst_27 = arith.constant dense<0xFF800000> : vector<16xf32>
    %44 = vector.multi_reduction <maximumf>, %43, %cst_27 [1] : vector<16x16xf32> to vector<16xf32>
    %45 = vector.shape_cast %44 : vector<16xf32> to vector<16x1xf32>
    %46 = vector.broadcast %45 : vector<16x1xf32> to vector<16x16xf32>
    %47 = arith.subf %43, %46 : vector<16x16xf32>
    %48 = math.exp %47 : vector<16x16xf32>
    %cst_28 = arith.constant dense<0.000000e+00> : vector<16xf32>
    %49 = vector.multi_reduction <add>, %48, %cst_28 [1] : vector<16x16xf32> to vector<16xf32>
    %50 = vector.shape_cast %49 : vector<16xf32> to vector<16x1xf32>
    %51 = tpu.reciprocal %50 {approx = true} : vector<16x1xf32> -> vector<16x1xf32>
    %52 = vector.broadcast %51 : vector<16x1xf32> to vector<16x16xf32>
    %53 = arith.mulf %48, %52 : vector<16x16xf32>
    %54 = arith.truncf %53 : vector<16x16xf32> to vector<16x16xbf16>
    %cst_29 = arith.constant dense<0.000000e+00> : vector<16x32xf32>
    %55 = tpu.matmul %54, %42, %cst_29 {dimension_numbers = #tpu.dot_dimension_numbers<[1], [0], [0], [1], [0, 0, 1, 1], [], []>} : vector<16x16xbf16>, vector<16x32xbf16>, vector<16x32xf32> -> vector<16x32xf32>
    %56 = arith.truncf %55 : vector<16x32xf32> to vector<16x32xbf16>
    %cst_30 = arith.constant dense<0.000000e+00> : vector<16x128xf32>
    %57 = tpu.matmul %56, %39, %cst_30 {dimension_numbers = #tpu.dot_dimension_numbers<[1], [0], [0], [1], [0, 0, 1, 1], [], []>} : vector<16x32xbf16>, vector<32x128xbf16>, vector<16x128xf32> -> vector<16x128xf32>
    %58 = arith.addf %24, %57 : vector<16x128xf32>
    %59 = vector.extract_strided_slice %35 {offsets = [16, 0], sizes = [16, 32], strides = [1, 1]} : vector<32x32xbf16> to vector<16x32xbf16>
    %60 = vector.extract_strided_slice %36 {offsets = [16, 0], sizes = [16, 32], strides = [1, 1]} : vector<32x32xbf16> to vector<16x32xbf16>
    %61 = vector.extract_strided_slice %37 {offsets = [16, 0], sizes = [16, 32], strides = [1, 1]} : vector<32x32xbf16> to vector<16x32xbf16>
    %cst_31 = arith.constant dense<0.000000e+00> : vector<16x16xf32>
    %62 = tpu.matmul %59, %60, %cst_31 {dimension_numbers = #tpu.dot_dimension_numbers<[1], [1], [0], [0], [0, 0, 1, 0], [], []>} : vector<16x32xbf16>, vector<16x32xbf16>, vector<16x16xf32> -> vector<16x16xf32>
    %cst_32 = arith.constant dense<0xFF800000> : vector<16xf32>
    %63 = vector.multi_reduction <maximumf>, %62, %cst_32 [1] : vector<16x16xf32> to vector<16xf32>
    %64 = vector.shape_cast %63 : vector<16xf32> to vector<16x1xf32>
    %65 = vector.broadcast %64 : vector<16x1xf32> to vector<16x16xf32>
    %66 = arith.subf %62, %65 : vector<16x16xf32>
    %67 = math.exp %66 : vector<16x16xf32>
    %cst_33 = arith.constant dense<0.000000e+00> : vector<16xf32>
    %68 = vector.multi_reduction <add>, %67, %cst_33 [1] : vector<16x16xf32> to vector<16xf32>
    %69 = vector.shape_cast %68 : vector<16xf32> to vector<16x1xf32>
    %70 = tpu.reciprocal %69 {approx = true} : vector<16x1xf32> -> vector<16x1xf32>
    %71 = vector.broadcast %70 : vector<16x1xf32> to vector<16x16xf32>
    %72 = arith.mulf %67, %71 : vector<16x16xf32>
    %73 = arith.truncf %72 : vector<16x16xf32> to vector<16x16xbf16>
    %cst_34 = arith.constant dense<0.000000e+00> : vector<16x32xf32>
    %74 = tpu.matmul %73, %61, %cst_34 {dimension_numbers = #tpu.dot_dimension_numbers<[1], [0], [0], [1], [0, 0, 1, 1], [], []>} : vector<16x16xbf16>, vector<16x32xbf16>, vector<16x32xf32> -> vector<16x32xf32>
    %75 = arith.truncf %74 : vector<16x32xf32> to vector<16x32xbf16>
    %cst_35 = arith.constant dense<0.000000e+00> : vector<16x128xf32>
    %76 = tpu.matmul %75, %39, %cst_35 {dimension_numbers = #tpu.dot_dimension_numbers<[1], [0], [0], [1], [0, 0, 1, 1], [], []>} : vector<16x32xbf16>, vector<32x128xbf16>, vector<16x128xf32> -> vector<16x128xf32>
    %77 = arith.addf %25, %76 : vector<16x128xf32>
    %c1 = arith.constant 1 : index
    %c0_36 = arith.constant 0 : index
    %c0_37 = arith.constant 0 : index
    %78 = vector.load %arg4[%c1, %c0_36, %c0_37] : memref<4x128x32xbf16, #tpu.memory_space<vmem>>, vector<1x128x32xbf16>
    %79 = vector.shape_cast %78 : vector<1x128x32xbf16> to vector<128x32xbf16>
    %cst_38 = arith.constant dense<0.000000e+00> : vector<32x32xf32>
    %80 = tpu.matmul %23, %79, %cst_38 {dimension_numbers = #tpu.dot_dimension_numbers<[1], [0], [0], [1], [0, 0, 1, 1], [], []>} : vector<32x128xbf16>, vector<128x32xbf16>, vector<32x32xf32> -> vector<32x32xf32>
    %c1_39 = arith.constant 1 : index
    %c0_40 = arith.constant 0 : index
    %c0_41 = arith.constant 0 : index
    %81 = vector.load %arg5[%c1_39, %c0_40, %c0_41] : memref<4x128x32xbf16, #tpu.memory_space<vmem>>, vector<1x128x32xbf16>
    %82 = vector.shape_cast %81 : vector<1x128x32xbf16> to vector<128x32xbf16>
    %cst_42 = arith.constant dense<0.000000e+00> : vector<32x32xf32>
    %83 = tpu.matmul %23, %82, %cst_42 {dimension_numbers = #tpu.dot_dimension_numbers<[1], [0], [0], [1], [0, 0, 1, 1], [], []>} : vector<32x128xbf16>, vector<128x32xbf16>, vector<32x32xf32> -> vector<32x32xf32>
    %c1_43 = arith.constant 1 : index
    %c0_44 = arith.constant 0 : index
    %c0_45 = arith.constant 0 : index
    %84 = vector.load %arg6[%c1_43, %c0_44, %c0_45] : memref<4x128x32xbf16, #tpu.memory_space<vmem>>, vector<1x128x32xbf16>
    %85 = vector.shape_cast %84 : vector<1x128x32xbf16> to vector<128x32xbf16>
    %cst_46 = arith.constant dense<0.000000e+00> : vector<32x32xf32>
    %86 = tpu.matmul %23, %85, %cst_46 {dimension_numbers = #tpu.dot_dimension_numbers<[1], [0], [0], [1], [0, 0, 1, 1], [], []>} : vector<32x128xbf16>, vector<128x32xbf16>, vector<32x32xf32> -> vector<32x32xf32>
    %87 = arith.truncf %80 : vector<32x32xf32> to vector<32x32xbf16>
    %88 = arith.truncf %83 : vector<32x32xf32> to vector<32x32xbf16>
    %89 = arith.truncf %86 : vector<32x32xf32> to vector<32x32xbf16>
    %c1_47 = arith.constant 1 : index
    %c0_48 = arith.constant 0 : index
    %c0_49 = arith.constant 0 : index
    %90 = vector.load %arg7[%c1_47, %c0_48, %c0_49] : memref<4x32x128xbf16, #tpu.memory_space<vmem>>, vector<1x32x128xbf16>
    %91 = vector.shape_cast %90 : vector<1x32x128xbf16> to vector<32x128xbf16>
    %92 = vector.extract_strided_slice %87 {offsets = [0, 0], sizes = [16, 32], strides = [1, 1]} : vector<32x32xbf16> to vector<16x32xbf16>
    %93 = vector.extract_strided_slice %88 {offsets = [0, 0], sizes = [16, 32], strides = [1, 1]} : vector<32x32xbf16> to vector<16x32xbf16>
    %94 = vector.extract_strided_slice %89 {offsets = [0, 0], sizes = [16, 32], strides = [1, 1]} : vector<32x32xbf16> to vector<16x32xbf16>
    %cst_50 = arith.constant dense<0.000000e+00> : vector<16x16xf32>
    %95 = tpu.matmul %92, %93, %cst_50 {dimension_numbers = #tpu.dot_dimension_numbers<[1], [1], [0], [0], [0, 0, 1, 0], [], []>} : vector<16x32xbf16>, vector<16x32xbf16>, vector<16x16xf32> -> vector<16x16xf32>
    %cst_51 = arith.constant dense<0xFF800000> : vector<16xf32>
    %96 = vector.multi_reduction <maximumf>, %95, %cst_51 [1] : vector<16x16xf32> to vector<16xf32>
    %97 = vector.shape_cast %96 : vector<16xf32> to vector<16x1xf32>
    %98 = vector.broadcast %97 : vector<16x1xf32> to vector<16x16xf32>
    %99 = arith.subf %95, %98 : vector<16x16xf32>
    %100 = math.exp %99 : vector<16x16xf32>
    %cst_52 = arith.constant dense<0.000000e+00> : vector<16xf32>
    %101 = vector.multi_reduction <add>, %100, %cst_52 [1] : vector<16x16xf32> to vector<16xf32>
    %102 = vector.shape_cast %101 : vector<16xf32> to vector<16x1xf32>
    %103 = tpu.reciprocal %102 {approx = true} : vector<16x1xf32> -> vector<16x1xf32>
    %104 = vector.broadcast %103 : vector<16x1xf32> to vector<16x16xf32>
    %105 = arith.mulf %100, %104 : vector<16x16xf32>
    %106 = arith.truncf %105 : vector<16x16xf32> to vector<16x16xbf16>
    %cst_53 = arith.constant dense<0.000000e+00> : vector<16x32xf32>
    %107 = tpu.matmul %106, %94, %cst_53 {dimension_numbers = #tpu.dot_dimension_numbers<[1], [0], [0], [1], [0, 0, 1, 1], [], []>} : vector<16x16xbf16>, vector<16x32xbf16>, vector<16x32xf32> -> vector<16x32xf32>
    %108 = arith.truncf %107 : vector<16x32xf32> to vector<16x32xbf16>
    %cst_54 = arith.constant dense<0.000000e+00> : vector<16x128xf32>
    %109 = tpu.matmul %108, %91, %cst_54 {dimension_numbers = #tpu.dot_dimension_numbers<[1], [0], [0], [1], [0, 0, 1, 1], [], []>} : vector<16x32xbf16>, vector<32x128xbf16>, vector<16x128xf32> -> vector<16x128xf32>
    %110 = arith.addf %58, %109 : vector<16x128xf32>
    %111 = vector.extract_strided_slice %87 {offsets = [16, 0], sizes = [16, 32], strides = [1, 1]} : vector<32x32xbf16> to vector<16x32xbf16>
    %112 = vector.extract_strided_slice %88 {offsets = [16, 0], sizes = [16, 32], strides = [1, 1]} : vector<32x32xbf16> to vector<16x32xbf16>
    %113 = vector.extract_strided_slice %89 {offsets = [16, 0], sizes = [16, 32], strides = [1, 1]} : vector<32x32xbf16> to vector<16x32xbf16>
    %cst_55 = arith.constant dense<0.000000e+00> : vector<16x16xf32>
    %114 = tpu.matmul %111, %112, %cst_55 {dimension_numbers = #tpu.dot_dimension_numbers<[1], [1], [0], [0], [0, 0, 1, 0], [], []>} : vector<16x32xbf16>, vector<16x32xbf16>, vector<16x16xf32> -> vector<16x16xf32>
    %cst_56 = arith.constant dense<0xFF800000> : vector<16xf32>
    %115 = vector.multi_reduction <maximumf>, %114, %cst_56 [1] : vector<16x16xf32> to vector<16xf32>
    %116 = vector.shape_cast %115 : vector<16xf32> to vector<16x1xf32>
    %117 = vector.broadcast %116 : vector<16x1xf32> to vector<16x16xf32>
    %118 = arith.subf %114, %117 : vector<16x16xf32>
    %119 = math.exp %118 : vector<16x16xf32>
    %cst_57 = arith.constant dense<0.000000e+00> : vector<16xf32>
    %120 = vector.multi_reduction <add>, %119, %cst_57 [1] : vector<16x16xf32> to vector<16xf32>
    %121 = vector.shape_cast %120 : vector<16xf32> to vector<16x1xf32>
    %122 = tpu.reciprocal %121 {approx = true} : vector<16x1xf32> -> vector<16x1xf32>
    %123 = vector.broadcast %122 : vector<16x1xf32> to vector<16x16xf32>
    %124 = arith.mulf %119, %123 : vector<16x16xf32>
    %125 = arith.truncf %124 : vector<16x16xf32> to vector<16x16xbf16>
    %cst_58 = arith.constant dense<0.000000e+00> : vector<16x32xf32>
    %126 = tpu.matmul %125, %113, %cst_58 {dimension_numbers = #tpu.dot_dimension_numbers<[1], [0], [0], [1], [0, 0, 1, 1], [], []>} : vector<16x16xbf16>, vector<16x32xbf16>, vector<16x32xf32> -> vector<16x32xf32>
    %127 = arith.truncf %126 : vector<16x32xf32> to vector<16x32xbf16>
    %cst_59 = arith.constant dense<0.000000e+00> : vector<16x128xf32>
    %128 = tpu.matmul %127, %91, %cst_59 {dimension_numbers = #tpu.dot_dimension_numbers<[1], [0], [0], [1], [0, 0, 1, 1], [], []>} : vector<16x32xbf16>, vector<32x128xbf16>, vector<16x128xf32> -> vector<16x128xf32>
    %129 = arith.addf %77, %128 : vector<16x128xf32>
    %c2 = arith.constant 2 : index
    %c0_60 = arith.constant 0 : index
    %c0_61 = arith.constant 0 : index
    %130 = vector.load %arg4[%c2, %c0_60, %c0_61] : memref<4x128x32xbf16, #tpu.memory_space<vmem>>, vector<1x128x32xbf16>
    %131 = vector.shape_cast %130 : vector<1x128x32xbf16> to vector<128x32xbf16>
    %cst_62 = arith.constant dense<0.000000e+00> : vector<32x32xf32>
    %132 = tpu.matmul %23, %131, %cst_62 {dimension_numbers = #tpu.dot_dimension_numbers<[1], [0], [0], [1], [0, 0, 1, 1], [], []>} : vector<32x128xbf16>, vector<128x32xbf16>, vector<32x32xf32> -> vector<32x32xf32>
    %c2_63 = arith.constant 2 : index
    %c0_64 = arith.constant 0 : index
    %c0_65 = arith.constant 0 : index
    %133 = vector.load %arg5[%c2_63, %c0_64, %c0_65] : memref<4x128x32xbf16, #tpu.memory_space<vmem>>, vector<1x128x32xbf16>
    %134 = vector.shape_cast %133 : vector<1x128x32xbf16> to vector<128x32xbf16>
    %cst_66 = arith.constant dense<0.000000e+00> : vector<32x32xf32>
    %135 = tpu.matmul %23, %134, %cst_66 {dimension_numbers = #tpu.dot_dimension_numbers<[1], [0], [0], [1], [0, 0, 1, 1], [], []>} : vector<32x128xbf16>, vector<128x32xbf16>, vector<32x32xf32> -> vector<32x32xf32>
    %c2_67 = arith.constant 2 : index
    %c0_68 = arith.constant 0 : index
    %c0_69 = arith.constant 0 : index
    %136 = vector.load %arg6[%c2_67, %c0_68, %c0_69] : memref<4x128x32xbf16, #tpu.memory_space<vmem>>, vector<1x128x32xbf16>
    %137 = vector.shape_cast %136 : vector<1x128x32xbf16> to vector<128x32xbf16>
    %cst_70 = arith.constant dense<0.000000e+00> : vector<32x32xf32>
    %138 = tpu.matmul %23, %137, %cst_70 {dimension_numbers = #tpu.dot_dimension_numbers<[1], [0], [0], [1], [0, 0, 1, 1], [], []>} : vector<32x128xbf16>, vector<128x32xbf16>, vector<32x32xf32> -> vector<32x32xf32>
    %139 = arith.truncf %132 : vector<32x32xf32> to vector<32x32xbf16>
    %140 = arith.truncf %135 : vector<32x32xf32> to vector<32x32xbf16>
    %141 = arith.truncf %138 : vector<32x32xf32> to vector<32x32xbf16>
    %c2_71 = arith.constant 2 : index
    %c0_72 = arith.constant 0 : index
    %c0_73 = arith.constant 0 : index
    %142 = vector.load %arg7[%c2_71, %c0_72, %c0_73] : memref<4x32x128xbf16, #tpu.memory_space<vmem>>, vector<1x32x128xbf16>
    %143 = vector.shape_cast %142 : vector<1x32x128xbf16> to vector<32x128xbf16>
    %144 = vector.extract_strided_slice %139 {offsets = [0, 0], sizes = [16, 32], strides = [1, 1]} : vector<32x32xbf16> to vector<16x32xbf16>
    %145 = vector.extract_strided_slice %140 {offsets = [0, 0], sizes = [16, 32], strides = [1, 1]} : vector<32x32xbf16> to vector<16x32xbf16>
    %146 = vector.extract_strided_slice %141 {offsets = [0, 0], sizes = [16, 32], strides = [1, 1]} : vector<32x32xbf16> to vector<16x32xbf16>
    %cst_74 = arith.constant dense<0.000000e+00> : vector<16x16xf32>
    %147 = tpu.matmul %144, %145, %cst_74 {dimension_numbers = #tpu.dot_dimension_numbers<[1], [1], [0], [0], [0, 0, 1, 0], [], []>} : vector<16x32xbf16>, vector<16x32xbf16>, vector<16x16xf32> -> vector<16x16xf32>
    %cst_75 = arith.constant dense<0xFF800000> : vector<16xf32>
    %148 = vector.multi_reduction <maximumf>, %147, %cst_75 [1] : vector<16x16xf32> to vector<16xf32>
    %149 = vector.shape_cast %148 : vector<16xf32> to vector<16x1xf32>
    %150 = vector.broadcast %149 : vector<16x1xf32> to vector<16x16xf32>
    %151 = arith.subf %147, %150 : vector<16x16xf32>
    %152 = math.exp %151 : vector<16x16xf32>
    %cst_76 = arith.constant dense<0.000000e+00> : vector<16xf32>
    %153 = vector.multi_reduction <add>, %152, %cst_76 [1] : vector<16x16xf32> to vector<16xf32>
    %154 = vector.shape_cast %153 : vector<16xf32> to vector<16x1xf32>
    %155 = tpu.reciprocal %154 {approx = true} : vector<16x1xf32> -> vector<16x1xf32>
    %156 = vector.broadcast %155 : vector<16x1xf32> to vector<16x16xf32>
    %157 = arith.mulf %152, %156 : vector<16x16xf32>
    %158 = arith.truncf %157 : vector<16x16xf32> to vector<16x16xbf16>
    %cst_77 = arith.constant dense<0.000000e+00> : vector<16x32xf32>
    %159 = tpu.matmul %158, %146, %cst_77 {dimension_numbers = #tpu.dot_dimension_numbers<[1], [0], [0], [1], [0, 0, 1, 1], [], []>} : vector<16x16xbf16>, vector<16x32xbf16>, vector<16x32xf32> -> vector<16x32xf32>
    %160 = arith.truncf %159 : vector<16x32xf32> to vector<16x32xbf16>
    %cst_78 = arith.constant dense<0.000000e+00> : vector<16x128xf32>
    %161 = tpu.matmul %160, %143, %cst_78 {dimension_numbers = #tpu.dot_dimension_numbers<[1], [0], [0], [1], [0, 0, 1, 1], [], []>} : vector<16x32xbf16>, vector<32x128xbf16>, vector<16x128xf32> -> vector<16x128xf32>
    %162 = arith.addf %110, %161 : vector<16x128xf32>
    %163 = vector.extract_strided_slice %139 {offsets = [16, 0], sizes = [16, 32], strides = [1, 1]} : vector<32x32xbf16> to vector<16x32xbf16>
    %164 = vector.extract_strided_slice %140 {offsets = [16, 0], sizes = [16, 32], strides = [1, 1]} : vector<32x32xbf16> to vector<16x32xbf16>
    %165 = vector.extract_strided_slice %141 {offsets = [16, 0], sizes = [16, 32], strides = [1, 1]} : vector<32x32xbf16> to vector<16x32xbf16>
    %cst_79 = arith.constant dense<0.000000e+00> : vector<16x16xf32>
    %166 = tpu.matmul %163, %164, %cst_79 {dimension_numbers = #tpu.dot_dimension_numbers<[1], [1], [0], [0], [0, 0, 1, 0], [], []>} : vector<16x32xbf16>, vector<16x32xbf16>, vector<16x16xf32> -> vector<16x16xf32>
    %cst_80 = arith.constant dense<0xFF800000> : vector<16xf32>
    %167 = vector.multi_reduction <maximumf>, %166, %cst_80 [1] : vector<16x16xf32> to vector<16xf32>
    %168 = vector.shape_cast %167 : vector<16xf32> to vector<16x1xf32>
    %169 = vector.broadcast %168 : vector<16x1xf32> to vector<16x16xf32>
    %170 = arith.subf %166, %169 : vector<16x16xf32>
    %171 = math.exp %170 : vector<16x16xf32>
    %cst_81 = arith.constant dense<0.000000e+00> : vector<16xf32>
    %172 = vector.multi_reduction <add>, %171, %cst_81 [1] : vector<16x16xf32> to vector<16xf32>
    %173 = vector.shape_cast %172 : vector<16xf32> to vector<16x1xf32>
    %174 = tpu.reciprocal %173 {approx = true} : vector<16x1xf32> -> vector<16x1xf32>
    %175 = vector.broadcast %174 : vector<16x1xf32> to vector<16x16xf32>
    %176 = arith.mulf %171, %175 : vector<16x16xf32>
    %177 = arith.truncf %176 : vector<16x16xf32> to vector<16x16xbf16>
    %cst_82 = arith.constant dense<0.000000e+00> : vector<16x32xf32>
    %178 = tpu.matmul %177, %165, %cst_82 {dimension_numbers = #tpu.dot_dimension_numbers<[1], [0], [0], [1], [0, 0, 1, 1], [], []>} : vector<16x16xbf16>, vector<16x32xbf16>, vector<16x32xf32> -> vector<16x32xf32>
    %179 = arith.truncf %178 : vector<16x32xf32> to vector<16x32xbf16>
    %cst_83 = arith.constant dense<0.000000e+00> : vector<16x128xf32>
    %180 = tpu.matmul %179, %143, %cst_83 {dimension_numbers = #tpu.dot_dimension_numbers<[1], [0], [0], [1], [0, 0, 1, 1], [], []>} : vector<16x32xbf16>, vector<32x128xbf16>, vector<16x128xf32> -> vector<16x128xf32>
    %181 = arith.addf %129, %180 : vector<16x128xf32>
    %c3 = arith.constant 3 : index
    %c0_84 = arith.constant 0 : index
    %c0_85 = arith.constant 0 : index
    %182 = vector.load %arg4[%c3, %c0_84, %c0_85] : memref<4x128x32xbf16, #tpu.memory_space<vmem>>, vector<1x128x32xbf16>
    %183 = vector.shape_cast %182 : vector<1x128x32xbf16> to vector<128x32xbf16>
    %cst_86 = arith.constant dense<0.000000e+00> : vector<32x32xf32>
    %184 = tpu.matmul %23, %183, %cst_86 {dimension_numbers = #tpu.dot_dimension_numbers<[1], [0], [0], [1], [0, 0, 1, 1], [], []>} : vector<32x128xbf16>, vector<128x32xbf16>, vector<32x32xf32> -> vector<32x32xf32>
    %c3_87 = arith.constant 3 : index
    %c0_88 = arith.constant 0 : index
    %c0_89 = arith.constant 0 : index
    %185 = vector.load %arg5[%c3_87, %c0_88, %c0_89] : memref<4x128x32xbf16, #tpu.memory_space<vmem>>, vector<1x128x32xbf16>
    %186 = vector.shape_cast %185 : vector<1x128x32xbf16> to vector<128x32xbf16>
    %cst_90 = arith.constant dense<0.000000e+00> : vector<32x32xf32>
    %187 = tpu.matmul %23, %186, %cst_90 {dimension_numbers = #tpu.dot_dimension_numbers<[1], [0], [0], [1], [0, 0, 1, 1], [], []>} : vector<32x128xbf16>, vector<128x32xbf16>, vector<32x32xf32> -> vector<32x32xf32>
    %c3_91 = arith.constant 3 : index
    %c0_92 = arith.constant 0 : index
    %c0_93 = arith.constant 0 : index
    %188 = vector.load %arg6[%c3_91, %c0_92, %c0_93] : memref<4x128x32xbf16, #tpu.memory_space<vmem>>, vector<1x128x32xbf16>
    %189 = vector.shape_cast %188 : vector<1x128x32xbf16> to vector<128x32xbf16>
    %cst_94 = arith.constant dense<0.000000e+00> : vector<32x32xf32>
    %190 = tpu.matmul %23, %189, %cst_94 {dimension_numbers = #tpu.dot_dimension_numbers<[1], [0], [0], [1], [0, 0, 1, 1], [], []>} : vector<32x128xbf16>, vector<128x32xbf16>, vector<32x32xf32> -> vector<32x32xf32>
    %191 = arith.truncf %184 : vector<32x32xf32> to vector<32x32xbf16>
    %192 = arith.truncf %187 : vector<32x32xf32> to vector<32x32xbf16>
    %193 = arith.truncf %190 : vector<32x32xf32> to vector<32x32xbf16>
    %c3_95 = arith.constant 3 : index
    %c0_96 = arith.constant 0 : index
    %c0_97 = arith.constant 0 : index
    %194 = vector.load %arg7[%c3_95, %c0_96, %c0_97] : memref<4x32x128xbf16, #tpu.memory_space<vmem>>, vector<1x32x128xbf16>
    %195 = vector.shape_cast %194 : vector<1x32x128xbf16> to vector<32x128xbf16>
    %196 = vector.extract_strided_slice %191 {offsets = [0, 0], sizes = [16, 32], strides = [1, 1]} : vector<32x32xbf16> to vector<16x32xbf16>
    %197 = vector.extract_strided_slice %192 {offsets = [0, 0], sizes = [16, 32], strides = [1, 1]} : vector<32x32xbf16> to vector<16x32xbf16>
    %198 = vector.extract_strided_slice %193 {offsets = [0, 0], sizes = [16, 32], strides = [1, 1]} : vector<32x32xbf16> to vector<16x32xbf16>
    %cst_98 = arith.constant dense<0.000000e+00> : vector<16x16xf32>
    %199 = tpu.matmul %196, %197, %cst_98 {dimension_numbers = #tpu.dot_dimension_numbers<[1], [1], [0], [0], [0, 0, 1, 0], [], []>} : vector<16x32xbf16>, vector<16x32xbf16>, vector<16x16xf32> -> vector<16x16xf32>
    %cst_99 = arith.constant dense<0xFF800000> : vector<16xf32>
    %200 = vector.multi_reduction <maximumf>, %199, %cst_99 [1] : vector<16x16xf32> to vector<16xf32>
    %201 = vector.shape_cast %200 : vector<16xf32> to vector<16x1xf32>
    %202 = vector.broadcast %201 : vector<16x1xf32> to vector<16x16xf32>
    %203 = arith.subf %199, %202 : vector<16x16xf32>
    %204 = math.exp %203 : vector<16x16xf32>
    %cst_100 = arith.constant dense<0.000000e+00> : vector<16xf32>
    %205 = vector.multi_reduction <add>, %204, %cst_100 [1] : vector<16x16xf32> to vector<16xf32>
    %206 = vector.shape_cast %205 : vector<16xf32> to vector<16x1xf32>
    %207 = tpu.reciprocal %206 {approx = true} : vector<16x1xf32> -> vector<16x1xf32>
    %208 = vector.broadcast %207 : vector<16x1xf32> to vector<16x16xf32>
    %209 = arith.mulf %204, %208 : vector<16x16xf32>
    %210 = arith.truncf %209 : vector<16x16xf32> to vector<16x16xbf16>
    %cst_101 = arith.constant dense<0.000000e+00> : vector<16x32xf32>
    %211 = tpu.matmul %210, %198, %cst_101 {dimension_numbers = #tpu.dot_dimension_numbers<[1], [0], [0], [1], [0, 0, 1, 1], [], []>} : vector<16x16xbf16>, vector<16x32xbf16>, vector<16x32xf32> -> vector<16x32xf32>
    %212 = arith.truncf %211 : vector<16x32xf32> to vector<16x32xbf16>
    %cst_102 = arith.constant dense<0.000000e+00> : vector<16x128xf32>
    %213 = tpu.matmul %212, %195, %cst_102 {dimension_numbers = #tpu.dot_dimension_numbers<[1], [0], [0], [1], [0, 0, 1, 1], [], []>} : vector<16x32xbf16>, vector<32x128xbf16>, vector<16x128xf32> -> vector<16x128xf32>
    %214 = arith.addf %162, %213 : vector<16x128xf32>
    %215 = vector.extract_strided_slice %191 {offsets = [16, 0], sizes = [16, 32], strides = [1, 1]} : vector<32x32xbf16> to vector<16x32xbf16>
    %216 = vector.extract_strided_slice %192 {offsets = [16, 0], sizes = [16, 32], strides = [1, 1]} : vector<32x32xbf16> to vector<16x32xbf16>
    %217 = vector.extract_strided_slice %193 {offsets = [16, 0], sizes = [16, 32], strides = [1, 1]} : vector<32x32xbf16> to vector<16x32xbf16>
    %cst_103 = arith.constant dense<0.000000e+00> : vector<16x16xf32>
    %218 = tpu.matmul %215, %216, %cst_103 {dimension_numbers = #tpu.dot_dimension_numbers<[1], [1], [0], [0], [0, 0, 1, 0], [], []>} : vector<16x32xbf16>, vector<16x32xbf16>, vector<16x16xf32> -> vector<16x16xf32>
    %cst_104 = arith.constant dense<0xFF800000> : vector<16xf32>
    %219 = vector.multi_reduction <maximumf>, %218, %cst_104 [1] : vector<16x16xf32> to vector<16xf32>
    %220 = vector.shape_cast %219 : vector<16xf32> to vector<16x1xf32>
    %221 = vector.broadcast %220 : vector<16x1xf32> to vector<16x16xf32>
    %222 = arith.subf %218, %221 : vector<16x16xf32>
    %223 = math.exp %222 : vector<16x16xf32>
    %cst_105 = arith.constant dense<0.000000e+00> : vector<16xf32>
    %224 = vector.multi_reduction <add>, %223, %cst_105 [1] : vector<16x16xf32> to vector<16xf32>
    %225 = vector.shape_cast %224 : vector<16xf32> to vector<16x1xf32>
    %226 = tpu.reciprocal %225 {approx = true} : vector<16x1xf32> -> vector<16x1xf32>
    %227 = vector.broadcast %226 : vector<16x1xf32> to vector<16x16xf32>
    %228 = arith.mulf %223, %227 : vector<16x16xf32>
    %229 = arith.truncf %228 : vector<16x16xf32> to vector<16x16xbf16>
    %cst_106 = arith.constant dense<0.000000e+00> : vector<16x32xf32>
    %230 = tpu.matmul %229, %217, %cst_106 {dimension_numbers = #tpu.dot_dimension_numbers<[1], [0], [0], [1], [0, 0, 1, 1], [], []>} : vector<16x16xbf16>, vector<16x32xbf16>, vector<16x32xf32> -> vector<16x32xf32>
    %231 = arith.truncf %230 : vector<16x32xf32> to vector<16x32xbf16>
    %cst_107 = arith.constant dense<0.000000e+00> : vector<16x128xf32>
    %232 = tpu.matmul %231, %195, %cst_107 {dimension_numbers = #tpu.dot_dimension_numbers<[1], [0], [0], [1], [0, 0, 1, 1], [], []>} : vector<16x32xbf16>, vector<32x128xbf16>, vector<16x128xf32> -> vector<16x128xf32>
    %233 = arith.addf %181, %232 : vector<16x128xf32>
    %234 = tpu.concatenate %214, %233 in 0 : vector<16x128xf32>, vector<16x128xf32> -> vector<32x128xf32>
    %235 = arith.addf %0, %234 : vector<32x128xf32>
    %c0_108 = arith.constant 0 : index
    %c0_109 = arith.constant 0 : index
    %236 = vector.load %arg8[%c0_108, %c0_109] : memref<1x128xf32, #tpu.memory_space<vmem>>, vector<1x128xf32>
    %237 = vector.broadcast %236 : vector<1x128xf32> to vector<32x128xf32>
    %238 = arith.addf %235, %237 : vector<32x128xf32>
    %c0_110 = arith.constant 0 : index
    %c0_111 = arith.constant 0 : index
    %239 = vector.load %arg9[%c0_110, %c0_111] : memref<1x128xf32, #tpu.memory_space<vmem>>, vector<1x128xf32>
    %c0_112 = arith.constant 0 : index
    %c0_113 = arith.constant 0 : index
    %240 = vector.load %arg10[%c0_112, %c0_113] : memref<1x128xf32, #tpu.memory_space<vmem>>, vector<1x128xf32>
    %cst_114 = arith.constant dense<0.000000e+00> : vector<32xf32>
    %241 = vector.multi_reduction <add>, %238, %cst_114 [1] : vector<32x128xf32> to vector<32xf32>
    %242 = vector.shape_cast %241 : vector<32xf32> to vector<32x1xf32>
    %cst_115 = arith.constant 1.280000e+02 : f32
    %243 = vector.broadcast %cst_115 : f32 to vector<32x1xf32>
    %244 = arith.divf %242, %243 : vector<32x1xf32>
    %245 = vector.broadcast %244 : vector<32x1xf32> to vector<32x128xf32>
    %246 = arith.subf %238, %245 : vector<32x128xf32>
    %247 = arith.mulf %246, %246 : vector<32x128xf32>
    %cst_116 = arith.constant dense<0.000000e+00> : vector<32xf32>
    %248 = vector.multi_reduction <add>, %247, %cst_116 [1] : vector<32x128xf32> to vector<32xf32>
    %249 = vector.shape_cast %248 : vector<32xf32> to vector<32x1xf32>
    %cst_117 = arith.constant 1.280000e+02 : f32
    %250 = vector.broadcast %cst_117 : f32 to vector<32x1xf32>
    %251 = arith.divf %249, %250 : vector<32x1xf32>
    %cst_118 = arith.constant 9.99999974E-6 : f32
    %252 = vector.broadcast %cst_118 : f32 to vector<32x1xf32>
    %253 = arith.addf %251, %252 : vector<32x1xf32>
    %254 = math.rsqrt %253 : vector<32x1xf32>
    %255 = vector.broadcast %254 : vector<32x1xf32> to vector<32x128xf32>
    %256 = arith.mulf %246, %255 : vector<32x128xf32>
    %257 = vector.broadcast %239 : vector<1x128xf32> to vector<32x128xf32>
    %258 = arith.mulf %256, %257 : vector<32x128xf32>
    %259 = vector.broadcast %240 : vector<1x128xf32> to vector<32x128xf32>
    %260 = arith.addf %258, %259 : vector<32x128xf32>
    %261 = arith.truncf %260 : vector<32x128xf32> to vector<32x128xbf16>
    %c0_119 = arith.constant 0 : index
    %c0_120 = arith.constant 0 : index
    %262 = vector.load %arg11[%c0_119, %c0_120] : memref<128x256xbf16, #tpu.memory_space<vmem>>, vector<128x256xbf16>
    %cst_121 = arith.constant dense<0.000000e+00> : vector<32x256xf32>
    %263 = tpu.matmul %261, %262, %cst_121 {dimension_numbers = #tpu.dot_dimension_numbers<[1], [0], [0], [1], [0, 0, 1, 1], [], []>} : vector<32x128xbf16>, vector<128x256xbf16>, vector<32x256xf32> -> vector<32x256xf32>
    %c0_122 = arith.constant 0 : index
    %c0_123 = arith.constant 0 : index
    %264 = vector.load %arg12[%c0_122, %c0_123] : memref<1x256xf32, #tpu.memory_space<vmem>>, vector<1x256xf32>
    %265 = vector.broadcast %264 : vector<1x256xf32> to vector<32x256xf32>
    %266 = arith.addf %263, %265 : vector<32x256xf32>
    %cst_124 = arith.constant 5.000000e-01 : f32
    %267 = vector.broadcast %cst_124 : f32 to vector<32x256xf32>
    %268 = arith.mulf %267, %266 : vector<32x256xf32>
    %cst_125 = arith.constant 4.471500e-02 : f32
    %269 = vector.broadcast %cst_125 : f32 to vector<32x256xf32>
    %270 = arith.mulf %269, %266 : vector<32x256xf32>
    %271 = arith.mulf %270, %266 : vector<32x256xf32>
    %272 = arith.mulf %271, %266 : vector<32x256xf32>
    %273 = arith.addf %266, %272 : vector<32x256xf32>
    %cst_126 = arith.constant 0.797884583 : f32
    %274 = vector.broadcast %cst_126 : f32 to vector<32x256xf32>
    %275 = arith.mulf %274, %273 : vector<32x256xf32>
    %276 = math.tanh %275 : vector<32x256xf32>
    %cst_127 = arith.constant 1.000000e+00 : f32
    %277 = vector.broadcast %cst_127 : f32 to vector<32x256xf32>
    %278 = arith.addf %277, %276 : vector<32x256xf32>
    %279 = arith.mulf %268, %278 : vector<32x256xf32>
    %280 = arith.truncf %279 : vector<32x256xf32> to vector<32x256xbf16>
    %c0_128 = arith.constant 0 : index
    %c0_129 = arith.constant 0 : index
    %281 = vector.load %arg13[%c0_128, %c0_129] : memref<256x128xbf16, #tpu.memory_space<vmem>>, vector<256x128xbf16>
    %cst_130 = arith.constant dense<0.000000e+00> : vector<32x128xf32>
    %282 = tpu.matmul %280, %281, %cst_130 {dimension_numbers = #tpu.dot_dimension_numbers<[1], [0], [0], [1], [0, 0, 1, 1], [], []>} : vector<32x256xbf16>, vector<256x128xbf16>, vector<32x128xf32> -> vector<32x128xf32>
    %c0_131 = arith.constant 0 : index
    %c0_132 = arith.constant 0 : index
    %283 = vector.load %arg14[%c0_131, %c0_132] : memref<1x128xf32, #tpu.memory_space<vmem>>, vector<1x128xf32>
    %284 = vector.broadcast %283 : vector<1x128xf32> to vector<32x128xf32>
    %285 = arith.addf %282, %284 : vector<32x128xf32>
    %286 = arith.addf %238, %285 : vector<32x128xf32>
    %c0_133 = arith.constant 0 : index
    %c0_134 = arith.constant 0 : index
    %287 = vector.load %arg15[%c0_133, %c0_134] : memref<32x128xf32, #tpu.memory_space<vmem>>, vector<32x128xf32>
    tpu.vector_store %arg15[%c0_133, %c0_134], %286 {strides = array<i32>} : memref<32x128xf32, #tpu.memory_space<vmem>>, vector<32x128xf32>,
    return
  }
  func.func @transform_0(%arg0: i32) -> (i32, i32) {
    %c0_i32 = arith.constant 0 : i32
    %c0_i32_0 = arith.constant 0 : i32
    return %arg0, %c0_i32 : i32, i32
  }
  func.func @transform_1(%arg0: i32) -> (i32, i32) {
    %c0_i32 = arith.constant 0 : i32
    %c0_i32_0 = arith.constant 0 : i32
    %c0_i32_1 = arith.constant 0 : i32
    return %c0_i32, %c0_i32_0 : i32, i32
  }
  func.func @transform_2(%arg0: i32) -> (i32, i32) {
    %c0_i32 = arith.constant 0 : i32
    %c0_i32_0 = arith.constant 0 : i32
    %c0_i32_1 = arith.constant 0 : i32
    return %c0_i32, %c0_i32_0 : i32, i32
  }
  func.func @transform_3(%arg0: i32) -> (i32, i32, i32) {
    %c0_i32 = arith.constant 0 : i32
    %c0_i32_0 = arith.constant 0 : i32
    %c0_i32_1 = arith.constant 0 : i32
    %c0_i32_2 = arith.constant 0 : i32
    return %c0_i32, %c0_i32_0, %c0_i32_1 : i32, i32, i32
  }
  func.func @transform_4(%arg0: i32) -> (i32, i32, i32) {
    %c0_i32 = arith.constant 0 : i32
    %c0_i32_0 = arith.constant 0 : i32
    %c0_i32_1 = arith.constant 0 : i32
    %c0_i32_2 = arith.constant 0 : i32
    return %c0_i32, %c0_i32_0, %c0_i32_1 : i32, i32, i32
  }
  func.func @transform_5(%arg0: i32) -> (i32, i32, i32) {
    %c0_i32 = arith.constant 0 : i32
    %c0_i32_0 = arith.constant 0 : i32
    %c0_i32_1 = arith.constant 0 : i32
    %c0_i32_2 = arith.constant 0 : i32
    return %c0_i32, %c0_i32_0, %c0_i32_1 : i32, i32, i32
  }
  func.func @transform_6(%arg0: i32) -> (i32, i32, i32) {
    %c0_i32 = arith.constant 0 : i32
    %c0_i32_0 = arith.constant 0 : i32
    %c0_i32_1 = arith.constant 0 : i32
    %c0_i32_2 = arith.constant 0 : i32
    return %c0_i32, %c0_i32_0, %c0_i32_1 : i32, i32, i32
  }
  func.func @transform_7(%arg0: i32) -> (i32, i32) {
    %c0_i32 = arith.constant 0 : i32
    %c0_i32_0 = arith.constant 0 : i32
    %c0_i32_1 = arith.constant 0 : i32
    return %c0_i32, %c0_i32_0 : i32, i32
  }
  func.func @transform_8(%arg0: i32) -> (i32, i32) {
    %c0_i32 = arith.constant 0 : i32
    %c0_i32_0 = arith.constant 0 : i32
    %c0_i32_1 = arith.constant 0 : i32
    return %c0_i32, %c0_i32_0 : i32, i32
  }
  func.func @transform_9(%arg0: i32) -> (i32, i32) {
    %c0_i32 = arith.constant 0 : i32
    %c0_i32_0 = arith.constant 0 : i32
    %c0_i32_1 = arith.constant 0 : i32
    return %c0_i32, %c0_i32_0 : i32, i32
  }
  func.func @transform_10(%arg0: i32) -> (i32, i32) {
    %c0_i32 = arith.constant 0 : i32
    %c0_i32_0 = arith.constant 0 : i32
    %c0_i32_1 = arith.constant 0 : i32
    return %c0_i32, %c0_i32_0 : i32, i32
  }
  func.func @transform_11(%arg0: i32) -> (i32, i32) {
    %c0_i32 = arith.constant 0 : i32
    %c0_i32_0 = arith.constant 0 : i32
    %c0_i32_1 = arith.constant 0 : i32
    return %c0_i32, %c0_i32_0 : i32, i32
  }
  func.func @transform_12(%arg0: i32) -> (i32, i32) {
    %c0_i32 = arith.constant 0 : i32
    %c0_i32_0 = arith.constant 0 : i32
    %c0_i32_1 = arith.constant 0 : i32
    return %c0_i32, %c0_i32_0 : i32, i32
  }
  func.func @transform_13(%arg0: i32) -> (i32, i32) {
    %c0_i32 = arith.constant 0 : i32
    %c0_i32_0 = arith.constant 0 : i32
    %c0_i32_1 = arith.constant 0 : i32
    return %c0_i32, %c0_i32_0 : i32, i32
  }
  func.func @transform_14(%arg0: i32) -> (i32, i32) {
    %c0_i32 = arith.constant 0 : i32
    %c0_i32_0 = arith.constant 0 : i32
    return %arg0, %c0_i32 : i32, i32
  }
}

</mosaic_0001>

<llo_original>
// kernel: tpu_custom_call.1
$region0: #{tpu_custom_call.1}
  #allocation0 [shape = 'u32[]', space=smem, size = 0x4, offset = 0x4, fixed_abs, tag = 'smem constant byte address 0x4 - core index']
  #allocation1 [shape = 'u32[144,128]{1,0:T(1,128)}', space=vmem, size = 0x12000, scoped, tag = 'internal scratch']
  %s0 = inlined_call_operand.vmem [shape: f32[32,128], index: 0, kind: input, shape index: {}]
  %s1 = inlined_call_operand.vmem [shape: f32[1,128], index: 1, kind: input, shape index: {}]
  %s2 = inlined_call_operand.vmem [shape: f32[1,128], index: 2, kind: input, shape index: {}]
  %s3 = inlined_call_operand.vmem [shape: bf16[4,128,32], index: 3, kind: input, shape index: {}]
  %s4 = inlined_call_operand.vmem [shape: bf16[4,128,32], index: 4, kind: input, shape index: {}]
  %s5 = inlined_call_operand.vmem [shape: bf16[4,128,32], index: 5, kind: input, shape index: {}]
  %s6 = inlined_call_operand.vmem [shape: bf16[4,32,128], index: 6, kind: input, shape index: {}]
  %s7 = inlined_call_operand.vmem [shape: f32[1,128], index: 7, kind: input, shape index: {}]
  %s8 = inlined_call_operand.vmem [shape: f32[1,128], index: 8, kind: input, shape index: {}]
  %s9 = inlined_call_operand.vmem [shape: f32[1,128], index: 9, kind: input, shape index: {}]
  %s10 = inlined_call_operand.vmem [shape: bf16[128,256], index: 10, kind: input, shape index: {}]
  %s11 = inlined_call_operand.vmem [shape: f32[1,256], index: 11, kind: input, shape index: {}]
  %s12 = inlined_call_operand.vmem [shape: bf16[256,128], index: 12, kind: input, shape index: {}]
  %s13 = inlined_call_operand.vmem [shape: f32[1,128], index: 13, kind: input, shape index: {}]
  %s14 = inlined_call_operand.hbm [shape: f32[32,128], index: 14, kind: output, shape index: {}]
  %s15 = sld [smem:[#allocation0]]
  $region66: #{tpu_custom_call.1} parent=0
    _
  %s17 = ssub.s32 1, %s15
  %s18 = scalar_select 0, %s17, %s15
  $region1: #{tpu_custom_call.1} parent=0
    #allocation2 [shape = 'u8[16384]{0}', space=vmem, size = 0x4000, scoped, tag = 'output window, operand 0, single buffered']
    #allocation3 [shape = 's32[1]{0}', space=sflag, size = 0x4, scoped, tag = 'scoped memory for tpu_custom_call.1']
    %19 = vsyncpa [#allocation3], 0
    // Predicated region
    $region2: #{tpu_custom_call.1} parent=1 // pred_check
      _
    $region3: #{tpu_custom_call.1} parent=1 // pred_check_branch
      %21 = sbr.rel (0) target = $region5
    $region4: #{tpu_custom_call.1} parent=1 // pred_region
      _
    $region5: #{tpu_custom_call.1} parent=1 // pred_fallthru
      _
    // Predicated region
    $region6: #{tpu_custom_call.1} parent=1 // pred_check
      _
    $region7: #{tpu_custom_call.1} parent=1 // pred_check_branch
      %23 = sbr.rel (0) target = $region9
    $region8: #{tpu_custom_call.1} parent=1 // pred_region
      _
    $region9: #{tpu_custom_call.1} parent=1 // pred_fallthru
      _
    // Predicated region
    $region10: #{tpu_custom_call.1} parent=1 // pred_check
      _
    $region11: #{tpu_custom_call.1} parent=1 // pred_check_branch
      %25 = sbr.rel (0) target = $region13
    $region12: #{tpu_custom_call.1} parent=1 // pred_region
      _
    $region13: #{tpu_custom_call.1} parent=1 // pred_fallthru
      _
    // Predicated region
    $region14: #{tpu_custom_call.1} parent=1 // pred_check
      _
    $region15: #{tpu_custom_call.1} parent=1 // pred_check_branch
      %27 = sbr.rel (0) target = $region17
    $region16: #{tpu_custom_call.1} parent=1 // pred_region
      _
    $region17: #{tpu_custom_call.1} parent=1 // pred_fallthru
      _
    // Predicated region
    $region18: #{tpu_custom_call.1} parent=1 // pred_check
      _
    $region19: #{tpu_custom_call.1} parent=1 // pred_check_branch
      %29 = sbr.rel (0) target = $region21
    $region20: #{tpu_custom_call.1} parent=1 // pred_region
      _
    $region21: #{tpu_custom_call.1} parent=1 // pred_fallthru
      _
    // Predicated region
    $region22: #{tpu_custom_call.1} parent=1 // pred_check
      _
    $region23: #{tpu_custom_call.1} parent=1 // pred_check_branch
      %31 = sbr.rel (0) target = $region25
    $region24: #{tpu_custom_call.1} parent=1 // pred_region
      _
    $region25: #{tpu_custom_call.1} parent=1 // pred_fallthru
      _
    // Predicated region
    $region26: #{tpu_custom_call.1} parent=1 // pred_check
      _
    $region27: #{tpu_custom_call.1} parent=1 // pred_check_branch
      %33 = sbr.rel (0) target = $region29
    $region28: #{tpu_custom_call.1} parent=1 // pred_region
      _
    $region29: #{tpu_custom_call.1} parent=1 // pred_fallthru
      _
    // Predicated region
    $region30: #{tpu_custom_call.1} parent=1 // pred_check
      _
    $region31: #{tpu_custom_call.1} parent=1 // pred_check_branch
      %35 = sbr.rel (0) target = $region33
    $region32: #{tpu_custom_call.1} parent=1 // pred_region
      _
    $region33: #{tpu_custom_call.1} parent=1 // pred_fallthru
      _
    // Predicated region
    $region34: #{tpu_custom_call.1} parent=1 // pred_check
      _
    $region35: #{tpu_custom_call.1} parent=1 // pred_check_branch
      %37 = sbr.rel (0) target = $region37
    $region36: #{tpu_custom_call.1} parent=1 // pred_region
      _
    $region37: #{tpu_custom_call.1} parent=1 // pred_fallthru
      _
    // Predicated region
    $region38: #{tpu_custom_call.1} parent=1 // pred_check
      _
    $region39: #{tpu_custom_call.1} parent=1 // pred_check_branch
      %39 = sbr.rel (0) target = $region41
    $region40: #{tpu_custom_call.1} parent=1 // pred_region
      _
    $region41: #{tpu_custom_call.1} parent=1 // pred_fallthru
      _
    // Predicated region
    $region42: #{tpu_custom_call.1} parent=1 // pred_check
      _
    $region43: #{tpu_custom_call.1} parent=1 // pred_check_branch
      %41 = sbr.rel (0) target = $region45
    $region44: #{tpu_custom_call.1} parent=1 // pred_region
      _
    $region45: #{tpu_custom_call.1} parent=1 // pred_fallthru
      _
    // Predicated region
    $region46: #{tpu_custom_call.1} parent=1 // pred_check
      _
    $region47: #{tpu_custom_call.1} parent=1 // pred_check_branch
      %43 = sbr.rel (0) target = $region49
    $region48: #{tpu_custom_call.1} parent=1 // pred_region
      _
    $region49: #{tpu_custom_call.1} parent=1 // pred_fallthru
      _
    // Predicated region
    $region50: #{tpu_custom_call.1} parent=1 // pred_check
      _
    $region51: #{tpu_custom_call.1} parent=1 // pred_check_branch
      %45 = sbr.rel (0) target = $region53
    $region52: #{tpu_custom_call.1} parent=1 // pred_region
      _
    $region53: #{tpu_custom_call.1} parent=1 // pred_fallthru
      _
    // Predicated region
    $region54: #{tpu_custom_call.1} parent=1 // pred_check
      _
    $region55: #{tpu_custom_call.1} parent=1 // pred_check_branch
      %47 = sbr.rel (0) target = $region57
    $region56: #{tpu_custom_call.1} parent=1 // pred_region
      _
    $region57: #{tpu_custom_call.1} parent=1 // pred_fallthru
      _
    %v49 = vld [vmem:[%s0] sm:$0xff]
    %v50 = vld [vmem:[%s0 + $0x8] sm:$0xff]
    %v51 = vld [vmem:[%s0 + $0x10] sm:$0xff]
    %v52 = vld [vmem:[%s0 + $0x18] sm:$0xff]
    %v53 = vld [vmem:[%s1] sm:$0x1]
    %v54 = vld [vmem:[%s2] sm:$0x1]
    %55 = vadd.xlane.f32.xlu0 %v49
    %v56 = vpop.xlane.xlu0 %55
    %57 = vadd.xlane.f32.xlu0 %v50
    %v58 = vpop.xlane.xlu0 %57
    %59 = vadd.xlane.f32.xlu0 %v51
    %v60 = vpop.xlane.xlu0 %59
    %61 = vadd.xlane.f32.xlu0 %v52
    %v62 = vpop.xlane.xlu0 %61
    %v63 = vrcp.pop 128.0
    %v64 = vmul.f32 %v56, %v63
    %v65 = vmul.f32 %v58, %v63
    %v66 = vmul.f32 %v60, %v63
    %v67 = vmul.f32 %v62, %v63
    %v68 = vsub.f32 %v49, %v64
    %v69 = vsub.f32 %v50, %v65
    %v70 = vsub.f32 %v51, %v66
    %v71 = vsub.f32 %v52, %v67
    %v72 = vmul.f32 %v68, %v68
    %v73 = vmul.f32 %v69, %v69
    %v74 = vmul.f32 %v70, %v70
    %v75 = vmul.f32 %v71, %v71
    %76 = vadd.xlane.f32.xlu0 %v72
    %v77 = vpop.xlane.xlu0 %76
    %78 = vadd.xlane.f32.xlu0 %v73
    %v79 = vpop.xlane.xlu0 %78
    %80 = vadd.xlane.f32.xlu0 %v74
    %v81 = vpop.xlane.xlu0 %80
    %82 = vadd.xlane.f32.xlu0 %v75
    %v83 = vpop.xlane.xlu0 %82
    %v84 = vmul.f32 %v77, %v63
    %v85 = vmul.f32 %v79, %v63
    %v86 = vmul.f32 %v81, %v63
    %v87 = vmul.f32 %v83, %v63
    %v88 = vadd.f32 %v84, 1e-05
    %v89 = vadd.f32 %v85, 1e-05
    %v90 = vadd.f32 %v86, 1e-05
    %v91 = vadd.f32 %v87, 1e-05
    %v92 = vrsqrt.pop %v88
    %v93 = vrsqrt.pop %v89
    %v94 = vrsqrt.pop %v90
    %v95 = vrsqrt.pop %v91
    %v96 = vmul.f32 %v68, %v92
    %v97 = vmul.f32 %v69, %v93
    %v98 = vmul.f32 %v70, %v94
    %v99 = vmul.f32 %v71, %v95
    %v101 = vlaneseq
    %v102 = vshrl.u32 %v101, 7
    %v103 = vsub.s32 0, %v102
    %v104 = vrot.slane %v53, %v103
    %v106 = vmul.f32 %v96, %v104
    %v107 = vmul.f32 %v97, %v104
    %v108 = vmul.f32 %v98, %v104
    %v109 = vmul.f32 %v99, %v104
    %v111 = vlaneseq
    %v112 = vshrl.u32 %v111, 7
    %v113 = vsub.s32 0, %v112
    %v114 = vrot.slane %v54, %v113
    %v116 = vadd.f32 %v106, %v114
    %v117 = vadd.f32 %v107, %v114
    %v118 = vadd.f32 %v108, %v114
    %v119 = vadd.f32 %v109, %v114
    %v120 = vpack.c.bf16 %v117, %v116
    %v121 = vpack.c.bf16 %v119, %v118
    %v122 = vld [vmem:[%s3] sm:$0xf]
    %v123 = vld [vmem:[%s3 + $0x4] sm:$0xf]
    %v124 = vld [vmem:[%s3 + $0x8] sm:$0xf]
    %v125 = vld [vmem:[%s3 + $0xc] sm:$0xf]
    %v126 = vld [vmem:[%s3 + $0x10] sm:$0xf]
    %v127 = vld [vmem:[%s3 + $0x14] sm:$0xf]
    %v128 = vld [vmem:[%s3 + $0x18] sm:$0xf]
    %v129 = vld [vmem:[%s3 + $0x1c] sm:$0xf]
    %v130 = vld [vmem:[%s3 + $0x20] sm:$0xf]
    %v131 = vld [vmem:[%s3 + $0x24] sm:$0xf]
    %v132 = vld [vmem:[%s3 + $0x28] sm:$0xf]
    %v133 = vld [vmem:[%s3 + $0x2c] sm:$0xf]
    %v134 = vld [vmem:[%s3 + $0x30] sm:$0xf]
    %v135 = vld [vmem:[%s3 + $0x34] sm:$0xf]
    %v136 = vld [vmem:[%s3 + $0x38] sm:$0xf]
    %v137 = vld [vmem:[%s3 + $0x3c] sm:$0xf]
    %v154 = vunpack.c.l.b16 %v122
    %v155 = vunpack.c.l.b16 %v123
    %v156 = vunpack.c.l.b16 %v124
    %v157 = vunpack.c.l.b16 %v125
    %v158 = vunpack.c.l.b16 %v126
    %v159 = vunpack.c.l.b16 %v127
    %v160 = vunpack.c.l.b16 %v128
    %v161 = vunpack.c.l.b16 %v129
    %v162 = vunpack.c.l.b16 %v130
    %v163 = vunpack.c.l.b16 %v131
    %v164 = vunpack.c.l.b16 %v132
    %v165 = vunpack.c.l.b16 %v133
    %v166 = vunpack.c.l.b16 %v134
    %v167 = vunpack.c.l.b16 %v135
    %v168 = vunpack.c.l.b16 %v136
    %v169 = vunpack.c.l.b16 %v137
    %v170 = vpack.c.b16 %v155, %v154
    %v171 = vpack.c.b16 %v157, %v156
    %v172 = vpack.c.b16 %v159, %v158
    %v173 = vpack.c.b16 %v161, %v160
    %v174 = vpack.c.b16 %v163, %v162
    %v175 = vpack.c.b16 %v165, %v164
    %v176 = vpack.c.b16 %v167, %v166
    %v177 = vpack.c.b16 %v169, %v168
    %186 = vmatprep.subr.bf16.mxu0 0
    %187 = vmatpush1.bf16.msra.mxu0 %v170
    %188 = vmatprep.subr.bf16.mxu0 0
    %189 = vmatpush1.bf16.msra.mxu0 %v171
    %190 = vmatprep.subr.bf16.mxu0 0
    %191 = vmatpush1.bf16.msra.mxu0 %v172
    %192 = vmatprep.subr.bf16.mxu0 0
    %193 = vmatpush1.bf16.msra.mxu0 %v173
    %194 = vmatprep.subr.bf16.mxu0 0
    %195 = vmatpush1.bf16.msra.mxu0 %v174
    %196 = vmatprep.subr.bf16.mxu0 0
    %197 = vmatpush1.bf16.msra.mxu0 %v175
    %198 = vmatprep.subr.bf16.mxu0 0
    %199 = vmatpush1.bf16.msra.mxu0 %v176
    %200 = vmatprep.subr.bf16.mxu0 0
    %201 = vmatpush1.bf16.msra.mxu0 %v177
    %202 = vmatprep.subr.bf16.mxu0 0
    %203 = vmatpush1.bf16.msra.mxu0 0
    %204 = vmatprep.subr.bf16.mxu0 0
    %205 = vmatpush1.bf16.msra.mxu0 0
    %206 = vmatprep.subr.bf16.mxu0 0
    %207 = vmatpush1.bf16.msra.mxu0 0
    %208 = vmatprep.subr.bf16.mxu0 0
    %209 = vmatpush1.bf16.msra.mxu0 0
    %210 = vmatprep.subr.bf16.mxu0 0
    %211 = vmatpush1.bf16.msra.mxu0 0
    %212 = vmatprep.subr.bf16.mxu0 0
    %213 = vmatpush1.bf16.msra.mxu0 0
    %214 = vmatprep.subr.bf16.mxu0 0
    %215 = vmatpush1.bf16.msra.mxu0 0
    %216 = vmatprep.subr.bf16.mxu0 0
    %217 = vmatpush1.bf16.msra.mxu0 0
    %218 = vmatprep.mubr.bf16.mxu0 0
    %219 = vmatmul.mubr.bf16.gmra.mrb[0].mxu0 %v120
    %v220 = vpop.f32.mrb[0].mxu0
    %v221 = vadd.f32 0.0, %v220
    %v222 = vpop.f32.mrb[0].mxu0
    %v223 = vpop.f32.mrb[0].mxu0
    %v224 = vadd.f32 0.0, %v223
    %v225 = vpop.f32.mrb[0].mxu0
    %226 = vmatprep.mubr.bf16.mxu0 0
    %227 = vmatmul.mubr.bf16.gmra.mrb[0].mxu0 %v121
    %v228 = vpop.f32.mrb[0].mxu0
    %v229 = vadd.f32 0.0, %v228
    %v230 = vpop.f32.mrb[0].mxu0
    %v231 = vpop.f32.mrb[0].mxu0
    %v232 = vadd.f32 0.0, %v231
    %v233 = vpop.f32.mrb[0].mxu0
    %234 = vdwg.mxu0
    %v235 = vld [vmem:[%s4] sm:$0xf]
    %v236 = vld [vmem:[%s4 + $0x4] sm:$0xf]
    %v237 = vld [vmem:[%s4 + $0x8] sm:$0xf]
    %v238 = vld [vmem:[%s4 + $0xc] sm:$0xf]
    %v239 = vld [vmem:[%s4 + $0x10] sm:$0xf]
    %v240 = vld [vmem:[%s4 + $0x14] sm:$0xf]
    %v241 = vld [vmem:[%s4 + $0x18] sm:$0xf]
    %v242 = vld [vmem:[%s4 + $0x1c] sm:$0xf]
    %v243 = vld [vmem:[%s4 + $0x20] sm:$0xf]
    %v244 = vld [vmem:[%s4 + $0x24] sm:$0xf]
    %v245 = vld [vmem:[%s4 + $0x28] sm:$0xf]
    %v246 = vld [vmem:[%s4 + $0x2c] sm:$0xf]
    %v247 = vld [vmem:[%s4 + $0x30] sm:$0xf]
    %v248 = vld [vmem:[%s4 + $0x34] sm:$0xf]
    %v249 = vld [vmem:[%s4 + $0x38] sm:$0xf]
    %v250 = vld [vmem:[%s4 + $0x3c] sm:$0xf]
    %v267 = vunpack.c.l.b16 %v235
    %v268 = vunpack.c.l.b16 %v236
    %v269 = vunpack.c.l.b16 %v237
    %v270 = vunpack.c.l.b16 %v238
    %v271 = vunpack.c.l.b16 %v239
    %v272 = vunpack.c.l.b16 %v240
    %v273 = vunpack.c.l.b16 %v241
    %v274 = vunpack.c.l.b16 %v242
    %v275 = vunpack.c.l.b16 %v243
    %v276 = vunpack.c.l.b16 %v244
    %v277 = vunpack.c.l.b16 %v245
    %v278 = vunpack.c.l.b16 %v246
    %v279 = vunpack.c.l.b16 %v247
    %v280 = vunpack.c.l.b16 %v248
    %v281 = vunpack.c.l.b16 %v249
    %v282 = vunpack.c.l.b16 %v250
    %v283 = vpack.c.b16 %v268, %v267
    %v284 = vpack.c.b16 %v270, %v269
    %v285 = vpack.c.b16 %v272, %v271
    %v286 = vpack.c.b16 %v274, %v273
    %v287 = vpack.c.b16 %v276, %v275
    %v288 = vpack.c.b16 %v278, %v277
    %v289 = vpack.c.b16 %v280, %v279
    %v290 = vpack.c.b16 %v282, %v281
    %299 = vmatprep.subr.bf16.mxu0 0
    %300 = vmatpush1.bf16.msra.mxu0 %v283
    %301 = vmatprep.subr.bf16.mxu0 0
    %302 = vmatpush1.bf16.msra.mxu0 %v284
    %303 = vmatprep.subr.bf16.mxu0 0
    %304 = vmatpush1.bf16.msra.mxu0 %v285
    %305 = vmatprep.subr.bf16.mxu0 0
    %306 = vmatpush1.bf16.msra.mxu0 %v286
    %307 = vmatprep.subr.bf16.mxu0 0
    %308 = vmatpush1.bf16.msra.mxu0 %v287
    %309 = vmatprep.subr.bf16.mxu0 0
    %310 = vmatpush1.bf16.msra.mxu0 %v288
    %311 = vmatprep.subr.bf16.mxu0 0
    %312 = vmatpush1.bf16.msra.mxu0 %v289
    %313 = vmatprep.subr.bf16.mxu0 0
    %314 = vmatpush1.bf16.msra.mxu0 %v290
    %315 = vmatprep.subr.bf16.mxu0 0
    %316 = vmatpush1.bf16.msra.mxu0 0
    %317 = vmatprep.subr.bf16.mxu0 0
    %318 = vmatpush1.bf16.msra.mxu0 0
    %319 = vmatprep.subr.bf16.mxu0 0
    %320 = vmatpush1.bf16.msra.mxu0 0
    %321 = vmatprep.subr.bf16.mxu0 0
    %322 = vmatpush1.bf16.msra.mxu0 0
    %323 = vmatprep.subr.bf16.mxu0 0
    %324 = vmatpush1.bf16.msra.mxu0 0
    %325 = vmatprep.subr.bf16.mxu0 0
    %326 = vmatpush1.bf16.msra.mxu0 0
    %327 = vmatprep.subr.bf16.mxu0 0
    %328 = vmatpush1.bf16.msra.mxu0 0
    %329 = vmatprep.subr.bf16.mxu0 0
    %330 = vmatpush1.bf16.msra.mxu0 0
    %331 = vmatprep.mubr.bf16.mxu0 0
    %332 = vmatmul.mubr.bf16.gmra.mrb[0].mxu0 %v120
    %v333 = vpop.f32.mrb[0].mxu0
    %v334 = vadd.f32 0.0, %v333
    %v335 = vpop.f32.mrb[0].mxu0
    %v336 = vpop.f32.mrb[0].mxu0
    %v337 = vadd.f32 0.0, %v336
    %v338 = vpop.f32.mrb[0].mxu0
    %339 = vmatprep.mubr.bf16.mxu0 0
    %340 = vmatmul.mubr.bf16.gmra.mrb[0].mxu0 %v121
    %v341 = vpop.f32.mrb[0].mxu0
    %v342 = vadd.f32 0.0, %v341
    %v343 = vpop.f32.mrb[0].mxu0
    %v344 = vpop.f32.mrb[0].mxu0
    %v345 = vadd.f32 0.0, %v344
    %v346 = vpop.f32.mrb[0].mxu0
    %347 = vdwg.mxu0
    %v348 = vld [vmem:[%s5] sm:$0xf]
    %v349 = vld [vmem:[%s5 + $0x4] sm:$0xf]
    %v350 = vld [vmem:[%s5 + $0x8] sm:$0xf]
    %v351 = vld [vmem:[%s5 + $0xc] sm:$0xf]
    %v352 = vld [vmem:[%s5 + $0x10] sm:$0xf]
    %v353 = vld [vmem:[%s5 + $0x14] sm:$0xf]
    %v354 = vld [vmem:[%s5 + $0x18] sm:$0xf]
    %v355 = vld [vmem:[%s5 + $0x1c] sm:$0xf]
    %v356 = vld [vmem:[%s5 + $0x20] sm:$0xf]
    %v357 = vld [vmem:[%s5 + $0x24] sm:$0xf]
    %v358 = vld [vmem:[%s5 + $0x28] sm:$0xf]
    %v359 = vld [vmem:[%s5 + $0x2c] sm:$0xf]
    %v360 = vld [vmem:[%s5 + $0x30] sm:$0xf]
    %v361 = vld [vmem:[%s5 + $0x34] sm:$0xf]
    %v362 = vld [vmem:[%s5 + $0x38] sm:$0xf]
    %v363 = vld [vmem:[%s5 + $0x3c] sm:$0xf]
    %v380 = vunpack.c.l.b16 %v348
    %v381 = vunpack.c.l.b16 %v349
    %v382 = vunpack.c.l.b16 %v350
    %v383 = vunpack.c.l.b16 %v351
    %v384 = vunpack.c.l.b16 %v352
    %v385 = vunpack.c.l.b16 %v353
    %v386 = vunpack.c.l.b16 %v354
    %v387 = vunpack.c.l.b16 %v355
    %v388 = vunpack.c.l.b16 %v356
    %v389 = vunpack.c.l.b16 %v357
    %v390 = vunpack.c.l.b16 %v358
    %v391 = vunpack.c.l.b16 %v359
    %v392 = vunpack.c.l.b16 %v360
    %v393 = vunpack.c.l.b16 %v361
    %v394 = vunpack.c.l.b16 %v362
    %v395 = vunpack.c.l.b16 %v363
    %v396 = vpack.c.b16 %v381, %v380
    %v397 = vpack.c.b16 %v383, %v382
    %v398 = vpack.c.b16 %v385, %v384
    %v399 = vpack.c.b16 %v387, %v386
    %v400 = vpack.c.b16 %v389, %v388
    %v401 = vpack.c.b16 %v391, %v390
    %v402 = vpack.c.b16 %v393, %v392
    %v403 = vpack.c.b16 %v395, %v394
    %412 = vmatprep.subr.bf16.mxu0 0
    %413 = vmatpush1.bf16.msra.mxu0 %v396
    %414 = vmatprep.subr.bf16.mxu0 0
    %415 = vmatpush1.bf16.msra.mxu0 %v397
    %416 = vmatprep.subr.bf16.mxu0 0
    %417 = vmatpush1.bf16.msra.mxu0 %v398
    %418 = vmatprep.subr.bf16.mxu0 0
    %419 = vmatpush1.bf16.msra.mxu0 %v399
    %420 = vmatprep.subr.bf16.mxu0 0
    %421 = vmatpush1.bf16.msra.mxu0 %v400
    %422 = vmatprep.subr.bf16.mxu0 0
    %423 = vmatpush1.bf16.msra.mxu0 %v401
    %424 = vmatprep.subr.bf16.mxu0 0
    %425 = vmatpush1.bf16.msra.mxu0 %v402
    %426 = vmatprep.subr.bf16.mxu0 0
    %427 = vmatpush1.bf16.msra.mxu0 %v403
    %428 = vmatprep.subr.bf16.mxu0 0
    %429 = vmatpush1.bf16.msra.mxu0 0
    %430 = vmatprep.subr.bf16.mxu0 0
    %431 = vmatpush1.bf16.msra.mxu0 0
    %432 = vmatprep.subr.bf16.mxu0 0
    %433 = vmatpush1.bf16.msra.mxu0 0
    %434 = vmatprep.subr.bf16.mxu0 0
    %435 = vmatpush1.bf16.msra.mxu0 0
    %436 = vmatprep.subr.bf16.mxu0 0
    %437 = vmatpush1.bf16.msra.mxu0 0
    %438 = vmatprep.subr.bf16.mxu0 0
    %439 = vmatpush1.bf16.msra.mxu0 0
    %440 = vmatprep.subr.bf16.mxu0 0
    %441 = vmatpush1.bf16.msra.mxu0 0
    %442 = vmatprep.subr.bf16.mxu0 0
    %443 = vmatpush1.bf16.msra.mxu0 0
    %444 = vmatprep.mubr.bf16.mxu0 0
    %445 = vmatmul.mubr.bf16.gmra.mrb[0].mxu0 %v120
    %v446 = vpop.f32.mrb[0].mxu0
    %v447 = vadd.f32 0.0, %v446
    %v448 = vpop.f32.mrb[0].mxu0
    %v449 = vpop.f32.mrb[0].mxu0
    %v450 = vadd.f32 0.0, %v449
    %v451 = vpop.f32.mrb[0].mxu0
    %452 = vmatprep.mubr.bf16.mxu0 0
    %453 = vmatmul.mubr.bf16.gmra.mrb[0].mxu0 %v121
    %v454 = vpop.f32.mrb[0].mxu0
    %v455 = vadd.f32 0.0, %v454
    %v456 = vpop.f32.mrb[0].mxu0
    %v457 = vpop.f32.mrb[0].mxu0
    %v458 = vadd.f32 0.0, %v457
    %v459 = vpop.f32.mrb[0].mxu0
    %460 = vdwg.mxu0
    %v461 = vpack.c.bf16 %v224, %v221
    %v462 = vpack.c.bf16 %v232, %v229
    %v463 = vpack.c.bf16 %v337, %v334
    %v464 = vpack.c.bf16 %v345, %v342
    %v465 = vpack.c.bf16 %v450, %v447
    %v466 = vpack.c.bf16 %v458, %v455
    %v467 = vld [vmem:[%s6] sm:$0xf]
    %v468 = vld [vmem:[%s6 + $0x4] sm:$0xf]
    %v469 = vld [vmem:[%s6 + $0x8] sm:$0xf]
    %v470 = vld [vmem:[%s6 + $0xc] sm:$0xf]
    %vm471 = vcmask 261120
    %v473 = vsel %vm471, %v461, 0
    %v476 = vsel %vm471, %v463, 0
    %478 = vmatprep.subr.bf16.mxu0 0
    %479 = vmatpush1.bf16.xpose.msra.mxu0 %v476
    %480 = vmatprep.subr.bf16.mxu0 0
    %481 = vmatpush1.bf16.xpose.msra.mxu0 0
    %482 = vmatprep.subr.bf16.mxu0 0
    %483 = vmatpush1.bf16.xpose.msra.mxu0 0
    %484 = vmatprep.subr.bf16.mxu0 0
    %485 = vmatpush1.bf16.xpose.msra.mxu0 0
    %486 = vmatprep.subr.bf16.mxu0 0
    %487 = vmatpush1.bf16.xpose.msra.mxu0 0
    %488 = vmatprep.subr.bf16.mxu0 0
    %489 = vmatpush1.bf16.xpose.msra.mxu0 0
    %490 = vmatprep.subr.bf16.mxu0 0
    %491 = vmatpush1.bf16.xpose.msra.mxu0 0
    %492 = vmatprep.subr.bf16.mxu0 0
    %493 = vmatpush1.bf16.xpose.msra.mxu0 0
    %494 = vmatprep.subr.bf16.mxu0 0
    %495 = vmatpush1.bf16.xpose.msra.mxu0 0
    %496 = vmatprep.subr.bf16.mxu0 0
    %497 = vmatpush1.bf16.xpose.msra.mxu0 0
    %498 = vmatprep.subr.bf16.mxu0 0
    %499 = vmatpush1.bf16.xpose.msra.mxu0 0
    %500 = vmatprep.subr.bf16.mxu0 0
    %501 = vmatpush1.bf16.xpose.msra.mxu0 0
    %502 = vmatprep.subr.bf16.mxu0 0
    %503 = vmatpush1.bf16.xpose.msra.mxu0 0
    %504 = vmatprep.subr.bf16.mxu0 0
    %505 = vmatpush1.bf16.xpose.msra.mxu0 0
    %506 = vmatprep.subr.bf16.mxu0 0
    %507 = vmatpush1.bf16.xpose.msra.mxu0 0
    %508 = vmatprep.subr.bf16.mxu0 0
    %509 = vmatpush1.bf16.xpose.msra.mxu0 0
    %510 = vmatprep.mubr.bf16.mxu0 0
    %511 = vmatmul.mubr.bf16.gmra.mrb[0].mxu0 %v473
    %v512 = vpop.f32.mrb[0].mxu0
    %v513 = vadd.f32 0.0, %v512
    %v514 = vpop.f32.mrb[0].mxu0
    %v515 = vpop.f32.mrb[0].mxu0
    %v516 = vadd.f32 0.0, %v515
    %v517 = vpop.f32.mrb[0].mxu0
    %518 = vdwg.mxu0
    %vm519 = vcmask 130048
    %v520 = vsel %vm519, %v513, -inf
    %521 = vmax.xlane.f32.xlu0 %v520
    %v522 = vpop.xlane.xlu0 %521
    %v523 = vsel %vm519, %v516, -inf
    %524 = vmax.xlane.f32.xlu0 %v523
    %v525 = vpop.xlane.xlu0 %524
    %v526 = vsub.f32 %v513, %v522
    %v527 = vsub.f32 %v516, %v525
    %v528 = vmul.f32 %v526, 1.442695
    %v529 = vpow.pop %v528
    %v530 = vmul.f32 %v527, 1.442695
    %v531 = vpow.pop %v530
    %v532 = vsel %vm519, %v529, 0.0
    %533 = vadd.xlane.f32.xlu0 %v532
    %v534 = vpop.xlane.xlu0 %533
    %v535 = vsel %vm519, %v531, 0.0
    %536 = vadd.xlane.f32.xlu0 %v535
    %v537 = vpop.xlane.xlu0 %536
    %v538 = vrcp.pop %v534
    %v539 = vrcp.pop %v537
    %v540 = vmul.f32 %v529, %v538
    %v541 = vmul.f32 %v531, %v539
    %v542 = vpack.c.bf16 %v541, %v540
    %v544 = vsel %vm519, %v542, 0
    %546 = vmatprep.subr.bf16.mxu0 0
    %547 = vmatpush1.bf16.msra.mxu0 %v465
    %548 = vmatprep.subr.bf16.mxu0 0
    %549 = vmatpush1.bf16.msra.mxu0 0
    %550 = vmatprep.subr.bf16.mxu0 0
    %551 = vmatpush1.bf16.msra.mxu0 0
    %552 = vmatprep.subr.bf16.mxu0 0
    %553 = vmatpush1.bf16.msra.mxu0 0
    %554 = vmatprep.subr.bf16.mxu0 0
    %555 = vmatpush1.bf16.msra.mxu0 0
    %556 = vmatprep.subr.bf16.mxu0 0
    %557 = vmatpush1.bf16.msra.mxu0 0
    %558 = vmatprep.subr.bf16.mxu0 0
    %559 = vmatpush1.bf16.msra.mxu0 0
    %560 = vmatprep.subr.bf16.mxu0 0
    %561 = vmatpush1.bf16.msra.mxu0 0
    %562 = vmatprep.subr.bf16.mxu0 0
    %563 = vmatpush1.bf16.msra.mxu0 0
    %564 = vmatprep.subr.bf16.mxu0 0
    %565 = vmatpush1.bf16.msra.mxu0 0
    %566 = vmatprep.subr.bf16.mxu0 0
    %567 = vmatpush1.bf16.msra.mxu0 0
    %568 = vmatprep.subr.bf16.mxu0 0
    %569 = vmatpush1.bf16.msra.mxu0 0
    %570 = vmatprep.subr.bf16.mxu0 0
    %571 = vmatpush1.bf16.msra.mxu0 0
    %572 = vmatprep.subr.bf16.mxu0 0
    %573 = vmatpush1.bf16.msra.mxu0 0
    %574 = vmatprep.subr.bf16.mxu0 0
    %575 = vmatpush1.bf16.msra.mxu0 0
    %576 = vmatprep.subr.bf16.mxu0 0
    %577 = vmatpush1.bf16.msra.mxu0 0
    %578 = vmatprep.mubr.bf16.mxu0 0
    %579 = vmatmul.mubr.bf16.gmra.mrb[0].mxu0 %v544
    %v580 = vpop.f32.mrb[0].mxu0
    %v581 = vadd.f32 0.0, %v580
    %v582 = vpop.f32.mrb[0].mxu0
    %v583 = vpop.f32.mrb[0].mxu0
    %v584 = vadd.f32 0.0, %v583
    %v585 = vpop.f32.mrb[0].mxu0
    %586 = vdwg.mxu0
    %v587 = vpack.c.bf16 %v584, %v581
    %v589 = vsel %vm471, %v462, 0
    %v592 = vsel %vm471, %v464, 0
    %594 = vmatprep.subr.bf16.mxu0 0
    %595 = vmatpush1.bf16.xpose.msra.mxu0 %v592
    %596 = vmatprep.subr.bf16.mxu0 0
    %597 = vmatpush1.bf16.xpose.msra.mxu0 0
    %598 = vmatprep.subr.bf16.mxu0 0
    %599 = vmatpush1.bf16.xpose.msra.mxu0 0
    %600 = vmatprep.subr.bf16.mxu0 0
    %601 = vmatpush1.bf16.xpose.msra.mxu0 0
    %602 = vmatprep.subr.bf16.mxu0 0
    %603 = vmatpush1.bf16.xpose.msra.mxu0 0
    %604 = vmatprep.subr.bf16.mxu0 0
    %605 = vmatpush1.bf16.xpose.msra.mxu0 0
    %606 = vmatprep.subr.bf16.mxu0 0
    %607 = vmatpush1.bf16.xpose.msra.mxu0 0
    %608 = vmatprep.subr.bf16.mxu0 0
    %609 = vmatpush1.bf16.xpose.msra.mxu0 0
    %610 = vmatprep.subr.bf16.mxu0 0
    %611 = vmatpush1.bf16.xpose.msra.mxu0 0
    %612 = vmatprep.subr.bf16.mxu0 0
    %613 = vmatpush1.bf16.xpose.msra.mxu0 0
    %614 = vmatprep.subr.bf16.mxu0 0
    %615 = vmatpush1.bf16.xpose.msra.mxu0 0
    %616 = vmatprep.subr.bf16.mxu0 0
    %617 = vmatpush1.bf16.xpose.msra.mxu0 0
    %618 = vmatprep.subr.bf16.mxu0 0
    %619 = vmatpush1.bf16.xpose.msra.mxu0 0
    %620 = vmatprep.subr.bf16.mxu0 0
    %621 = vmatpush1.bf16.xpose.msra.mxu0 0
    %622 = vmatprep.subr.bf16.mxu0 0
    %623 = vmatpush1.bf16.xpose.msra.mxu0 0
    %624 = vmatprep.subr.bf16.mxu0 0
    %625 = vmatpush1.bf16.xpose.msra.mxu0 0
    %626 = vmatprep.mubr.bf16.mxu0 0
    %627 = vmatmul.mubr.bf16.gmra.mrb[0].mxu0 %v589
    %v628 = vpop.f32.mrb[0].mxu0
    %v629 = vadd.f32 0.0, %v628
    %v630 = vpop.f32.mrb[0].mxu0
    %v631 = vpop.f32.mrb[0].mxu0
    %v632 = vadd.f32 0.0, %v631
    %v633 = vpop.f32.mrb[0].mxu0
    %634 = vdwg.mxu0
    %v635 = vsel %vm519, %v629, -inf
    %636 = vmax.xlane.f32.xlu0 %v635
    %v637 = vpop.xlane.xlu0 %636
    %v638 = vsel %vm519, %v632, -inf
    %639 = vmax.xlane.f32.xlu0 %v638
    %v640 = vpop.xlane.xlu0 %639
    %v641 = vsub.f32 %v629, %v637
    %v642 = vsub.f32 %v632, %v640
    %v643 = vmul.f32 %v641, 1.442695
    %v644 = vpow.pop %v643
    %v645 = vmul.f32 %v642, 1.442695
    %v646 = vpow.pop %v645
    %v647 = vsel %vm519, %v644, 0.0
    %648 = vadd.xlane.f32.xlu0 %v647
    %v649 = vpop.xlane.xlu0 %648
    %v650 = vsel %vm519, %v646, 0.0
    %651 = vadd.xlane.f32.xlu0 %v650
    %v652 = vpop.xlane.xlu0 %651
    %v653 = vrcp.pop %v649
    %v654 = vrcp.pop %v652
    %v655 = vmul.f32 %v644, %v653
    %v656 = vmul.f32 %v646, %v654
    %v657 = vpack.c.bf16 %v656, %v655
    %v659 = vsel %vm519, %v657, 0
    %661 = vmatprep.subr.bf16.mxu0 0
    %662 = vmatpush1.bf16.msra.mxu0 %v466
    %663 = vmatprep.subr.bf16.mxu0 0
    %664 = vmatpush1.bf16.msra.mxu0 0
    %665 = vmatprep.subr.bf16.mxu0 0
    %666 = vmatpush1.bf16.msra.mxu0 0
    %667 = vmatprep.subr.bf16.mxu0 0
    %668 = vmatpush1.bf16.msra.mxu0 0
    %669 = vmatprep.subr.bf16.mxu0 0
    %670 = vmatpush1.bf16.msra.mxu0 0
    %671 = vmatprep.subr.bf16.mxu0 0
    %672 = vmatpush1.bf16.msra.mxu0 0
    %673 = vmatprep.subr.bf16.mxu0 0
    %674 = vmatpush1.bf16.msra.mxu0 0
    %675 = vmatprep.subr.bf16.mxu0 0
    %676 = vmatpush1.bf16.msra.mxu0 0
    %677 = vmatprep.subr.bf16.mxu0 0
    %678 = vmatpush1.bf16.msra.mxu0 0
    %679 = vmatprep.subr.bf16.mxu0 0
    %680 = vmatpush1.bf16.msra.mxu0 0
    %681 = vmatprep.subr.bf16.mxu0 0
    %682 = vmatpush1.bf16.msra.mxu0 0
    %683 = vmatprep.subr.bf16.mxu0 0
    %684 = vmatpush1.bf16.msra.mxu0 0
    %685 = vmatprep.subr.bf16.mxu0 0
    %686 = vmatpush1.bf16.msra.mxu0 0
    %687 = vmatprep.subr.bf16.mxu0 0
    %688 = vmatpush1.bf16.msra.mxu0 0
    %689 = vmatprep.subr.bf16.mxu0 0
    %690 = vmatpush1.bf16.msra.mxu0 0
    %691 = vmatprep.subr.bf16.mxu0 0
    %692 = vmatpush1.bf16.msra.mxu0 0
    %693 = vmatprep.mubr.bf16.mxu0 0
    %694 = vmatmul.mubr.bf16.gmra.mrb[0].mxu0 %v659
    %v695 = vpop.f32.mrb[0].mxu0
    %v696 = vadd.f32 0.0, %v695
    %v697 = vpop.f32.mrb[0].mxu0
    %v698 = vpop.f32.mrb[0].mxu0
    %v699 = vadd.f32 0.0, %v698
    %v700 = vpop.f32.mrb[0].mxu0
    %701 = vdwg.mxu0
    %v702 = vpack.c.bf16 %v699, %v696
    %s703 = scalar_lea.vmem %s3, 64
    %v704 = vld [vmem:[%s703] sm:$0xf]
    %v705 = vld [vmem:[%s703 + $0x4] sm:$0xf]
    %v706 = vld [vmem:[%s703 + $0x8] sm:$0xf]
    %v707 = vld [vmem:[%s703 + $0xc] sm:$0xf]
    %v708 = vld [vmem:[%s703 + $0x10] sm:$0xf]
    %v709 = vld [vmem:[%s703 + $0x14] sm:$0xf]
    %v710 = vld [vmem:[%s703 + $0x18] sm:$0xf]
    %v711 = vld [vmem:[%s703 + $0x1c] sm:$0xf]
    %v712 = vld [vmem:[%s703 + $0x20] sm:$0xf]
    %v713 = vld [vmem:[%s703 + $0x24] sm:$0xf]
    %v714 = vld [vmem:[%s703 + $0x28] sm:$0xf]
    %v715 = vld [vmem:[%s703 + $0x2c] sm:$0xf]
    %v716 = vld [vmem:[%s703 + $0x30] sm:$0xf]
    %v717 = vld [vmem:[%s703 + $0x34] sm:$0xf]
    %v718 = vld [vmem:[%s703 + $0x38] sm:$0xf]
    %v719 = vld [vmem:[%s703 + $0x3c] sm:$0xf]
    %v736 = vunpack.c.l.b16 %v704
    %v737 = vunpack.c.l.b16 %v705
    %v738 = vunpack.c.l.b16 %v706
    %v739 = vunpack.c.l.b16 %v707
    %v740 = vunpack.c.l.b16 %v708
    %v741 = vunpack.c.l.b16 %v709
    %v742 = vunpack.c.l.b16 %v710
    %v743 = vunpack.c.l.b16 %v711
    %v744 = vunpack.c.l.b16 %v712
    %v745 = vunpack.c.l.b16 %v713
    %v746 = vunpack.c.l.b16 %v714
    %v747 = vunpack.c.l.b16 %v715
    %v748 = vunpack.c.l.b16 %v716
    %v749 = vunpack.c.l.b16 %v717
    %v750 = vunpack.c.l.b16 %v718
    %v751 = vunpack.c.l.b16 %v719
    %v752 = vpack.c.b16 %v737, %v736
    %v753 = vpack.c.b16 %v739, %v738
    %v754 = vpack.c.b16 %v741, %v740
    %v755 = vpack.c.b16 %v743, %v742
    %v756 = vpack.c.b16 %v745, %v744
    %v757 = vpack.c.b16 %v747, %v746
    %v758 = vpack.c.b16 %v749, %v748
    %v759 = vpack.c.b16 %v751, %v750
    %768 = vmatprep.subr.bf16.mxu0 0
    %769 = vmatpush1.bf16.msra.mxu0 %v752
    %770 = vmatprep.subr.bf16.mxu0 0
    %771 = vmatpush1.bf16.msra.mxu0 %v753
    %772 = vmatprep.subr.bf16.mxu0 0
    %773 = vmatpush1.bf16.msra.mxu0 %v754
    %774 = vmatprep.subr.bf16.mxu0 0
    %775 = vmatpush1.bf16.msra.mxu0 %v755
    %776 = vmatprep.subr.bf16.mxu0 0
    %777 = vmatpush1.bf16.msra.mxu0 %v756
    %778 = vmatprep.subr.bf16.mxu0 0
    %779 = vmatpush1.bf16.msra.mxu0 %v757
    %780 = vmatprep.subr.bf16.mxu0 0
    %781 = vmatpush1.bf16.msra.mxu0 %v758
    %782 = vmatprep.subr.bf16.mxu0 0
    %783 = vmatpush1.bf16.msra.mxu0 %v759
    %784 = vmatprep.subr.bf16.mxu0 0
    %785 = vmatpush1.bf16.msra.mxu0 0
    %786 = vmatprep.subr.bf16.mxu0 0
    %787 = vmatpush1.bf16.msra.mxu0 0
    %788 = vmatprep.subr.bf16.mxu0 0
    %789 = vmatpush1.bf16.msra.mxu0 0
    %790 = vmatprep.subr.bf16.mxu0 0
    %791 = vmatpush1.bf16.msra.mxu0 0
    %792 = vmatprep.subr.bf16.mxu0 0
    %793 = vmatpush1.bf16.msra.mxu0 0
    %794 = vmatprep.subr.bf16.mxu0 0
    %795 = vmatpush1.bf16.msra.mxu0 0
    %796 = vmatprep.subr.bf16.mxu0 0
    %797 = vmatpush1.bf16.msra.mxu0 0
    %798 = vmatprep.subr.bf16.mxu0 0
    %799 = vmatpush1.bf16.msra.mxu0 0
    %800 = vmatprep.mubr.bf16.mxu0 0
    %801 = vmatmul.mubr.bf16.gmra.mrb[0].mxu0 %v120
    %v802 = vpop.f32.mrb[0].mxu0
    %v803 = vadd.f32 0.0, %v802
    %v804 = vpop.f32.mrb[0].mxu0
    %v805 = vpop.f32.mrb[0].mxu0
    %v806 = vadd.f32 0.0, %v805
    %v807 = vpop.f32.mrb[0].mxu0
    %808 = vmatprep.mubr.bf16.mxu0 0
    %809 = vmatmul.mubr.bf16.gmra.mrb[0].mxu0 %v121
    %v810 = vpop.f32.mrb[0].mxu0
    %v811 = vadd.f32 0.0, %v810
    %v812 = vpop.f32.mrb[0].mxu0
    %v813 = vpop.f32.mrb[0].mxu0
    %v814 = vadd.f32 0.0, %v813
    %v815 = vpop.f32.mrb[0].mxu0
    %816 = vdwg.mxu0
    %s817 = scalar_lea.vmem %s4, 64
    %v818 = vld [vmem:[%s817] sm:$0xf]
    %v819 = vld [vmem:[%s817 + $0x4] sm:$0xf]
    %v820 = vld [vmem:[%s817 + $0x8] sm:$0xf]
    %v821 = vld [vmem:[%s817 + $0xc] sm:$0xf]
    %v822 = vld [vmem:[%s817 + $0x10] sm:$0xf]
    %v823 = vld [vmem:[%s817 + $0x14] sm:$0xf]
    %v824 = vld [vmem:[%s817 + $0x18] sm:$0xf]
    %v825 = vld [vmem:[%s817 + $0x1c] sm:$0xf]
    %v826 = vld [vmem:[%s817 + $0x20] sm:$0xf]
    %v827 = vld [vmem:[%s817 + $0x24] sm:$0xf]
    %v828 = vld [vmem:[%s817 + $0x28] sm:$0xf]
    %v829 = vld [vmem:[%s817 + $0x2c] sm:$0xf]
    %v830 = vld [vmem:[%s817 + $0x30] sm:$0xf]
    %v831 = vld [vmem:[%s817 + $0x34] sm:$0xf]
    %v832 = vld [vmem:[%s817 + $0x38] sm:$0xf]
    %v833 = vld [vmem:[%s817 + $0x3c] sm:$0xf]
    %v850 = vunpack.c.l.b16 %v818
    %v851 = vunpack.c.l.b16 %v819
    %v852 = vunpack.c.l.b16 %v820
    %v853 = vunpack.c.l.b16 %v821
    %v854 = vunpack.c.l.b16 %v822
    %v855 = vunpack.c.l.b16 %v823
    %v856 = vunpack.c.l.b16 %v824
    %v857 = vunpack.c.l.b16 %v825
    %v858 = vunpack.c.l.b16 %v826
    %v859 = vunpack.c.l.b16 %v827
    %v860 = vunpack.c.l.b16 %v828
    %v861 = vunpack.c.l.b16 %v829
    %v862 = vunpack.c.l.b16 %v830
    %v863 = vunpack.c.l.b16 %v831
    %v864 = vunpack.c.l.b16 %v832
    %v865 = vunpack.c.l.b16 %v833
    %v866 = vpack.c.b16 %v851, %v850
    %v867 = vpack.c.b16 %v853, %v852
    %v868 = vpack.c.b16 %v855, %v854
    %v869 = vpack.c.b16 %v857, %v856
    %v870 = vpack.c.b16 %v859, %v858
    %v871 = vpack.c.b16 %v861, %v860
    %v872 = vpack.c.b16 %v863, %v862
    %v873 = vpack.c.b16 %v865, %v864
    %882 = vmatprep.subr.bf16.mxu0 0
    %883 = vmatpush1.bf16.msra.mxu0 %v866
    %884 = vmatprep.subr.bf16.mxu0 0
    %885 = vmatpush1.bf16.msra.mxu0 %v867
    %886 = vmatprep.subr.bf16.mxu0 0
    %887 = vmatpush1.bf16.msra.mxu0 %v868
    %888 = vmatprep.subr.bf16.mxu0 0
    %889 = vmatpush1.bf16.msra.mxu0 %v869
    %890 = vmatprep.subr.bf16.mxu0 0
    %891 = vmatpush1.bf16.msra.mxu0 %v870
    %892 = vmatprep.subr.bf16.mxu0 0
    %893 = vmatpush1.bf16.msra.mxu0 %v871
    %894 = vmatprep.subr.bf16.mxu0 0
    %895 = vmatpush1.bf16.msra.mxu0 %v872
    %896 = vmatprep.subr.bf16.mxu0 0
    %897 = vmatpush1.bf16.msra.mxu0 %v873
    %898 = vmatprep.subr.bf16.mxu0 0
    %899 = vmatpush1.bf16.msra.mxu0 0
    %900 = vmatprep.subr.bf16.mxu0 0
    %901 = vmatpush1.bf16.msra.mxu0 0
    %902 = vmatprep.subr.bf16.mxu0 0
    %903 = vmatpush1.bf16.msra.mxu0 0
    %904 = vmatprep.subr.bf16.mxu0 0
    %905 = vmatpush1.bf16.msra.mxu0 0
    %906 = vmatprep.subr.bf16.mxu0 0
    %907 = vmatpush1.bf16.msra.mxu0 0
    %908 = vmatprep.subr.bf16.mxu0 0
    %909 = vmatpush1.bf16.msra.mxu0 0
    %910 = vmatprep.subr.bf16.mxu0 0
    %911 = vmatpush1.bf16.msra.mxu0 0
    %912 = vmatprep.subr.bf16.mxu0 0
    %913 = vmatpush1.bf16.msra.mxu0 0
    %914 = vmatprep.mubr.bf16.mxu0 0
    %915 = vmatmul.mubr.bf16.gmra.mrb[0].mxu0 %v120
    %v916 = vpop.f32.mrb[0].mxu0
    %v917 = vadd.f32 0.0, %v916
    %v918 = vpop.f32.mrb[0].mxu0
    %v919 = vpop.f32.mrb[0].mxu0
    %v920 = vadd.f32 0.0, %v919
    %v921 = vpop.f32.mrb[0].mxu0
    %922 = vmatprep.mubr.bf16.mxu0 0
    %923 = vmatmul.mubr.bf16.gmra.mrb[0].mxu0 %v121
    %v924 = vpop.f32.mrb[0].mxu0
    %v925 = vadd.f32 0.0, %v924
    %v926 = vpop.f32.mrb[0].mxu0
    %v927 = vpop.f32.mrb[0].mxu0
    %v928 = vadd.f32 0.0, %v927
    %v929 = vpop.f32.mrb[0].mxu0
    %930 = vdwg.mxu0
    %s931 = scalar_lea.vmem %s5, 64
    %v932 = vld [vmem:[%s931] sm:$0xf]
    %v933 = vld [vmem:[%s931 + $0x4] sm:$0xf]
    %v934 = vld [vmem:[%s931 + $0x8] sm:$0xf]
    %v935 = vld [vmem:[%s931 + $0xc] sm:$0xf]
    %v936 = vld [vmem:[%s931 + $0x10] sm:$0xf]
    %v937 = vld [vmem:[%s931 + $0x14] sm:$0xf]
    %v938 = vld [vmem:[%s931 + $0x18] sm:$0xf]
    %v939 = vld [vmem:[%s931 + $0x1c] sm:$0xf]
    %v940 = vld [vmem:[%s931 + $0x20] sm:$0xf]
    %v941 = vld [vmem:[%s931 + $0x24] sm:$0xf]
    %v942 = vld [vmem:[%s931 + $0x28] sm:$0xf]
    %v943 = vld [vmem:[%s931 + $0x2c] sm:$0xf]
    %v944 = vld [vmem:[%s931 + $0x30] sm:$0xf]
    %v945 = vld [vmem:[%s931 + $0x34] sm:$0xf]
    %v946 = vld [vmem:[%s931 + $0x38] sm:$0xf]
    %v947 = vld [vmem:[%s931 + $0x3c] sm:$0xf]
    %v964 = vunpack.c.l.b16 %v932
    %v965 = vunpack.c.l.b16 %v933
    %v966 = vunpack.c.l.b16 %v934
    %v967 = vunpack.c.l.b16 %v935
    %v968 = vunpack.c.l.b16 %v936
    %v969 = vunpack.c.l.b16 %v937
    %v970 = vunpack.c.l.b16 %v938
    %v971 = vunpack.c.l.b16 %v939
    %v972 = vunpack.c.l.b16 %v940
    %v973 = vunpack.c.l.b16 %v941
    %v974 = vunpack.c.l.b16 %v942
    %v975 = vunpack.c.l.b16 %v943
    %v976 = vunpack.c.l.b16 %v944
    %v977 = vunpack.c.l.b16 %v945
    %v978 = vunpack.c.l.b16 %v946
    %v979 = vunpack.c.l.b16 %v947
    %v980 = vpack.c.b16 %v965, %v964
    %v981 = vpack.c.b16 %v967, %v966
    %v982 = vpack.c.b16 %v969, %v968
    %v983 = vpack.c.b16 %v971, %v970
    %v984 = vpack.c.b16 %v973, %v972
    %v985 = vpack.c.b16 %v975, %v974
    %v986 = vpack.c.b16 %v977, %v976
    %v987 = vpack.c.b16 %v979, %v978
    %996 = vmatprep.subr.bf16.mxu0 0
    %997 = vmatpush1.bf16.msra.mxu0 %v980
    %998 = vmatprep.subr.bf16.mxu0 0
    %999 = vmatpush1.bf16.msra.mxu0 %v981
    %1000 = vmatprep.subr.bf16.mxu0 0
    %1001 = vmatpush1.bf16.msra.mxu0 %v982
    %1002 = vmatprep.subr.bf16.mxu0 0
    %1003 = vmatpush1.bf16.msra.mxu0 %v983
    %1004 = vmatprep.subr.bf16.mxu0 0
    %1005 = vmatpush1.bf16.msra.mxu0 %v984
    %1006 = vmatprep.subr.bf16.mxu0 0
    %1007 = vmatpush1.bf16.msra.mxu0 %v985
    %1008 = vmatprep.subr.bf16.mxu0 0
    %1009 = vmatpush1.bf16.msra.mxu0 %v986
    %1010 = vmatprep.subr.bf16.mxu0 0
    %1011 = vmatpush1.bf16.msra.mxu0 %v987
    %1012 = vmatprep.subr.bf16.mxu0 0
    %1013 = vmatpush1.bf16.msra.mxu0 0
    %1014 = vmatprep.subr.bf16.mxu0 0
    %1015 = vmatpush1.bf16.msra.mxu0 0
    %1016 = vmatprep.subr.bf16.mxu0 0
    %1017 = vmatpush1.bf16.msra.mxu0 0
    %1018 = vmatprep.subr.bf16.mxu0 0
    %1019 = vmatpush1.bf16.msra.mxu0 0
    %1020 = vmatprep.subr.bf16.mxu0 0
    %1021 = vmatpush1.bf16.msra.mxu0 0
    %1022 = vmatprep.subr.bf16.mxu0 0
    %1023 = vmatpush1.bf16.msra.mxu0 0
    %1024 = vmatprep.subr.bf16.mxu0 0
    %1025 = vmatpush1.bf16.msra.mxu0 0
    %1026 = vmatprep.subr.bf16.mxu0 0
    %1027 = vmatpush1.bf16.msra.mxu0 0
    %1028 = vmatprep.mubr.bf16.mxu0 0
    %1029 = vmatmul.mubr.bf16.gmra.mrb[0].mxu0 %v120
    %v1030 = vpop.f32.mrb[0].mxu0
    %v1031 = vadd.f32 0.0, %v1030
    %v1032 = vpop.f32.mrb[0].mxu0
    %v1033 = vpop.f32.mrb[0].mxu0
    %v1034 = vadd.f32 0.0, %v1033
    %v1035 = vpop.f32.mrb[0].mxu0
    %1036 = vmatprep.mubr.bf16.mxu0 0
    %1037 = vmatmul.mubr.bf16.gmra.mrb[0].mxu0 %v121
    %v1038 = vpop.f32.mrb[0].mxu0
    %v1039 = vadd.f32 0.0, %v1038
    %v1040 = vpop.f32.mrb[0].mxu0
    %v1041 = vpop.f32.mrb[0].mxu0
    %v1042 = vadd.f32 0.0, %v1041
    %v1043 = vpop.f32.mrb[0].mxu0
    %1044 = vdwg.mxu0
    %v1045 = vpack.c.bf16 %v806, %v803
    %v1046 = vpack.c.bf16 %v814, %v811
    %v1047 = vpack.c.bf16 %v920, %v917
    %v1048 = vpack.c.bf16 %v928, %v925
    %v1049 = vpack.c.bf16 %v1034, %v1031
    %v1050 = vpack.c.bf16 %v1042, %v1039
    %s1051 = scalar_lea.vmem %s6, 16
    %v1052 = vld [vmem:[%s1051] sm:$0xf]
    %v1053 = vld [vmem:[%s1051 + $0x4] sm:$0xf]
    %v1054 = vld [vmem:[%s1051 + $0x8] sm:$0xf]
    %v1055 = vld [vmem:[%s1051 + $0xc] sm:$0xf]
    %v1057 = vsel %vm471, %v1045, 0
    %v1060 = vsel %vm471, %v1047, 0
    %1062 = vmatprep.subr.bf16.mxu0 0
    %1063 = vmatpush1.bf16.xpose.msra.mxu0 %v1060
    %1064 = vmatprep.subr.bf16.mxu0 0
    %1065 = vmatpush1.bf16.xpose.msra.mxu0 0
    %1066 = vmatprep.subr.bf16.mxu0 0
    %1067 = vmatpush1.bf16.xpose.msra.mxu0 0
    %1068 = vmatprep.subr.bf16.mxu0 0
    %1069 = vmatpush1.bf16.xpose.msra.mxu0 0
    %1070 = vmatprep.subr.bf16.mxu0 0
    %1071 = vmatpush1.bf16.xpose.msra.mxu0 0
    %1072 = vmatprep.subr.bf16.mxu0 0
    %1073 = vmatpush1.bf16.xpose.msra.mxu0 0
    %1074 = vmatprep.subr.bf16.mxu0 0
    %1075 = vmatpush1.bf16.xpose.msra.mxu0 0
    %1076 = vmatprep.subr.bf16.mxu0 0
    %1077 = vmatpush1.bf16.xpose.msra.mxu0 0
    %1078 = vmatprep.subr.bf16.mxu0 0
    %1079 = vmatpush1.bf16.xpose.msra.mxu0 0
    %1080 = vmatprep.subr.bf16.mxu0 0
    %1081 = vmatpush1.bf16.xpose.msra.mxu0 0
    %1082 = vmatprep.subr.bf16.mxu0 0
    %1083 = vmatpush1.bf16.xpose.msra.mxu0 0
    %1084 = vmatprep.subr.bf16.mxu0 0
    %1085 = vmatpush1.bf16.xpose.msra.mxu0 0
    %1086 = vmatprep.subr.bf16.mxu0 0
    %1087 = vmatpush1.bf16.xpose.msra.mxu0 0
    %1088 = vmatprep.subr.bf16.mxu0 0
    %1089 = vmatpush1.bf16.xpose.msra.mxu0 0
    %1090 = vmatprep.subr.bf16.mxu0 0
    %1091 = vmatpush1.bf16.xpose.msra.mxu0 0
    %1092 = vmatprep.subr.bf16.mxu0 0
    %1093 = vmatpush1.bf16.xpose.msra.mxu0 0
    %1094 = vmatprep.mubr.bf16.mxu0 0
    %1095 = vmatmul.mubr.bf16.gmra.mrb[0].mxu0 %v1057
    %v1096 = vpop.f32.mrb[0].mxu0
    %v1097 = vadd.f32 0.0, %v1096
    %v1098 = vpop.f32.mrb[0].mxu0
    %v1099 = vpop.f32.mrb[0].mxu0
    %v1100 = vadd.f32 0.0, %v1099
    %v1101 = vpop.f32.mrb[0].mxu0
    %1102 = vdwg.mxu0
    %v1103 = vsel %vm519, %v1097, -inf
    %1104 = vmax.xlane.f32.xlu0 %v1103
    %v1105 = vpop.xlane.xlu0 %1104
    %v1106 = vsel %vm519, %v1100, -inf
    %1107 = vmax.xlane.f32.xlu0 %v1106
    %v1108 = vpop.xlane.xlu0 %1107
    %v1109 = vsub.f32 %v1097, %v1105
    %v1110 = vsub.f32 %v1100, %v1108
    %v1111 = vmul.f32 %v1109, 1.442695
    %v1112 = vpow.pop %v1111
    %v1113 = vmul.f32 %v1110, 1.442695
    %v1114 = vpow.pop %v1113
    %v1115 = vsel %vm519, %v1112, 0.0
    %1116 = vadd.xlane.f32.xlu0 %v1115
    %v1117 = vpop.xlane.xlu0 %1116
    %v1118 = vsel %vm519, %v1114, 0.0
    %1119 = vadd.xlane.f32.xlu0 %v1118
    %v1120 = vpop.xlane.xlu0 %1119
    %v1121 = vrcp.pop %v1117
    %v1122 = vrcp.pop %v1120
    %v1123 = vmul.f32 %v1112, %v1121
    %v1124 = vmul.f32 %v1114, %v1122
    %v1125 = vpack.c.bf16 %v1124, %v1123
    %v1127 = vsel %vm519, %v1125, 0
    %1129 = vmatprep.subr.bf16.mxu0 0
    %1130 = vmatpush1.bf16.msra.mxu0 %v1049
    %1131 = vmatprep.subr.bf16.mxu0 0
    %1132 = vmatpush1.bf16.msra.mxu0 0
    %1133 = vmatprep.subr.bf16.mxu0 0
    %1134 = vmatpush1.bf16.msra.mxu0 0
    %1135 = vmatprep.subr.bf16.mxu0 0
    %1136 = vmatpush1.bf16.msra.mxu0 0
    %1137 = vmatprep.subr.bf16.mxu0 0
    %1138 = vmatpush1.bf16.msra.mxu0 0
    %1139 = vmatprep.subr.bf16.mxu0 0
    %1140 = vmatpush1.bf16.msra.mxu0 0
    %1141 = vmatprep.subr.bf16.mxu0 0
    %1142 = vmatpush1.bf16.msra.mxu0 0
    %1143 = vmatprep.subr.bf16.mxu0 0
    %1144 = vmatpush1.bf16.msra.mxu0 0
    %1145 = vmatprep.subr.bf16.mxu0 0
    %1146 = vmatpush1.bf16.msra.mxu0 0
    %1147 = vmatprep.subr.bf16.mxu0 0
    %1148 = vmatpush1.bf16.msra.mxu0 0
    %1149 = vmatprep.subr.bf16.mxu0 0
    %1150 = vmatpush1.bf16.msra.mxu0 0
    %1151 = vmatprep.subr.bf16.mxu0 0
    %1152 = vmatpush1.bf16.msra.mxu0 0
    %1153 = vmatprep.subr.bf16.mxu0 0
    %1154 = vmatpush1.bf16.msra.mxu0 0
    %1155 = vmatprep.subr.bf16.mxu0 0
    %1156 = vmatpush1.bf16.msra.mxu0 0
    %1157 = vmatprep.subr.bf16.mxu0 0
    %1158 = vmatpush1.bf16.msra.mxu0 0
    %1159 = vmatprep.subr.bf16.mxu0 0
    %1160 = vmatpush1.bf16.msra.mxu0 0
    %1161 = vmatprep.mubr.bf16.mxu0 0
    %1162 = vmatmul.mubr.bf16.gmra.mrb[0].mxu0 %v1127
    %v1163 = vpop.f32.mrb[0].mxu0
    %v1164 = vadd.f32 0.0, %v1163
    %v1165 = vpop.f32.mrb[0].mxu0
    %v1166 = vpop.f32.mrb[0].mxu0
    %v1167 = vadd.f32 0.0, %v1166
    %v1168 = vpop.f32.mrb[0].mxu0
    %1169 = vdwg.mxu0
    %v1170 = vpack.c.bf16 %v1167, %v1164
    %v1175 = vunpack.c.l.b16 %v1052
    %v1176 = vunpack.c.l.b16 %v1053
    %v1177 = vunpack.c.l.b16 %v1054
    %v1178 = vunpack.c.l.b16 %v1055
    %v1179 = vpack.c.b16 %v1176, %v1175
    %v1180 = vpack.c.b16 %v1178, %v1177
    %v1184 = vsel %vm471, %v1170, 0
    %1186 = vmatprep.subr.bf16.mxu0 0
    %1187 = vmatpush1.bf16.msra.mxu0 %v1179
    %1188 = vmatprep.subr.bf16.mxu0 0
    %1189 = vmatpush1.bf16.msra.mxu0 %v1180
    %1190 = vmatprep.subr.bf16.mxu0 0
    %1191 = vmatpush1.bf16.msra.mxu0 0
    %1192 = vmatprep.subr.bf16.mxu0 0
    %1193 = vmatpush1.bf16.msra.mxu0 0
    %1194 = vmatprep.subr.bf16.mxu0 0
    %1195 = vmatpush1.bf16.msra.mxu0 0
    %1196 = vmatprep.subr.bf16.mxu0 0
    %1197 = vmatpush1.bf16.msra.mxu0 0
    %1198 = vmatprep.subr.bf16.mxu0 0
    %1199 = vmatpush1.bf16.msra.mxu0 0
    %1200 = vmatprep.subr.bf16.mxu0 0
    %1201 = vmatpush1.bf16.msra.mxu0 0
    %1202 = vmatprep.subr.bf16.mxu0 0
    %1203 = vmatpush1.bf16.msra.mxu0 0
    %1204 = vmatprep.subr.bf16.mxu0 0
    %1205 = vmatpush1.bf16.msra.mxu0 0
    %1206 = vmatprep.subr.bf16.mxu0 0
    %1207 = vmatpush1.bf16.msra.mxu0 0
    %1208 = vmatprep.subr.bf16.mxu0 0
    %1209 = vmatpush1.bf16.msra.mxu0 0
    %1210 = vmatprep.subr.bf16.mxu0 0
    %1211 = vmatpush1.bf16.msra.mxu0 0
    %1212 = vmatprep.subr.bf16.mxu0 0
    %1213 = vmatpush1.bf16.msra.mxu0 0
    %1214 = vmatprep.subr.bf16.mxu0 0
    %1215 = vmatpush1.bf16.msra.mxu0 0
    %1216 = vmatprep.subr.bf16.mxu0 0
    %1217 = vmatpush1.bf16.msra.mxu0 0
    %1218 = vmatprep.mubr.bf16.mxu0 0
    %1219 = vmatmul.mubr.bf16.gmra.mrb[0].mxu0 %v1184
    %v1220 = vpop.f32.mrb[0].mxu0
    %v1221 = vadd.f32 0.0, %v1220
    %v1222 = vpop.f32.mrb[0].mxu0
    %v1223 = vpop.f32.mrb[0].mxu0
    %v1224 = vadd.f32 0.0, %v1223
    %v1225 = vpop.f32.mrb[0].mxu0
    %1226 = vdwg.mxu0
    %v1231 = vunpack.c.l.b16 %v467
    %v1232 = vunpack.c.l.b16 %v468
    %v1233 = vunpack.c.l.b16 %v469
    %v1234 = vunpack.c.l.b16 %v470
    %v1235 = vpack.c.b16 %v1232, %v1231
    %v1236 = vpack.c.b16 %v1234, %v1233
    %v1240 = vsel %vm471, %v587, 0
    %1242 = vmatprep.subr.bf16.mxu0 0
    %1243 = vmatpush1.bf16.msra.mxu0 %v1235
    %1244 = vmatprep.subr.bf16.mxu0 0
    %1245 = vmatpush1.bf16.msra.mxu0 %v1236
    %1246 = vmatprep.subr.bf16.mxu0 0
    %1247 = vmatpush1.bf16.msra.mxu0 0
    %1248 = vmatprep.subr.bf16.mxu0 0
    %1249 = vmatpush1.bf16.msra.mxu0 0
    %1250 = vmatprep.subr.bf16.mxu0 0
    %1251 = vmatpush1.bf16.msra.mxu0 0
    %1252 = vmatprep.subr.bf16.mxu0 0
    %1253 = vmatpush1.bf16.msra.mxu0 0
    %1254 = vmatprep.subr.bf16.mxu0 0
    %1255 = vmatpush1.bf16.msra.mxu0 0
    %1256 = vmatprep.subr.bf16.mxu0 0
    %1257 = vmatpush1.bf16.msra.mxu0 0
    %1258 = vmatprep.subr.bf16.mxu0 0
    %1259 = vmatpush1.bf16.msra.mxu0 0
    %1260 = vmatprep.subr.bf16.mxu0 0
    %1261 = vmatpush1.bf16.msra.mxu0 0
    %1262 = vmatprep.subr.bf16.mxu0 0
    %1263 = vmatpush1.bf16.msra.mxu0 0
    %1264 = vmatprep.subr.bf16.mxu0 0
    %1265 = vmatpush1.bf16.msra.mxu0 0
    %1266 = vmatprep.subr.bf16.mxu0 0
    %1267 = vmatpush1.bf16.msra.mxu0 0
    %1268 = vmatprep.subr.bf16.mxu0 0
    %1269 = vmatpush1.bf16.msra.mxu0 0
    %1270 = vmatprep.subr.bf16.mxu0 0
    %1271 = vmatpush1.bf16.msra.mxu0 0
    %1272 = vmatprep.subr.bf16.mxu0 0
    %1273 = vmatpush1.bf16.msra.mxu0 0
    %1274 = vmatprep.mubr.bf16.mxu0 0
    %1275 = vmatmul.mubr.bf16.gmra.mrb[0].mxu0 %v1240
    %v1276 = vpop.f32.mrb[0].mxu0
    %v1277 = vadd.f32 %v1221, %v1276
    %v1278 = vpop.f32.mrb[0].mxu0
    %v1279 = vpop.f32.mrb[0].mxu0
    %v1280 = vadd.f32 %v1224, %v1279
    %v1281 = vpop.f32.mrb[0].mxu0
    %1282 = vdwg.mxu0
    %v1284 = vsel %vm471, %v1046, 0
    %v1287 = vsel %vm471, %v1048, 0
    %1289 = vmatprep.subr.bf16.mxu0 0
    %1290 = vmatpush1.bf16.xpose.msra.mxu0 %v1287
    %1291 = vmatprep.subr.bf16.mxu0 0
    %1292 = vmatpush1.bf16.xpose.msra.mxu0 0
    %1293 = vmatprep.subr.bf16.mxu0 0
    %1294 = vmatpush1.bf16.xpose.msra.mxu0 0
    %1295 = vmatprep.subr.bf16.mxu0 0
    %1296 = vmatpush1.bf16.xpose.msra.mxu0 0
    %1297 = vmatprep.subr.bf16.mxu0 0
    %1298 = vmatpush1.bf16.xpose.msra.mxu0 0
    %1299 = vmatprep.subr.bf16.mxu0 0
    %1300 = vmatpush1.bf16.xpose.msra.mxu0 0
    %1301 = vmatprep.subr.bf16.mxu0 0
    %1302 = vmatpush1.bf16.xpose.msra.mxu0 0
    %1303 = vmatprep.subr.bf16.mxu0 0
    %1304 = vmatpush1.bf16.xpose.msra.mxu0 0
    %1305 = vmatprep.subr.bf16.mxu0 0
    %1306 = vmatpush1.bf16.xpose.msra.mxu0 0
    %1307 = vmatprep.subr.bf16.mxu0 0
    %1308 = vmatpush1.bf16.xpose.msra.mxu0 0
    %1309 = vmatprep.subr.bf16.mxu0 0
    %1310 = vmatpush1.bf16.xpose.msra.mxu0 0
    %1311 = vmatprep.subr.bf16.mxu0 0
    %1312 = vmatpush1.bf16.xpose.msra.mxu0 0
    %1313 = vmatprep.subr.bf16.mxu0 0
    %1314 = vmatpush1.bf16.xpose.msra.mxu0 0
    %1315 = vmatprep.subr.bf16.mxu0 0
    %1316 = vmatpush1.bf16.xpose.msra.mxu0 0
    %1317 = vmatprep.subr.bf16.mxu0 0
    %1318 = vmatpush1.bf16.xpose.msra.mxu0 0
    %1319 = vmatprep.subr.bf16.mxu0 0
    %1320 = vmatpush1.bf16.xpose.msra.mxu0 0
    %1321 = vmatprep.mubr.bf16.mxu0 0
    %1322 = vmatmul.mubr.bf16.gmra.mrb[0].mxu0 %v1284
    %v1323 = vpop.f32.mrb[0].mxu0
    %v1324 = vadd.f32 0.0, %v1323
    %v1325 = vpop.f32.mrb[0].mxu0
    %v1326 = vpop.f32.mrb[0].mxu0
    %v1327 = vadd.f32 0.0, %v1326
    %v1328 = vpop.f32.mrb[0].mxu0
    %1329 = vdwg.mxu0
    %v1330 = vsel %vm519, %v1324, -inf
    %1331 = vmax.xlane.f32.xlu0 %v1330
    %v1332 = vpop.xlane.xlu0 %1331
    %v1333 = vsel %vm519, %v1327, -inf
    %1334 = vmax.xlane.f32.xlu0 %v1333
    %v1335 = vpop.xlane.xlu0 %1334
    %v1336 = vsub.f32 %v1324, %v1332
    %v1337 = vsub.f32 %v1327, %v1335
    %v1338 = vmul.f32 %v1336, 1.442695
    %v1339 = vpow.pop %v1338
    %v1340 = vmul.f32 %v1337, 1.442695
    %v1341 = vpow.pop %v1340
    %v1342 = vsel %vm519, %v1339, 0.0
    %1343 = vadd.xlane.f32.xlu0 %v1342
    %v1344 = vpop.xlane.xlu0 %1343
    %v1345 = vsel %vm519, %v1341, 0.0
    %1346 = vadd.xlane.f32.xlu0 %v1345
    %v1347 = vpop.xlane.xlu0 %1346
    %v1348 = vrcp.pop %v1344
    %v1349 = vrcp.pop %v1347
    %v1350 = vmul.f32 %v1339, %v1348
    %v1351 = vmul.f32 %v1341, %v1349
    %v1352 = vpack.c.bf16 %v1351, %v1350
    %v1354 = vsel %vm519, %v1352, 0
    %1356 = vmatprep.subr.bf16.mxu0 0
    %1357 = vmatpush1.bf16.msra.mxu0 %v1050
    %1358 = vmatprep.subr.bf16.mxu0 0
    %1359 = vmatpush1.bf16.msra.mxu0 0
    %1360 = vmatprep.subr.bf16.mxu0 0
    %1361 = vmatpush1.bf16.msra.mxu0 0
    %1362 = vmatprep.subr.bf16.mxu0 0
    %1363 = vmatpush1.bf16.msra.mxu0 0
    %1364 = vmatprep.subr.bf16.mxu0 0
    %1365 = vmatpush1.bf16.msra.mxu0 0
    %1366 = vmatprep.subr.bf16.mxu0 0
    %1367 = vmatpush1.bf16.msra.mxu0 0
    %1368 = vmatprep.subr.bf16.mxu0 0
    %1369 = vmatpush1.bf16.msra.mxu0 0
    %1370 = vmatprep.subr.bf16.mxu0 0
    %1371 = vmatpush1.bf16.msra.mxu0 0
    %1372 = vmatprep.subr.bf16.mxu0 0
    %1373 = vmatpush1.bf16.msra.mxu0 0
    %1374 = vmatprep.subr.bf16.mxu0 0
    %1375 = vmatpush1.bf16.msra.mxu0 0
    %1376 = vmatprep.subr.bf16.mxu0 0
    %1377 = vmatpush1.bf16.msra.mxu0 0
    %1378 = vmatprep.subr.bf16.mxu0 0
    %1379 = vmatpush1.bf16.msra.mxu0 0
    %1380 = vmatprep.subr.bf16.mxu0 0
    %1381 = vmatpush1.bf16.msra.mxu0 0
    %1382 = vmatprep.subr.bf16.mxu0 0
    %1383 = vmatpush1.bf16.msra.mxu0 0
    %1384 = vmatprep.subr.bf16.mxu0 0
    %1385 = vmatpush1.bf16.msra.mxu0 0
    %1386 = vmatprep.subr.bf16.mxu0 0
    %1387 = vmatpush1.bf16.msra.mxu0 0
    %1388 = vmatprep.mubr.bf16.mxu0 0
    %1389 = vmatmul.mubr.bf16.gmra.mrb[0].mxu0 %v1354
    %v1390 = vpop.f32.mrb[0].mxu0
    %v1391 = vadd.f32 0.0, %v1390
    %v1392 = vpop.f32.mrb[0].mxu0
    %v1393 = vpop.f32.mrb[0].mxu0
    %v1394 = vadd.f32 0.0, %v1393
    %v1395 = vpop.f32.mrb[0].mxu0
    %1396 = vdwg.mxu0
    %v1397 = vpack.c.bf16 %v1394, %v1391
    %v1399 = vsel %vm471, %v1397, 0
    %1401 = vmatprep.subr.bf16.mxu0 0
    %1402 = vmatpush1.bf16.msra.mxu0 %v1179
    %1403 = vmatprep.subr.bf16.mxu0 0
    %1404 = vmatpush1.bf16.msra.mxu0 %v1180
    %1405 = vmatprep.subr.bf16.mxu0 0
    %1406 = vmatpush1.bf16.msra.mxu0 0
    %1407 = vmatprep.subr.bf16.mxu0 0
    %1408 = vmatpush1.bf16.msra.mxu0 0
    %1409 = vmatprep.subr.bf16.mxu0 0
    %1410 = vmatpush1.bf16.msra.mxu0 0
    %1411 = vmatprep.subr.bf16.mxu0 0
    %1412 = vmatpush1.bf16.msra.mxu0 0
    %1413 = vmatprep.subr.bf16.mxu0 0
    %1414 = vmatpush1.bf16.msra.mxu0 0
    %1415 = vmatprep.subr.bf16.mxu0 0
    %1416 = vmatpush1.bf16.msra.mxu0 0
    %1417 = vmatprep.subr.bf16.mxu0 0
    %1418 = vmatpush1.bf16.msra.mxu0 0
    %1419 = vmatprep.subr.bf16.mxu0 0
    %1420 = vmatpush1.bf16.msra.mxu0 0
    %1421 = vmatprep.subr.bf16.mxu0 0
    %1422 = vmatpush1.bf16.msra.mxu0 0
    %1423 = vmatprep.subr.bf16.mxu0 0
    %1424 = vmatpush1.bf16.msra.mxu0 0
    %1425 = vmatprep.subr.bf16.mxu0 0
    %1426 = vmatpush1.bf16.msra.mxu0 0
    %1427 = vmatprep.subr.bf16.mxu0 0
    %1428 = vmatpush1.bf16.msra.mxu0 0
    %1429 = vmatprep.subr.bf16.mxu0 0
    %1430 = vmatpush1.bf16.msra.mxu0 0
    %1431 = vmatprep.subr.bf16.mxu0 0
    %1432 = vmatpush1.bf16.msra.mxu0 0
    %1433 = vmatprep.mubr.bf16.mxu0 0
    %1434 = vmatmul.mubr.bf16.gmra.mrb[0].mxu0 %v1399
    %v1435 = vpop.f32.mrb[0].mxu0
    %v1436 = vadd.f32 0.0, %v1435
    %v1437 = vpop.f32.mrb[0].mxu0
    %v1438 = vpop.f32.mrb[0].mxu0
    %v1439 = vadd.f32 0.0, %v1438
    %v1440 = vpop.f32.mrb[0].mxu0
    %1441 = vdwg.mxu0
    %v1443 = vsel %vm471, %v702, 0
    %1445 = vmatprep.subr.bf16.mxu0 0
    %1446 = vmatpush1.bf16.msra.mxu0 %v1235
    %1447 = vmatprep.subr.bf16.mxu0 0
    %1448 = vmatpush1.bf16.msra.mxu0 %v1236
    %1449 = vmatprep.subr.bf16.mxu0 0
    %1450 = vmatpush1.bf16.msra.mxu0 0
    %1451 = vmatprep.subr.bf16.mxu0 0
    %1452 = vmatpush1.bf16.msra.mxu0 0
    %1453 = vmatprep.subr.bf16.mxu0 0
    %1454 = vmatpush1.bf16.msra.mxu0 0
    %1455 = vmatprep.subr.bf16.mxu0 0
    %1456 = vmatpush1.bf16.msra.mxu0 0
    %1457 = vmatprep.subr.bf16.mxu0 0
    %1458 = vmatpush1.bf16.msra.mxu0 0
    %1459 = vmatprep.subr.bf16.mxu0 0
    %1460 = vmatpush1.bf16.msra.mxu0 0
    %1461 = vmatprep.subr.bf16.mxu0 0
    %1462 = vmatpush1.bf16.msra.mxu0 0
    %1463 = vmatprep.subr.bf16.mxu0 0
    %1464 = vmatpush1.bf16.msra.mxu0 0
    %1465 = vmatprep.subr.bf16.mxu0 0
    %1466 = vmatpush1.bf16.msra.mxu0 0
    %1467 = vmatprep.subr.bf16.mxu0 0
    %1468 = vmatpush1.bf16.msra.mxu0 0
    %1469 = vmatprep.subr.bf16.mxu0 0
    %1470 = vmatpush1.bf16.msra.mxu0 0
    %1471 = vmatprep.subr.bf16.mxu0 0
    %1472 = vmatpush1.bf16.msra.mxu0 0
    %1473 = vmatprep.subr.bf16.mxu0 0
    %1474 = vmatpush1.bf16.msra.mxu0 0
    %1475 = vmatprep.subr.bf16.mxu0 0
    %1476 = vmatpush1.bf16.msra.mxu0 0
    %1477 = vmatprep.mubr.bf16.mxu0 0
    %1478 = vmatmul.mubr.bf16.gmra.mrb[0].mxu0 %v1443
    %v1479 = vpop.f32.mrb[0].mxu0
    %v1480 = vadd.f32 %v1436, %v1479
    %v1481 = vpop.f32.mrb[0].mxu0
    %v1482 = vpop.f32.mrb[0].mxu0
    %v1483 = vadd.f32 %v1439, %v1482
    %v1484 = vpop.f32.mrb[0].mxu0
    %1485 = vdwg.mxu0
    %s1486 = scalar_lea.vmem %s3, 128
    %v1487 = vld [vmem:[%s1486] sm:$0xf]
    %v1488 = vld [vmem:[%s1486 + $0x4] sm:$0xf]
    %v1489 = vld [vmem:[%s1486 + $0x8] sm:$0xf]
    %v1490 = vld [vmem:[%s1486 + $0xc] sm:$0xf]
    %v1491 = vld [vmem:[%s1486 + $0x10] sm:$0xf]
    %v1492 = vld [vmem:[%s1486 + $0x14] sm:$0xf]
    %v1493 = vld [vmem:[%s1486 + $0x18] sm:$0xf]
    %v1494 = vld [vmem:[%s1486 + $0x1c] sm:$0xf]
    %v1495 = vld [vmem:[%s1486 + $0x20] sm:$0xf]
    %v1496 = vld [vmem:[%s1486 + $0x24] sm:$0xf]
    %v1497 = vld [vmem:[%s1486 + $0x28] sm:$0xf]
    %v1498 = vld [vmem:[%s1486 + $0x2c] sm:$0xf]
    %v1499 = vld [vmem:[%s1486 + $0x30] sm:$0xf]
    %v1500 = vld [vmem:[%s1486 + $0x34] sm:$0xf]
    %v1501 = vld [vmem:[%s1486 + $0x38] sm:$0xf]
    %v1502 = vld [vmem:[%s1486 + $0x3c] sm:$0xf]
    %v1519 = vunpack.c.l.b16 %v1487
    %v1520 = vunpack.c.l.b16 %v1488
    %v1521 = vunpack.c.l.b16 %v1489
    %v1522 = vunpack.c.l.b16 %v1490
    %v1523 = vunpack.c.l.b16 %v1491
    %v1524 = vunpack.c.l.b16 %v1492
    %v1525 = vunpack.c.l.b16 %v1493
    %v1526 = vunpack.c.l.b16 %v1494
    %v1527 = vunpack.c.l.b16 %v1495
    %v1528 = vunpack.c.l.b16 %v1496
    %v1529 = vunpack.c.l.b16 %v1497
    %v1530 = vunpack.c.l.b16 %v1498
    %v1531 = vunpack.c.l.b16 %v1499
    %v1532 = vunpack.c.l.b16 %v1500
    %v1533 = vunpack.c.l.b16 %v1501
    %v1534 = vunpack.c.l.b16 %v1502
    %v1535 = vpack.c.b16 %v1520, %v1519
    %v1536 = vpack.c.b16 %v1522, %v1521
    %v1537 = vpack.c.b16 %v1524, %v1523
    %v1538 = vpack.c.b16 %v1526, %v1525
    %v1539 = vpack.c.b16 %v1528, %v1527
    %v1540 = vpack.c.b16 %v1530, %v1529
    %v1541 = vpack.c.b16 %v1532, %v1531
    %v1542 = vpack.c.b16 %v1534, %v1533
    %1551 = vmatprep.subr.bf16.mxu0 0
    %1552 = vmatpush1.bf16.msra.mxu0 %v1535
    %1553 = vmatprep.subr.bf16.mxu0 0
    %1554 = vmatpush1.bf16.msra.mxu0 %v1536
    %1555 = vmatprep.subr.bf16.mxu0 0
    %1556 = vmatpush1.bf16.msra.mxu0 %v1537
    %1557 = vmatprep.subr.bf16.mxu0 0
    %1558 = vmatpush1.bf16.msra.mxu0 %v1538
    %1559 = vmatprep.subr.bf16.mxu0 0
    %1560 = vmatpush1.bf16.msra.mxu0 %v1539
    %1561 = vmatprep.subr.bf16.mxu0 0
    %1562 = vmatpush1.bf16.msra.mxu0 %v1540
    %1563 = vmatprep.subr.bf16.mxu0 0
    %1564 = vmatpush1.bf16.msra.mxu0 %v1541
    %1565 = vmatprep.subr.bf16.mxu0 0
    %1566 = vmatpush1.bf16.msra.mxu0 %v1542
    %1567 = vmatprep.subr.bf16.mxu0 0
    %1568 = vmatpush1.bf16.msra.mxu0 0
    %1569 = vmatprep.subr.bf16.mxu0 0
    %1570 = vmatpush1.bf16.msra.mxu0 0
    %1571 = vmatprep.subr.bf16.mxu0 0
    %1572 = vmatpush1.bf16.msra.mxu0 0
    %1573 = vmatprep.subr.bf16.mxu0 0
    %1574 = vmatpush1.bf16.msra.mxu0 0
    %1575 = vmatprep.subr.bf16.mxu0 0
    %1576 = vmatpush1.bf16.msra.mxu0 0
    %1577 = vmatprep.subr.bf16.mxu0 0
    %1578 = vmatpush1.bf16.msra.mxu0 0
    %1579 = vmatprep.subr.bf16.mxu0 0
    %1580 = vmatpush1.bf16.msra.mxu0 0
    %1581 = vmatprep.subr.bf16.mxu0 0
    %1582 = vmatpush1.bf16.msra.mxu0 0
    %1583 = vmatprep.mubr.bf16.mxu0 0
    %1584 = vmatmul.mubr.bf16.gmra.mrb[0].mxu0 %v120
    %v1585 = vpop.f32.mrb[0].mxu0
    %v1586 = vadd.f32 0.0, %v1585
    %v1587 = vpop.f32.mrb[0].mxu0
    %v1588 = vpop.f32.mrb[0].mxu0
    %v1589 = vadd.f32 0.0, %v1588
    %v1590 = vpop.f32.mrb[0].mxu0
    %1591 = vmatprep.mubr.bf16.mxu0 0
    %1592 = vmatmul.mubr.bf16.gmra.mrb[0].mxu0 %v121
    %v1593 = vpop.f32.mrb[0].mxu0
    %v1594 = vadd.f32 0.0, %v1593
    %v1595 = vpop.f32.mrb[0].mxu0
    %v1596 = vpop.f32.mrb[0].mxu0
    %v1597 = vadd.f32 0.0, %v1596
    %v1598 = vpop.f32.mrb[0].mxu0
    %1599 = vdwg.mxu0
    %s1600 = scalar_lea.vmem %s4, 128
    %v1601 = vld [vmem:[%s1600] sm:$0xf]
    %v1602 = vld [vmem:[%s1600 + $0x4] sm:$0xf]
    %v1603 = vld [vmem:[%s1600 + $0x8] sm:$0xf]
    %v1604 = vld [vmem:[%s1600 + $0xc] sm:$0xf]
    %v1605 = vld [vmem:[%s1600 + $0x10] sm:$0xf]
    %v1606 = vld [vmem:[%s1600 + $0x14] sm:$0xf]
    %v1607 = vld [vmem:[%s1600 + $0x18] sm:$0xf]
    %v1608 = vld [vmem:[%s1600 + $0x1c] sm:$0xf]
    %v1609 = vld [vmem:[%s1600 + $0x20] sm:$0xf]
    %v1610 = vld [vmem:[%s1600 + $0x24] sm:$0xf]
    %v1611 = vld [vmem:[%s1600 + $0x28] sm:$0xf]
    %v1612 = vld [vmem:[%s1600 + $0x2c] sm:$0xf]
    %v1613 = vld [vmem:[%s1600 + $0x30] sm:$0xf]
    %v1614 = vld [vmem:[%s1600 + $0x34] sm:$0xf]
    %v1615 = vld [vmem:[%s1600 + $0x38] sm:$0xf]
    %v1616 = vld [vmem:[%s1600 + $0x3c] sm:$0xf]
    %v1633 = vunpack.c.l.b16 %v1601
    %v1634 = vunpack.c.l.b16 %v1602
    %v1635 = vunpack.c.l.b16 %v1603
    %v1636 = vunpack.c.l.b16 %v1604
    %v1637 = vunpack.c.l.b16 %v1605
    %v1638 = vunpack.c.l.b16 %v1606
    %v1639 = vunpack.c.l.b16 %v1607
    %v1640 = vunpack.c.l.b16 %v1608
    %v1641 = vunpack.c.l.b16 %v1609
    %v1642 = vunpack.c.l.b16 %v1610
    %v1643 = vunpack.c.l.b16 %v1611
    %v1644 = vunpack.c.l.b16 %v1612
    %v1645 = vunpack.c.l.b16 %v1613
    %v1646 = vunpack.c.l.b16 %v1614
    %v1647 = vunpack.c.l.b16 %v1615
    %v1648 = vunpack.c.l.b16 %v1616
    %v1649 = vpack.c.b16 %v1634, %v1633
    %v1650 = vpack.c.b16 %v1636, %v1635
    %v1651 = vpack.c.b16 %v1638, %v1637
    %v1652 = vpack.c.b16 %v1640, %v1639
    %v1653 = vpack.c.b16 %v1642, %v1641
    %v1654 = vpack.c.b16 %v1644, %v1643
    %v1655 = vpack.c.b16 %v1646, %v1645
    %v1656 = vpack.c.b16 %v1648, %v1647
    %1665 = vmatprep.subr.bf16.mxu0 0
    %1666 = vmatpush1.bf16.msra.mxu0 %v1649
    %1667 = vmatprep.subr.bf16.mxu0 0
    %1668 = vmatpush1.bf16.msra.mxu0 %v1650
    %1669 = vmatprep.subr.bf16.mxu0 0
    %1670 = vmatpush1.bf16.msra.mxu0 %v1651
    %1671 = vmatprep.subr.bf16.mxu0 0
    %1672 = vmatpush1.bf16.msra.mxu0 %v1652
    %1673 = vmatprep.subr.bf16.mxu0 0
    %1674 = vmatpush1.bf16.msra.mxu0 %v1653
    %1675 = vmatprep.subr.bf16.mxu0 0
    %1676 = vmatpush1.bf16.msra.mxu0 %v1654
    %1677 = vmatprep.subr.bf16.mxu0 0
    %1678 = vmatpush1.bf16.msra.mxu0 %v1655
    %1679 = vmatprep.subr.bf16.mxu0 0
    %1680 = vmatpush1.bf16.msra.mxu0 %v1656
    %1681 = vmatprep.subr.bf16.mxu0 0
    %1682 = vmatpush1.bf16.msra.mxu0 0
    %1683 = vmatprep.subr.bf16.mxu0 0
    %1684 = vmatpush1.bf16.msra.mxu0 0
    %1685 = vmatprep.subr.bf16.mxu0 0
    %1686 = vmatpush1.bf16.msra.mxu0 0
    %1687 = vmatprep.subr.bf16.mxu0 0
    %1688 = vmatpush1.bf16.msra.mxu0 0
    %1689 = vmatprep.subr.bf16.mxu0 0
    %1690 = vmatpush1.bf16.msra.mxu0 0
    %1691 = vmatprep.subr.bf16.mxu0 0
    %1692 = vmatpush1.bf16.msra.mxu0 0
    %1693 = vmatprep.subr.bf16.mxu0 0
    %1694 = vmatpush1.bf16.msra.mxu0 0
    %1695 = vmatprep.subr.bf16.mxu0 0
    %1696 = vmatpush1.bf16.msra.mxu0 0
    %1697 = vmatprep.mubr.bf16.mxu0 0
    %1698 = vmatmul.mubr.bf16.gmra.mrb[0].mxu0 %v120
    %v1699 = vpop.f32.mrb[0].mxu0
    %v1700 = vadd.f32 0.0, %v1699
    %v1701 = vpop.f32.mrb[0].mxu0
    %v1702 = vpop.f32.mrb[0].mxu0
    %v1703 = vadd.f32 0.0, %v1702
    %v1704 = vpop.f32.mrb[0].mxu0
    %1705 = vmatprep.mubr.bf16.mxu0 0
    %1706 = vmatmul.mubr.bf16.gmra.mrb[0].mxu0 %v121
    %v1707 = vpop.f32.mrb[0].mxu0
    %v1708 = vadd.f32 0.0, %v1707
    %v1709 = vpop.f32.mrb[0].mxu0
    %v1710 = vpop.f32.mrb[0].mxu0
    %v1711 = vadd.f32 0.0, %v1710
    %v1712 = vpop.f32.mrb[0].mxu0
    %1713 = vdwg.mxu0
    %s1714 = scalar_lea.vmem %s5, 128
    %v1715 = vld [vmem:[%s1714] sm:$0xf]
    %v1716 = vld [vmem:[%s1714 + $0x4] sm:$0xf]
    %v1717 = vld [vmem:[%s1714 + $0x8] sm:$0xf]
    %v1718 = vld [vmem:[%s1714 + $0xc] sm:$0xf]
    %v1719 = vld [vmem:[%s1714 + $0x10] sm:$0xf]
    %v1720 = vld [vmem:[%s1714 + $0x14] sm:$0xf]
    %v1721 = vld [vmem:[%s1714 + $0x18] sm:$0xf]
    %v1722 = vld [vmem:[%s1714 + $0x1c] sm:$0xf]
    %v1723 = vld [vmem:[%s1714 + $0x20] sm:$0xf]
    %v1724 = vld [vmem:[%s1714 + $0x24] sm:$0xf]
    %v1725 = vld [vmem:[%s1714 + $0x28] sm:$0xf]
    %v1726 = vld [vmem:[%s1714 + $0x2c] sm:$0xf]
    %v1727 = vld [vmem:[%s1714 + $0x30] sm:$0xf]
    %v1728 = vld [vmem:[%s1714 + $0x34] sm:$0xf]
    %v1729 = vld [vmem:[%s1714 + $0x38] sm:$0xf]
    %v1730 = vld [vmem:[%s1714 + $0x3c] sm:$0xf]
    %v1747 = vunpack.c.l.b16 %v1715
    %v1748 = vunpack.c.l.b16 %v1716
    %v1749 = vunpack.c.l.b16 %v1717
    %v1750 = vunpack.c.l.b16 %v1718
    %v1751 = vunpack.c.l.b16 %v1719
    %v1752 = vunpack.c.l.b16 %v1720
    %v1753 = vunpack.c.l.b16 %v1721
    %v1754 = vunpack.c.l.b16 %v1722
    %v1755 = vunpack.c.l.b16 %v1723
    %v1756 = vunpack.c.l.b16 %v1724
    %v1757 = vunpack.c.l.b16 %v1725
    %v1758 = vunpack.c.l.b16 %v1726
    %v1759 = vunpack.c.l.b16 %v1727
    %v1760 = vunpack.c.l.b16 %v1728
    %v1761 = vunpack.c.l.b16 %v1729
    %v1762 = vunpack.c.l.b16 %v1730
    %v1763 = vpack.c.b16 %v1748, %v1747
    %v1764 = vpack.c.b16 %v1750, %v1749
    %v1765 = vpack.c.b16 %v1752, %v1751
    %v1766 = vpack.c.b16 %v1754, %v1753
    %v1767 = vpack.c.b16 %v1756, %v1755
    %v1768 = vpack.c.b16 %v1758, %v1757
    %v1769 = vpack.c.b16 %v1760, %v1759
    %v1770 = vpack.c.b16 %v1762, %v1761
    %1779 = vmatprep.subr.bf16.mxu0 0
    %1780 = vmatpush1.bf16.msra.mxu0 %v1763
    %1781 = vmatprep.subr.bf16.mxu0 0
    %1782 = vmatpush1.bf16.msra.mxu0 %v1764
    %1783 = vmatprep.subr.bf16.mxu0 0
    %1784 = vmatpush1.bf16.msra.mxu0 %v1765
    %1785 = vmatprep.subr.bf16.mxu0 0
    %1786 = vmatpush1.bf16.msra.mxu0 %v1766
    %1787 = vmatprep.subr.bf16.mxu0 0
    %1788 = vmatpush1.bf16.msra.mxu0 %v1767
    %1789 = vmatprep.subr.bf16.mxu0 0
    %1790 = vmatpush1.bf16.msra.mxu0 %v1768
    %1791 = vmatprep.subr.bf16.mxu0 0
    %1792 = vmatpush1.bf16.msra.mxu0 %v1769
    %1793 = vmatprep.subr.bf16.mxu0 0
    %1794 = vmatpush1.bf16.msra.mxu0 %v1770
    %1795 = vmatprep.subr.bf16.mxu0 0
    %1796 = vmatpush1.bf16.msra.mxu0 0
    %1797 = vmatprep.subr.bf16.mxu0 0
    %1798 = vmatpush1.bf16.msra.mxu0 0
    %1799 = vmatprep.subr.bf16.mxu0 0
    %1800 = vmatpush1.bf16.msra.mxu0 0
    %1801 = vmatprep.subr.bf16.mxu0 0
    %1802 = vmatpush1.bf16.msra.mxu0 0
    %1803 = vmatprep.subr.bf16.mxu0 0
    %1804 = vmatpush1.bf16.msra.mxu0 0
    %1805 = vmatprep.subr.bf16.mxu0 0
    %1806 = vmatpush1.bf16.msra.mxu0 0
    %1807 = vmatprep.subr.bf16.mxu0 0
    %1808 = vmatpush1.bf16.msra.mxu0 0
    %1809 = vmatprep.subr.bf16.mxu0 0
    %1810 = vmatpush1.bf16.msra.mxu0 0
    %1811 = vmatprep.mubr.bf16.mxu0 0
    %1812 = vmatmul.mubr.bf16.gmra.mrb[0].mxu0 %v120
    %v1813 = vpop.f32.mrb[0].mxu0
    %v1814 = vadd.f32 0.0, %v1813
    %v1815 = vpop.f32.mrb[0].mxu0
    %v1816 = vpop.f32.mrb[0].mxu0
    %v1817 = vadd.f32 0.0, %v1816
    %v1818 = vpop.f32.mrb[0].mxu0
    %1819 = vmatprep.mubr.bf16.mxu0 0
    %1820 = vmatmul.mubr.bf16.gmra.mrb[0].mxu0 %v121
    %v1821 = vpop.f32.mrb[0].mxu0
    %v1822 = vadd.f32 0.0, %v1821
    %v1823 = vpop.f32.mrb[0].mxu0
    %v1824 = vpop.f32.mrb[0].mxu0
    %v1825 = vadd.f32 0.0, %v1824
    %v1826 = vpop.f32.mrb[0].mxu0
    %1827 = vdwg.mxu0
    %v1828 = vpack.c.bf16 %v1589, %v1586
    %v1829 = vpack.c.bf16 %v1597, %v1594
    %v1830 = vpack.c.bf16 %v1703, %v1700
    %v1831 = vpack.c.bf16 %v1711, %v1708
    %v1832 = vpack.c.bf16 %v1817, %v1814
    %v1833 = vpack.c.bf16 %v1825, %v1822
    %s1834 = scalar_lea.vmem %s6, 32
    %v1835 = vld [vmem:[%s1834] sm:$0xf]
    %v1836 = vld [vmem:[%s1834 + $0x4] sm:$0xf]
    %v1837 = vld [vmem:[%s1834 + $0x8] sm:$0xf]
    %v1838 = vld [vmem:[%s1834 + $0xc] sm:$0xf]
    %v1840 = vsel %vm471, %v1828, 0
    %v1843 = vsel %vm471, %v1830, 0
    %1845 = vmatprep.subr.bf16.mxu0 0
    %1846 = vmatpush1.bf16.xpose.msra.mxu0 %v1843
    %1847 = vmatprep.subr.bf16.mxu0 0
    %1848 = vmatpush1.bf16.xpose.msra.mxu0 0
    %1849 = vmatprep.subr.bf16.mxu0 0
    %1850 = vmatpush1.bf16.xpose.msra.mxu0 0
    %1851 = vmatprep.subr.bf16.mxu0 0
    %1852 = vmatpush1.bf16.xpose.msra.mxu0 0
    %1853 = vmatprep.subr.bf16.mxu0 0
    %1854 = vmatpush1.bf16.xpose.msra.mxu0 0
    %1855 = vmatprep.subr.bf16.mxu0 0
    %1856 = vmatpush1.bf16.xpose.msra.mxu0 0
    %1857 = vmatprep.subr.bf16.mxu0 0
    %1858 = vmatpush1.bf16.xpose.msra.mxu0 0
    %1859 = vmatprep.subr.bf16.mxu0 0
    %1860 = vmatpush1.bf16.xpose.msra.mxu0 0
    %1861 = vmatprep.subr.bf16.mxu0 0
    %1862 = vmatpush1.bf16.xpose.msra.mxu0 0
    %1863 = vmatprep.subr.bf16.mxu0 0
    %1864 = vmatpush1.bf16.xpose.msra.mxu0 0
    %1865 = vmatprep.subr.bf16.mxu0 0
    %1866 = vmatpush1.bf16.xpose.msra.mxu0 0
    %1867 = vmatprep.subr.bf16.mxu0 0
    %1868 = vmatpush1.bf16.xpose.msra.mxu0 0
    %1869 = vmatprep.subr.bf16.mxu0 0
    %1870 = vmatpush1.bf16.xpose.msra.mxu0 0
    %1871 = vmatprep.subr.bf16.mxu0 0
    %1872 = vmatpush1.bf16.xpose.msra.mxu0 0
    %1873 = vmatprep.subr.bf16.mxu0 0
    %1874 = vmatpush1.bf16.xpose.msra.mxu0 0
    %1875 = vmatprep.subr.bf16.mxu0 0
    %1876 = vmatpush1.bf16.xpose.msra.mxu0 0
    %1877 = vmatprep.mubr.bf16.mxu0 0
    %1878 = vmatmul.mubr.bf16.gmra.mrb[0].mxu0 %v1840
    %v1879 = vpop.f32.mrb[0].mxu0
    %v1880 = vadd.f32 0.0, %v1879
    %v1881 = vpop.f32.mrb[0].mxu0
    %v1882 = vpop.f32.mrb[0].mxu0
    %v1883 = vadd.f32 0.0, %v1882
    %v1884 = vpop.f32.mrb[0].mxu0
    %1885 = vdwg.mxu0
    %v1886 = vsel %vm519, %v1880, -inf
    %1887 = vmax.xlane.f32.xlu0 %v1886
    %v1888 = vpop.xlane.xlu0 %1887
    %v1889 = vsel %vm519, %v1883, -inf
    %1890 = vmax.xlane.f32.xlu0 %v1889
    %v1891 = vpop.xlane.xlu0 %1890
    %v1892 = vsub.f32 %v1880, %v1888
    %v1893 = vsub.f32 %v1883, %v1891
    %v1894 = vmul.f32 %v1892, 1.442695
    %v1895 = vpow.pop %v1894
    %v1896 = vmul.f32 %v1893, 1.442695
    %v1897 = vpow.pop %v1896
    %v1898 = vsel %vm519, %v1895, 0.0
    %1899 = vadd.xlane.f32.xlu0 %v1898
    %v1900 = vpop.xlane.xlu0 %1899
    %v1901 = vsel %vm519, %v1897, 0.0
    %1902 = vadd.xlane.f32.xlu0 %v1901
    %v1903 = vpop.xlane.xlu0 %1902
    %v1904 = vrcp.pop %v1900
    %v1905 = vrcp.pop %v1903
    %v1906 = vmul.f32 %v1895, %v1904
    %v1907 = vmul.f32 %v1897, %v1905
    %v1908 = vpack.c.bf16 %v1907, %v1906
    %v1910 = vsel %vm519, %v1908, 0
    %1912 = vmatprep.subr.bf16.mxu0 0
    %1913 = vmatpush1.bf16.msra.mxu0 %v1832
    %1914 = vmatprep.subr.bf16.mxu0 0
    %1915 = vmatpush1.bf16.msra.mxu0 0
    %1916 = vmatprep.subr.bf16.mxu0 0
    %1917 = vmatpush1.bf16.msra.mxu0 0
    %1918 = vmatprep.subr.bf16.mxu0 0
    %1919 = vmatpush1.bf16.msra.mxu0 0
    %1920 = vmatprep.subr.bf16.mxu0 0
    %1921 = vmatpush1.bf16.msra.mxu0 0
    %1922 = vmatprep.subr.bf16.mxu0 0
    %1923 = vmatpush1.bf16.msra.mxu0 0
    %1924 = vmatprep.subr.bf16.mxu0 0
    %1925 = vmatpush1.bf16.msra.mxu0 0
    %1926 = vmatprep.subr.bf16.mxu0 0
    %1927 = vmatpush1.bf16.msra.mxu0 0
    %1928 = vmatprep.subr.bf16.mxu0 0
    %1929 = vmatpush1.bf16.msra.mxu0 0
    %1930 = vmatprep.subr.bf16.mxu0 0
    %1931 = vmatpush1.bf16.msra.mxu0 0
    %1932 = vmatprep.subr.bf16.mxu0 0
    %1933 = vmatpush1.bf16.msra.mxu0 0
    %1934 = vmatprep.subr.bf16.mxu0 0
    %1935 = vmatpush1.bf16.msra.mxu0 0
    %1936 = vmatprep.subr.bf16.mxu0 0
    %1937 = vmatpush1.bf16.msra.mxu0 0
    %1938 = vmatprep.subr.bf16.mxu0 0
    %1939 = vmatpush1.bf16.msra.mxu0 0
    %1940 = vmatprep.subr.bf16.mxu0 0
    %1941 = vmatpush1.bf16.msra.mxu0 0
    %1942 = vmatprep.subr.bf16.mxu0 0
    %1943 = vmatpush1.bf16.msra.mxu0 0
    %1944 = vmatprep.mubr.bf16.mxu0 0
    %1945 = vmatmul.mubr.bf16.gmra.mrb[0].mxu0 %v1910
    %v1946 = vpop.f32.mrb[0].mxu0
    %v1947 = vadd.f32 0.0, %v1946
    %v1948 = vpop.f32.mrb[0].mxu0
    %v1949 = vpop.f32.mrb[0].mxu0
    %v1950 = vadd.f32 0.0, %v1949
    %v1951 = vpop.f32.mrb[0].mxu0
    %1952 = vdwg.mxu0
    %v1953 = vpack.c.bf16 %v1950, %v1947
    %v1958 = vunpack.c.l.b16 %v1835
    %v1959 = vunpack.c.l.b16 %v1836
    %v1960 = vunpack.c.l.b16 %v1837
    %v1961 = vunpack.c.l.b16 %v1838
    %v1962 = vpack.c.b16 %v1959, %v1958
    %v1963 = vpack.c.b16 %v1961, %v1960
    %v1967 = vsel %vm471, %v1953, 0
    %1969 = vmatprep.subr.bf16.mxu0 0
    %1970 = vmatpush1.bf16.msra.mxu0 %v1962
    %1971 = vmatprep.subr.bf16.mxu0 0
    %1972 = vmatpush1.bf16.msra.mxu0 %v1963
    %1973 = vmatprep.subr.bf16.mxu0 0
    %1974 = vmatpush1.bf16.msra.mxu0 0
    %1975 = vmatprep.subr.bf16.mxu0 0
    %1976 = vmatpush1.bf16.msra.mxu0 0
    %1977 = vmatprep.subr.bf16.mxu0 0
    %1978 = vmatpush1.bf16.msra.mxu0 0
    %1979 = vmatprep.subr.bf16.mxu0 0
    %1980 = vmatpush1.bf16.msra.mxu0 0
    %1981 = vmatprep.subr.bf16.mxu0 0
    %1982 = vmatpush1.bf16.msra.mxu0 0
    %1983 = vmatprep.subr.bf16.mxu0 0
    %1984 = vmatpush1.bf16.msra.mxu0 0
    %1985 = vmatprep.subr.bf16.mxu0 0
    %1986 = vmatpush1.bf16.msra.mxu0 0
    %1987 = vmatprep.subr.bf16.mxu0 0
    %1988 = vmatpush1.bf16.msra.mxu0 0
    %1989 = vmatprep.subr.bf16.mxu0 0
    %1990 = vmatpush1.bf16.msra.mxu0 0
    %1991 = vmatprep.subr.bf16.mxu0 0
    %1992 = vmatpush1.bf16.msra.mxu0 0
    %1993 = vmatprep.subr.bf16.mxu0 0
    %1994 = vmatpush1.bf16.msra.mxu0 0
    %1995 = vmatprep.subr.bf16.mxu0 0
    %1996 = vmatpush1.bf16.msra.mxu0 0
    %1997 = vmatprep.subr.bf16.mxu0 0
    %1998 = vmatpush1.bf16.msra.mxu0 0
    %1999 = vmatprep.subr.bf16.mxu0 0
    %2000 = vmatpush1.bf16.msra.mxu0 0
    %2001 = vmatprep.mubr.bf16.mxu0 0
    %2002 = vmatmul.mubr.bf16.gmra.mrb[0].mxu0 %v1967
    %v2003 = vpop.f32.mrb[0].mxu0
    %v2004 = vadd.f32 0.0, %v2003
    %v2005 = vpop.f32.mrb[0].mxu0
    %v2006 = vpop.f32.mrb[0].mxu0
    %v2007 = vadd.f32 0.0, %v2006
    %v2008 = vpop.f32.mrb[0].mxu0
    %2009 = vdwg.mxu0
    %v2010 = vadd.f32 %v1277, %v2004
    %v2011 = vadd.f32 %v1280, %v2007
    %v2013 = vsel %vm471, %v1829, 0
    %v2016 = vsel %vm471, %v1831, 0
    %2018 = vmatprep.subr.bf16.mxu0 0
    %2019 = vmatpush1.bf16.xpose.msra.mxu0 %v2016
    %2020 = vmatprep.subr.bf16.mxu0 0
    %2021 = vmatpush1.bf16.xpose.msra.mxu0 0
    %2022 = vmatprep.subr.bf16.mxu0 0
    %2023 = vmatpush1.bf16.xpose.msra.mxu0 0
    %2024 = vmatprep.subr.bf16.mxu0 0
    %2025 = vmatpush1.bf16.xpose.msra.mxu0 0
    %2026 = vmatprep.subr.bf16.mxu0 0
    %2027 = vmatpush1.bf16.xpose.msra.mxu0 0
    %2028 = vmatprep.subr.bf16.mxu0 0
    %2029 = vmatpush1.bf16.xpose.msra.mxu0 0
    %2030 = vmatprep.subr.bf16.mxu0 0
    %2031 = vmatpush1.bf16.xpose.msra.mxu0 0
    %2032 = vmatprep.subr.bf16.mxu0 0
    %2033 = vmatpush1.bf16.xpose.msra.mxu0 0
    %2034 = vmatprep.subr.bf16.mxu0 0
    %2035 = vmatpush1.bf16.xpose.msra.mxu0 0
    %2036 = vmatprep.subr.bf16.mxu0 0
    %2037 = vmatpush1.bf16.xpose.msra.mxu0 0
    %2038 = vmatprep.subr.bf16.mxu0 0
    %2039 = vmatpush1.bf16.xpose.msra.mxu0 0
    %2040 = vmatprep.subr.bf16.mxu0 0
    %2041 = vmatpush1.bf16.xpose.msra.mxu0 0
    %2042 = vmatprep.subr.bf16.mxu0 0
    %2043 = vmatpush1.bf16.xpose.msra.mxu0 0
    %2044 = vmatprep.subr.bf16.mxu0 0
    %2045 = vmatpush1.bf16.xpose.msra.mxu0 0
    %2046 = vmatprep.subr.bf16.mxu0 0
    %2047 = vmatpush1.bf16.xpose.msra.mxu0 0
    %2048 = vmatprep.subr.bf16.mxu0 0
    %2049 = vmatpush1.bf16.xpose.msra.mxu0 0
    %2050 = vmatprep.mubr.bf16.mxu0 0
    %2051 = vmatmul.mubr.bf16.gmra.mrb[0].mxu0 %v2013
    %v2052 = vpop.f32.mrb[0].mxu0
    %v2053 = vadd.f32 0.0, %v2052
    %v2054 = vpop.f32.mrb[0].mxu0
    %v2055 = vpop.f32.mrb[0].mxu0
    %v2056 = vadd.f32 0.0, %v2055
    %v2057 = vpop.f32.mrb[0].mxu0
    %2058 = vdwg.mxu0
    %v2059 = vsel %vm519, %v2053, -inf
    %2060 = vmax.xlane.f32.xlu0 %v2059
    %v2061 = vpop.xlane.xlu0 %2060
    %v2062 = vsel %vm519, %v2056, -inf
    %2063 = vmax.xlane.f32.xlu0 %v2062
    %v2064 = vpop.xlane.xlu0 %2063
    %v2065 = vsub.f32 %v2053, %v2061
    %v2066 = vsub.f32 %v2056, %v2064
    %v2067 = vmul.f32 %v2065, 1.442695
    %v2068 = vpow.pop %v2067
    %v2069 = vmul.f32 %v2066, 1.442695
    %v2070 = vpow.pop %v2069
    %v2071 = vsel %vm519, %v2068, 0.0
    %2072 = vadd.xlane.f32.xlu0 %v2071
    %v2073 = vpop.xlane.xlu0 %2072
    %v2074 = vsel %vm519, %v2070, 0.0
    %2075 = vadd.xlane.f32.xlu0 %v2074
    %v2076 = vpop.xlane.xlu0 %2075
    %v2077 = vrcp.pop %v2073
    %v2078 = vrcp.pop %v2076
    %v2079 = vmul.f32 %v2068, %v2077
    %v2080 = vmul.f32 %v2070, %v2078
    %v2081 = vpack.c.bf16 %v2080, %v2079
    %v2083 = vsel %vm519, %v2081, 0
    %2085 = vmatprep.subr.bf16.mxu0 0
    %2086 = vmatpush1.bf16.msra.mxu0 %v1833
    %2087 = vmatprep.subr.bf16.mxu0 0
    %2088 = vmatpush1.bf16.msra.mxu0 0
    %2089 = vmatprep.subr.bf16.mxu0 0
    %2090 = vmatpush1.bf16.msra.mxu0 0
    %2091 = vmatprep.subr.bf16.mxu0 0
    %2092 = vmatpush1.bf16.msra.mxu0 0
    %2093 = vmatprep.subr.bf16.mxu0 0
    %2094 = vmatpush1.bf16.msra.mxu0 0
    %2095 = vmatprep.subr.bf16.mxu0 0
    %2096 = vmatpush1.bf16.msra.mxu0 0
    %2097 = vmatprep.subr.bf16.mxu0 0
    %2098 = vmatpush1.bf16.msra.mxu0 0
    %2099 = vmatprep.subr.bf16.mxu0 0
    %2100 = vmatpush1.bf16.msra.mxu0 0
    %2101 = vmatprep.subr.bf16.mxu0 0
    %2102 = vmatpush1.bf16.msra.mxu0 0
    %2103 = vmatprep.subr.bf16.mxu0 0
    %2104 = vmatpush1.bf16.msra.mxu0 0
    %2105 = vmatprep.subr.bf16.mxu0 0
    %2106 = vmatpush1.bf16.msra.mxu0 0
    %2107 = vmatprep.subr.bf16.mxu0 0
    %2108 = vmatpush1.bf16.msra.mxu0 0
    %2109 = vmatprep.subr.bf16.mxu0 0
    %2110 = vmatpush1.bf16.msra.mxu0 0
    %2111 = vmatprep.subr.bf16.mxu0 0
    %2112 = vmatpush1.bf16.msra.mxu0 0
    %2113 = vmatprep.subr.bf16.mxu0 0
    %2114 = vmatpush1.bf16.msra.mxu0 0
    %2115 = vmatprep.subr.bf16.mxu0 0
    %2116 = vmatpush1.bf16.msra.mxu0 0
    %2117 = vmatprep.mubr.bf16.mxu0 0
    %2118 = vmatmul.mubr.bf16.gmra.mrb[0].mxu0 %v2083
    %v2119 = vpop.f32.mrb[0].mxu0
    %v2120 = vadd.f32 0.0, %v2119
    %v2121 = vpop.f32.mrb[0].mxu0
    %v2122 = vpop.f32.mrb[0].mxu0
    %v2123 = vadd.f32 0.0, %v2122
    %v2124 = vpop.f32.mrb[0].mxu0
    %2125 = vdwg.mxu0
    %v2126 = vpack.c.bf16 %v2123, %v2120
    %v2128 = vsel %vm471, %v2126, 0
    %2130 = vmatprep.subr.bf16.mxu0 0
    %2131 = vmatpush1.bf16.msra.mxu0 %v1962
    %2132 = vmatprep.subr.bf16.mxu0 0
    %2133 = vmatpush1.bf16.msra.mxu0 %v1963
    %2134 = vmatprep.subr.bf16.mxu0 0
    %2135 = vmatpush1.bf16.msra.mxu0 0
    %2136 = vmatprep.subr.bf16.mxu0 0
    %2137 = vmatpush1.bf16.msra.mxu0 0
    %2138 = vmatprep.subr.bf16.mxu0 0
    %2139 = vmatpush1.bf16.msra.mxu0 0
    %2140 = vmatprep.subr.bf16.mxu0 0
    %2141 = vmatpush1.bf16.msra.mxu0 0
    %2142 = vmatprep.subr.bf16.mxu0 0
    %2143 = vmatpush1.bf16.msra.mxu0 0
    %2144 = vmatprep.subr.bf16.mxu0 0
    %2145 = vmatpush1.bf16.msra.mxu0 0
    %2146 = vmatprep.subr.bf16.mxu0 0
    %2147 = vmatpush1.bf16.msra.mxu0 0
    %2148 = vmatprep.subr.bf16.mxu0 0
    %2149 = vmatpush1.bf16.msra.mxu0 0
    %2150 = vmatprep.subr.bf16.mxu0 0
    %2151 = vmatpush1.bf16.msra.mxu0 0
    %2152 = vmatprep.subr.bf16.mxu0 0
    %2153 = vmatpush1.bf16.msra.mxu0 0
    %2154 = vmatprep.subr.bf16.mxu0 0
    %2155 = vmatpush1.bf16.msra.mxu0 0
    %2156 = vmatprep.subr.bf16.mxu0 0
    %2157 = vmatpush1.bf16.msra.mxu0 0
    %2158 = vmatprep.subr.bf16.mxu0 0
    %2159 = vmatpush1.bf16.msra.mxu0 0
    %2160 = vmatprep.subr.bf16.mxu0 0
    %2161 = vmatpush1.bf16.msra.mxu0 0
    %2162 = vmatprep.mubr.bf16.mxu0 0
    %2163 = vmatmul.mubr.bf16.gmra.mrb[0].mxu0 %v2128
    %v2164 = vpop.f32.mrb[0].mxu0
    %v2165 = vadd.f32 0.0, %v2164
    %v2166 = vpop.f32.mrb[0].mxu0
    %v2167 = vpop.f32.mrb[0].mxu0
    %v2168 = vadd.f32 0.0, %v2167
    %v2169 = vpop.f32.mrb[0].mxu0
    %2170 = vdwg.mxu0
    %v2171 = vadd.f32 %v1480, %v2165
    %v2172 = vadd.f32 %v1483, %v2168
    %s2173 = scalar_lea.vmem %s3, 192
    %v2174 = vld [vmem:[%s2173] sm:$0xf]
    %v2175 = vld [vmem:[%s2173 + $0x4] sm:$0xf]
    %v2176 = vld [vmem:[%s2173 + $0x8] sm:$0xf]
    %v2177 = vld [vmem:[%s2173 + $0xc] sm:$0xf]
    %v2178 = vld [vmem:[%s2173 + $0x10] sm:$0xf]
    %v2179 = vld [vmem:[%s2173 + $0x14] sm:$0xf]
    %v2180 = vld [vmem:[%s2173 + $0x18] sm:$0xf]
    %v2181 = vld [vmem:[%s2173 + $0x1c] sm:$0xf]
    %v2182 = vld [vmem:[%s2173 + $0x20] sm:$0xf]
    %v2183 = vld [vmem:[%s2173 + $0x24] sm:$0xf]
    %v2184 = vld [vmem:[%s2173 + $0x28] sm:$0xf]
    %v2185 = vld [vmem:[%s2173 + $0x2c] sm:$0xf]
    %v2186 = vld [vmem:[%s2173 + $0x30] sm:$0xf]
    %v2187 = vld [vmem:[%s2173 + $0x34] sm:$0xf]
    %v2188 = vld [vmem:[%s2173 + $0x38] sm:$0xf]
    %v2189 = vld [vmem:[%s2173 + $0x3c] sm:$0xf]
    %v2206 = vunpack.c.l.b16 %v2174
    %v2207 = vunpack.c.l.b16 %v2175
    %v2208 = vunpack.c.l.b16 %v2176
    %v2209 = vunpack.c.l.b16 %v2177
    %v2210 = vunpack.c.l.b16 %v2178
    %v2211 = vunpack.c.l.b16 %v2179
    %v2212 = vunpack.c.l.b16 %v2180
    %v2213 = vunpack.c.l.b16 %v2181
    %v2214 = vunpack.c.l.b16 %v2182
    %v2215 = vunpack.c.l.b16 %v2183
    %v2216 = vunpack.c.l.b16 %v2184
    %v2217 = vunpack.c.l.b16 %v2185
    %v2218 = vunpack.c.l.b16 %v2186
    %v2219 = vunpack.c.l.b16 %v2187
    %v2220 = vunpack.c.l.b16 %v2188
    %v2221 = vunpack.c.l.b16 %v2189
    %v2222 = vpack.c.b16 %v2207, %v2206
    %v2223 = vpack.c.b16 %v2209, %v2208
    %v2224 = vpack.c.b16 %v2211, %v2210
    %v2225 = vpack.c.b16 %v2213, %v2212
    %v2226 = vpack.c.b16 %v2215, %v2214
    %v2227 = vpack.c.b16 %v2217, %v2216
    %v2228 = vpack.c.b16 %v2219, %v2218
    %v2229 = vpack.c.b16 %v2221, %v2220
    %2238 = vmatprep.subr.bf16.mxu0 0
    %2239 = vmatpush1.bf16.msra.mxu0 %v2222
    %2240 = vmatprep.subr.bf16.mxu0 0
    %2241 = vmatpush1.bf16.msra.mxu0 %v2223
    %2242 = vmatprep.subr.bf16.mxu0 0
    %2243 = vmatpush1.bf16.msra.mxu0 %v2224
    %2244 = vmatprep.subr.bf16.mxu0 0
    %2245 = vmatpush1.bf16.msra.mxu0 %v2225
    %2246 = vmatprep.subr.bf16.mxu0 0
    %2247 = vmatpush1.bf16.msra.mxu0 %v2226
    %2248 = vmatprep.subr.bf16.mxu0 0
    %2249 = vmatpush1.bf16.msra.mxu0 %v2227
    %2250 = vmatprep.subr.bf16.mxu0 0
    %2251 = vmatpush1.bf16.msra.mxu0 %v2228
    %2252 = vmatprep.subr.bf16.mxu0 0
    %2253 = vmatpush1.bf16.msra.mxu0 %v2229
    %2254 = vmatprep.subr.bf16.mxu0 0
    %2255 = vmatpush1.bf16.msra.mxu0 0
    %2256 = vmatprep.subr.bf16.mxu0 0
    %2257 = vmatpush1.bf16.msra.mxu0 0
    %2258 = vmatprep.subr.bf16.mxu0 0
    %2259 = vmatpush1.bf16.msra.mxu0 0
    %2260 = vmatprep.subr.bf16.mxu0 0
    %2261 = vmatpush1.bf16.msra.mxu0 0
    %2262 = vmatprep.subr.bf16.mxu0 0
    %2263 = vmatpush1.bf16.msra.mxu0 0
    %2264 = vmatprep.subr.bf16.mxu0 0
    %2265 = vmatpush1.bf16.msra.mxu0 0
    %2266 = vmatprep.subr.bf16.mxu0 0
    %2267 = vmatpush1.bf16.msra.mxu0 0
    %2268 = vmatprep.subr.bf16.mxu0 0
    %2269 = vmatpush1.bf16.msra.mxu0 0
    %2270 = vmatprep.mubr.bf16.mxu0 0
    %2271 = vmatmul.mubr.bf16.gmra.mrb[0].mxu0 %v120
    %v2272 = vpop.f32.mrb[0].mxu0
    %v2273 = vadd.f32 0.0, %v2272
    %v2274 = vpop.f32.mrb[0].mxu0
    %v2275 = vpop.f32.mrb[0].mxu0
    %v2276 = vadd.f32 0.0, %v2275
    %v2277 = vpop.f32.mrb[0].mxu0
    %2278 = vmatprep.mubr.bf16.mxu0 0
    %2279 = vmatmul.mubr.bf16.gmra.mrb[0].mxu0 %v121
    %v2280 = vpop.f32.mrb[0].mxu0
    %v2281 = vadd.f32 0.0, %v2280
    %v2282 = vpop.f32.mrb[0].mxu0
    %v2283 = vpop.f32.mrb[0].mxu0
    %v2284 = vadd.f32 0.0, %v2283
    %v2285 = vpop.f32.mrb[0].mxu0
    %2286 = vdwg.mxu0
    %s2287 = scalar_lea.vmem %s4, 192
    %v2288 = vld [vmem:[%s2287] sm:$0xf]
    %v2289 = vld [vmem:[%s2287 + $0x4] sm:$0xf]
    %v2290 = vld [vmem:[%s2287 + $0x8] sm:$0xf]
    %v2291 = vld [vmem:[%s2287 + $0xc] sm:$0xf]
    %v2292 = vld [vmem:[%s2287 + $0x10] sm:$0xf]
    %v2293 = vld [vmem:[%s2287 + $0x14] sm:$0xf]
    %v2294 = vld [vmem:[%s2287 + $0x18] sm:$0xf]
    %v2295 = vld [vmem:[%s2287 + $0x1c] sm:$0xf]
    %v2296 = vld [vmem:[%s2287 + $0x20] sm:$0xf]
    %v2297 = vld [vmem:[%s2287 + $0x24] sm:$0xf]
    %v2298 = vld [vmem:[%s2287 + $0x28] sm:$0xf]
    %v2299 = vld [vmem:[%s2287 + $0x2c] sm:$0xf]
    %v2300 = vld [vmem:[%s2287 + $0x30] sm:$0xf]
    %v2301 = vld [vmem:[%s2287 + $0x34] sm:$0xf]
    %v2302 = vld [vmem:[%s2287 + $0x38] sm:$0xf]
    %v2303 = vld [vmem:[%s2287 + $0x3c] sm:$0xf]
    %v2320 = vunpack.c.l.b16 %v2288
    %v2321 = vunpack.c.l.b16 %v2289
    %v2322 = vunpack.c.l.b16 %v2290
    %v2323 = vunpack.c.l.b16 %v2291
    %v2324 = vunpack.c.l.b16 %v2292
    %v2325 = vunpack.c.l.b16 %v2293
    %v2326 = vunpack.c.l.b16 %v2294
    %v2327 = vunpack.c.l.b16 %v2295
    %v2328 = vunpack.c.l.b16 %v2296
    %v2329 = vunpack.c.l.b16 %v2297
    %v2330 = vunpack.c.l.b16 %v2298
    %v2331 = vunpack.c.l.b16 %v2299
    %v2332 = vunpack.c.l.b16 %v2300
    %v2333 = vunpack.c.l.b16 %v2301
    %v2334 = vunpack.c.l.b16 %v2302
    %v2335 = vunpack.c.l.b16 %v2303
    %v2336 = vpack.c.b16 %v2321, %v2320
    %v2337 = vpack.c.b16 %v2323, %v2322
    %v2338 = vpack.c.b16 %v2325, %v2324
    %v2339 = vpack.c.b16 %v2327, %v2326
    %v2340 = vpack.c.b16 %v2329, %v2328
    %v2341 = vpack.c.b16 %v2331, %v2330
    %v2342 = vpack.c.b16 %v2333, %v2332
    %v2343 = vpack.c.b16 %v2335, %v2334
    %2352 = vmatprep.subr.bf16.mxu0 0
    %2353 = vmatpush1.bf16.msra.mxu0 %v2336
    %2354 = vmatprep.subr.bf16.mxu0 0
    %2355 = vmatpush1.bf16.msra.mxu0 %v2337
    %2356 = vmatprep.subr.bf16.mxu0 0
    %2357 = vmatpush1.bf16.msra.mxu0 %v2338
    %2358 = vmatprep.subr.bf16.mxu0 0
    %2359 = vmatpush1.bf16.msra.mxu0 %v2339
    %2360 = vmatprep.subr.bf16.mxu0 0
    %2361 = vmatpush1.bf16.msra.mxu0 %v2340
    %2362 = vmatprep.subr.bf16.mxu0 0
    %2363 = vmatpush1.bf16.msra.mxu0 %v2341
    %2364 = vmatprep.subr.bf16.mxu0 0
    %2365 = vmatpush1.bf16.msra.mxu0 %v2342
    %2366 = vmatprep.subr.bf16.mxu0 0
    %2367 = vmatpush1.bf16.msra.mxu0 %v2343
    %2368 = vmatprep.subr.bf16.mxu0 0
    %2369 = vmatpush1.bf16.msra.mxu0 0
    %2370 = vmatprep.subr.bf16.mxu0 0
    %2371 = vmatpush1.bf16.msra.mxu0 0
    %2372 = vmatprep.subr.bf16.mxu0 0
    %2373 = vmatpush1.bf16.msra.mxu0 0
    %2374 = vmatprep.subr.bf16.mxu0 0
    %2375 = vmatpush1.bf16.msra.mxu0 0
    %2376 = vmatprep.subr.bf16.mxu0 0
    %2377 = vmatpush1.bf16.msra.mxu0 0
    %2378 = vmatprep.subr.bf16.mxu0 0
    %2379 = vmatpush1.bf16.msra.mxu0 0
    %2380 = vmatprep.subr.bf16.mxu0 0
    %2381 = vmatpush1.bf16.msra.mxu0 0
    %2382 = vmatprep.subr.bf16.mxu0 0
    %2383 = vmatpush1.bf16.msra.mxu0 0
    %2384 = vmatprep.mubr.bf16.mxu0 0
    %2385 = vmatmul.mubr.bf16.gmra.mrb[0].mxu0 %v120
    %v2386 = vpop.f32.mrb[0].mxu0
    %v2387 = vadd.f32 0.0, %v2386
    %v2388 = vpop.f32.mrb[0].mxu0
    %v2389 = vpop.f32.mrb[0].mxu0
    %v2390 = vadd.f32 0.0, %v2389
    %v2391 = vpop.f32.mrb[0].mxu0
    %2392 = vmatprep.mubr.bf16.mxu0 0
    %2393 = vmatmul.mubr.bf16.gmra.mrb[0].mxu0 %v121
    %v2394 = vpop.f32.mrb[0].mxu0
    %v2395 = vadd.f32 0.0, %v2394
    %v2396 = vpop.f32.mrb[0].mxu0
    %v2397 = vpop.f32.mrb[0].mxu0
    %v2398 = vadd.f32 0.0, %v2397
    %v2399 = vpop.f32.mrb[0].mxu0
    %2400 = vdwg.mxu0
    %s2401 = scalar_lea.vmem %s5, 192
    %v2402 = vld [vmem:[%s2401] sm:$0xf]
    %v2403 = vld [vmem:[%s2401 + $0x4] sm:$0xf]
    %v2404 = vld [vmem:[%s2401 + $0x8] sm:$0xf]
    %v2405 = vld [vmem:[%s2401 + $0xc] sm:$0xf]
    %v2406 = vld [vmem:[%s2401 + $0x10] sm:$0xf]
    %v2407 = vld [vmem:[%s2401 + $0x14] sm:$0xf]
    %v2408 = vld [vmem:[%s2401 + $0x18] sm:$0xf]
    %v2409 = vld [vmem:[%s2401 + $0x1c] sm:$0xf]
    %v2410 = vld [vmem:[%s2401 + $0x20] sm:$0xf]
    %v2411 = vld [vmem:[%s2401 + $0x24] sm:$0xf]
    %v2412 = vld [vmem:[%s2401 + $0x28] sm:$0xf]
    %v2413 = vld [vmem:[%s2401 + $0x2c] sm:$0xf]
    %v2414 = vld [vmem:[%s2401 + $0x30] sm:$0xf]
    %v2415 = vld [vmem:[%s2401 + $0x34] sm:$0xf]
    %v2416 = vld [vmem:[%s2401 + $0x38] sm:$0xf]
    %v2417 = vld [vmem:[%s2401 + $0x3c] sm:$0xf]
    %v2434 = vunpack.c.l.b16 %v2402
    %v2435 = vunpack.c.l.b16 %v2403
    %v2436 = vunpack.c.l.b16 %v2404
    %v2437 = vunpack.c.l.b16 %v2405
    %v2438 = vunpack.c.l.b16 %v2406
    %v2439 = vunpack.c.l.b16 %v2407
    %v2440 = vunpack.c.l.b16 %v2408
    %v2441 = vunpack.c.l.b16 %v2409
    %v2442 = vunpack.c.l.b16 %v2410
    %v2443 = vunpack.c.l.b16 %v2411
    %v2444 = vunpack.c.l.b16 %v2412
    %v2445 = vunpack.c.l.b16 %v2413
    %v2446 = vunpack.c.l.b16 %v2414
    %v2447 = vunpack.c.l.b16 %v2415
    %v2448 = vunpack.c.l.b16 %v2416
    %v2449 = vunpack.c.l.b16 %v2417
    %v2450 = vpack.c.b16 %v2435, %v2434
    %v2451 = vpack.c.b16 %v2437, %v2436
    %v2452 = vpack.c.b16 %v2439, %v2438
    %v2453 = vpack.c.b16 %v2441, %v2440
    %v2454 = vpack.c.b16 %v2443, %v2442
    %v2455 = vpack.c.b16 %v2445, %v2444
    %v2456 = vpack.c.b16 %v2447, %v2446
    %v2457 = vpack.c.b16 %v2449, %v2448
    %2466 = vmatprep.subr.bf16.mxu0 0
    %2467 = vmatpush1.bf16.msra.mxu0 %v2450
    %2468 = vmatprep.subr.bf16.mxu0 0
    %2469 = vmatpush1.bf16.msra.mxu0 %v2451
    %2470 = vmatprep.subr.bf16.mxu0 0
    %2471 = vmatpush1.bf16.msra.mxu0 %v2452
    %2472 = vmatprep.subr.bf16.mxu0 0
    %2473 = vmatpush1.bf16.msra.mxu0 %v2453
    %2474 = vmatprep.subr.bf16.mxu0 0
    %2475 = vmatpush1.bf16.msra.mxu0 %v2454
    %2476 = vmatprep.subr.bf16.mxu0 0
    %2477 = vmatpush1.bf16.msra.mxu0 %v2455
    %2478 = vmatprep.subr.bf16.mxu0 0
    %2479 = vmatpush1.bf16.msra.mxu0 %v2456
    %2480 = vmatprep.subr.bf16.mxu0 0
    %2481 = vmatpush1.bf16.msra.mxu0 %v2457
    %2482 = vmatprep.subr.bf16.mxu0 0
    %2483 = vmatpush1.bf16.msra.mxu0 0
    %2484 = vmatprep.subr.bf16.mxu0 0
    %2485 = vmatpush1.bf16.msra.mxu0 0
    %2486 = vmatprep.subr.bf16.mxu0 0
    %2487 = vmatpush1.bf16.msra.mxu0 0
    %2488 = vmatprep.subr.bf16.mxu0 0
    %2489 = vmatpush1.bf16.msra.mxu0 0
    %2490 = vmatprep.subr.bf16.mxu0 0
    %2491 = vmatpush1.bf16.msra.mxu0 0
    %2492 = vmatprep.subr.bf16.mxu0 0
    %2493 = vmatpush1.bf16.msra.mxu0 0
    %2494 = vmatprep.subr.bf16.mxu0 0
    %2495 = vmatpush1.bf16.msra.mxu0 0
    %2496 = vmatprep.subr.bf16.mxu0 0
    %2497 = vmatpush1.bf16.msra.mxu0 0
    %2498 = vmatprep.mubr.bf16.mxu0 0
    %2499 = vmatmul.mubr.bf16.gmra.mrb[0].mxu0 %v120
    %v2500 = vpop.f32.mrb[0].mxu0
    %v2501 = vadd.f32 0.0, %v2500
    %v2502 = vpop.f32.mrb[0].mxu0
    %v2503 = vpop.f32.mrb[0].mxu0
    %v2504 = vadd.f32 0.0, %v2503
    %v2505 = vpop.f32.mrb[0].mxu0
    %2506 = vmatprep.mubr.bf16.mxu0 0
    %2507 = vmatmul.mubr.bf16.gmra.mrb[0].mxu0 %v121
    %v2508 = vpop.f32.mrb[0].mxu0
    %v2509 = vadd.f32 0.0, %v2508
    %v2510 = vpop.f32.mrb[0].mxu0
    %v2511 = vpop.f32.mrb[0].mxu0
    %v2512 = vadd.f32 0.0, %v2511
    %v2513 = vpop.f32.mrb[0].mxu0
    %2514 = vdwg.mxu0
    %v2515 = vpack.c.bf16 %v2276, %v2273
    %v2516 = vpack.c.bf16 %v2284, %v2281
    %v2517 = vpack.c.bf16 %v2390, %v2387
    %v2518 = vpack.c.bf16 %v2398, %v2395
    %v2519 = vpack.c.bf16 %v2504, %v2501
    %v2520 = vpack.c.bf16 %v2512, %v2509
    %s2521 = scalar_lea.vmem %s6, 48
    %v2522 = vld [vmem:[%s2521] sm:$0xf]
    %v2523 = vld [vmem:[%s2521 + $0x4] sm:$0xf]
    %v2524 = vld [vmem:[%s2521 + $0x8] sm:$0xf]
    %v2525 = vld [vmem:[%s2521 + $0xc] sm:$0xf]
    %v2527 = vsel %vm471, %v2515, 0
    %v2530 = vsel %vm471, %v2517, 0
    %2532 = vmatprep.subr.bf16.mxu0 0
    %2533 = vmatpush1.bf16.xpose.msra.mxu0 %v2530
    %2534 = vmatprep.subr.bf16.mxu0 0
    %2535 = vmatpush1.bf16.xpose.msra.mxu0 0
    %2536 = vmatprep.subr.bf16.mxu0 0
    %2537 = vmatpush1.bf16.xpose.msra.mxu0 0
    %2538 = vmatprep.subr.bf16.mxu0 0
    %2539 = vmatpush1.bf16.xpose.msra.mxu0 0
    %2540 = vmatprep.subr.bf16.mxu0 0
    %2541 = vmatpush1.bf16.xpose.msra.mxu0 0
    %2542 = vmatprep.subr.bf16.mxu0 0
    %2543 = vmatpush1.bf16.xpose.msra.mxu0 0
    %2544 = vmatprep.subr.bf16.mxu0 0
    %2545 = vmatpush1.bf16.xpose.msra.mxu0 0
    %2546 = vmatprep.subr.bf16.mxu0 0
    %2547 = vmatpush1.bf16.xpose.msra.mxu0 0
    %2548 = vmatprep.subr.bf16.mxu0 0
    %2549 = vmatpush1.bf16.xpose.msra.mxu0 0
    %2550 = vmatprep.subr.bf16.mxu0 0
    %2551 = vmatpush1.bf16.xpose.msra.mxu0 0
    %2552 = vmatprep.subr.bf16.mxu0 0
    %2553 = vmatpush1.bf16.xpose.msra.mxu0 0
    %2554 = vmatprep.subr.bf16.mxu0 0
    %2555 = vmatpush1.bf16.xpose.msra.mxu0 0
    %2556 = vmatprep.subr.bf16.mxu0 0
    %2557 = vmatpush1.bf16.xpose.msra.mxu0 0
    %2558 = vmatprep.subr.bf16.mxu0 0
    %2559 = vmatpush1.bf16.xpose.msra.mxu0 0
    %2560 = vmatprep.subr.bf16.mxu0 0
    %2561 = vmatpush1.bf16.xpose.msra.mxu0 0
    %2562 = vmatprep.subr.bf16.mxu0 0
    %2563 = vmatpush1.bf16.xpose.msra.mxu0 0
    %2564 = vmatprep.mubr.bf16.mxu0 0
    %2565 = vmatmul.mubr.bf16.gmra.mrb[0].mxu0 %v2527
    %v2566 = vpop.f32.mrb[0].mxu0
    %v2567 = vadd.f32 0.0, %v2566
    %v2568 = vpop.f32.mrb[0].mxu0
    %v2569 = vpop.f32.mrb[0].mxu0
    %v2570 = vadd.f32 0.0, %v2569
    %v2571 = vpop.f32.mrb[0].mxu0
    %2572 = vdwg.mxu0
    %v2573 = vsel %vm519, %v2567, -inf
    %2574 = vmax.xlane.f32.xlu0 %v2573
    %v2575 = vpop.xlane.xlu0 %2574
    %v2576 = vsel %vm519, %v2570, -inf
    %2577 = vmax.xlane.f32.xlu0 %v2576
    %v2578 = vpop.xlane.xlu0 %2577
    %v2579 = vsub.f32 %v2567, %v2575
    %v2580 = vsub.f32 %v2570, %v2578
    %v2581 = vmul.f32 %v2579, 1.442695
    %v2582 = vpow.pop %v2581
    %v2583 = vmul.f32 %v2580, 1.442695
    %v2584 = vpow.pop %v2583
    %v2585 = vsel %vm519, %v2582, 0.0
    %2586 = vadd.xlane.f32.xlu0 %v2585
    %v2587 = vpop.xlane.xlu0 %2586
    %v2588 = vsel %vm519, %v2584, 0.0
    %2589 = vadd.xlane.f32.xlu0 %v2588
    %v2590 = vpop.xlane.xlu0 %2589
    %v2591 = vrcp.pop %v2587
    %v2592 = vrcp.pop %v2590
    %v2593 = vmul.f32 %v2582, %v2591
    %v2594 = vmul.f32 %v2584, %v2592
    %v2595 = vpack.c.bf16 %v2594, %v2593
    %v2597 = vsel %vm519, %v2595, 0
    %2599 = vmatprep.subr.bf16.mxu0 0
    %2600 = vmatpush1.bf16.msra.mxu0 %v2519
    %2601 = vmatprep.subr.bf16.mxu0 0
    %2602 = vmatpush1.bf16.msra.mxu0 0
    %2603 = vmatprep.subr.bf16.mxu0 0
    %2604 = vmatpush1.bf16.msra.mxu0 0
    %2605 = vmatprep.subr.bf16.mxu0 0
    %2606 = vmatpush1.bf16.msra.mxu0 0
    %2607 = vmatprep.subr.bf16.mxu0 0
    %2608 = vmatpush1.bf16.msra.mxu0 0
    %2609 = vmatprep.subr.bf16.mxu0 0
    %2610 = vmatpush1.bf16.msra.mxu0 0
    %2611 = vmatprep.subr.bf16.mxu0 0
    %2612 = vmatpush1.bf16.msra.mxu0 0
    %2613 = vmatprep.subr.bf16.mxu0 0
    %2614 = vmatpush1.bf16.msra.mxu0 0
    %2615 = vmatprep.subr.bf16.mxu0 0
    %2616 = vmatpush1.bf16.msra.mxu0 0
    %2617 = vmatprep.subr.bf16.mxu0 0
    %2618 = vmatpush1.bf16.msra.mxu0 0
    %2619 = vmatprep.subr.bf16.mxu0 0
    %2620 = vmatpush1.bf16.msra.mxu0 0
    %2621 = vmatprep.subr.bf16.mxu0 0
    %2622 = vmatpush1.bf16.msra.mxu0 0
    %2623 = vmatprep.subr.bf16.mxu0 0
    %2624 = vmatpush1.bf16.msra.mxu0 0
    %2625 = vmatprep.subr.bf16.mxu0 0
    %2626 = vmatpush1.bf16.msra.mxu0 0
    %2627 = vmatprep.subr.bf16.mxu0 0
    %2628 = vmatpush1.bf16.msra.mxu0 0
    %2629 = vmatprep.subr.bf16.mxu0 0
    %2630 = vmatpush1.bf16.msra.mxu0 0
    %2631 = vmatprep.mubr.bf16.mxu0 0
    %2632 = vmatmul.mubr.bf16.gmra.mrb[0].mxu0 %v2597
    %v2633 = vpop.f32.mrb[0].mxu0
    %v2634 = vadd.f32 0.0, %v2633
    %v2635 = vpop.f32.mrb[0].mxu0
    %v2636 = vpop.f32.mrb[0].mxu0
    %v2637 = vadd.f32 0.0, %v2636
    %v2638 = vpop.f32.mrb[0].mxu0
    %2639 = vdwg.mxu0
    %v2640 = vpack.c.bf16 %v2637, %v2634
    %v2645 = vunpack.c.l.b16 %v2522
    %v2646 = vunpack.c.l.b16 %v2523
    %v2647 = vunpack.c.l.b16 %v2524
    %v2648 = vunpack.c.l.b16 %v2525
    %v2649 = vpack.c.b16 %v2646, %v2645
    %v2650 = vpack.c.b16 %v2648, %v2647
    %v2654 = vsel %vm471, %v2640, 0
    %2656 = vmatprep.subr.bf16.mxu0 0
    %2657 = vmatpush1.bf16.msra.mxu0 %v2649
    %2658 = vmatprep.subr.bf16.mxu0 0
    %2659 = vmatpush1.bf16.msra.mxu0 %v2650
    %2660 = vmatprep.subr.bf16.mxu0 0
    %2661 = vmatpush1.bf16.msra.mxu0 0
    %2662 = vmatprep.subr.bf16.mxu0 0
    %2663 = vmatpush1.bf16.msra.mxu0 0
    %2664 = vmatprep.subr.bf16.mxu0 0
    %2665 = vmatpush1.bf16.msra.mxu0 0
    %2666 = vmatprep.subr.bf16.mxu0 0
    %2667 = vmatpush1.bf16.msra.mxu0 0
    %2668 = vmatprep.subr.bf16.mxu0 0
    %2669 = vmatpush1.bf16.msra.mxu0 0
    %2670 = vmatprep.subr.bf16.mxu0 0
    %2671 = vmatpush1.bf16.msra.mxu0 0
    %2672 = vmatprep.subr.bf16.mxu0 0
    %2673 = vmatpush1.bf16.msra.mxu0 0
    %2674 = vmatprep.subr.bf16.mxu0 0
    %2675 = vmatpush1.bf16.msra.mxu0 0
    %2676 = vmatprep.subr.bf16.mxu0 0
    %2677 = vmatpush1.bf16.msra.mxu0 0
    %2678 = vmatprep.subr.bf16.mxu0 0
    %2679 = vmatpush1.bf16.msra.mxu0 0
    %2680 = vmatprep.subr.bf16.mxu0 0
    %2681 = vmatpush1.bf16.msra.mxu0 0
    %2682 = vmatprep.subr.bf16.mxu0 0
    %2683 = vmatpush1.bf16.msra.mxu0 0
    %2684 = vmatprep.subr.bf16.mxu0 0
    %2685 = vmatpush1.bf16.msra.mxu0 0
    %2686 = vmatprep.subr.bf16.mxu0 0
    %2687 = vmatpush1.bf16.msra.mxu0 0
    %2688 = vmatprep.mubr.bf16.mxu0 0
    %2689 = vmatmul.mubr.bf16.gmra.mrb[0].mxu0 %v2654
    %v2690 = vpop.f32.mrb[0].mxu0
    %v2691 = vadd.f32 0.0, %v2690
    %v2692 = vpop.f32.mrb[0].mxu0
    %v2693 = vpop.f32.mrb[0].mxu0
    %v2694 = vadd.f32 0.0, %v2693
    %v2695 = vpop.f32.mrb[0].mxu0
    %2696 = vdwg.mxu0
    %v2697 = vadd.f32 %v2010, %v2691
    %v2698 = vadd.f32 %v2011, %v2694
    %v2700 = vsel %vm471, %v2516, 0
    %v2703 = vsel %vm471, %v2518, 0
    %2705 = vmatprep.subr.bf16.mxu0 0
    %2706 = vmatpush1.bf16.xpose.msra.mxu0 %v2703
    %2707 = vmatprep.subr.bf16.mxu0 0
    %2708 = vmatpush1.bf16.xpose.msra.mxu0 0
    %2709 = vmatprep.subr.bf16.mxu0 0
    %2710 = vmatpush1.bf16.xpose.msra.mxu0 0
    %2711 = vmatprep.subr.bf16.mxu0 0
    %2712 = vmatpush1.bf16.xpose.msra.mxu0 0
    %2713 = vmatprep.subr.bf16.mxu0 0
    %2714 = vmatpush1.bf16.xpose.msra.mxu0 0
    %2715 = vmatprep.subr.bf16.mxu0 0
    %2716 = vmatpush1.bf16.xpose.msra.mxu0 0
    %2717 = vmatprep.subr.bf16.mxu0 0
    %2718 = vmatpush1.bf16.xpose.msra.mxu0 0
    %2719 = vmatprep.subr.bf16.mxu0 0
    %2720 = vmatpush1.bf16.xpose.msra.mxu0 0
    %2721 = vmatprep.subr.bf16.mxu0 0
    %2722 = vmatpush1.bf16.xpose.msra.mxu0 0
    %2723 = vmatprep.subr.bf16.mxu0 0
    %2724 = vmatpush1.bf16.xpose.msra.mxu0 0
    %2725 = vmatprep.subr.bf16.mxu0 0
    %2726 = vmatpush1.bf16.xpose.msra.mxu0 0
    %2727 = vmatprep.subr.bf16.mxu0 0
    %2728 = vmatpush1.bf16.xpose.msra.mxu0 0
    %2729 = vmatprep.subr.bf16.mxu0 0
    %2730 = vmatpush1.bf16.xpose.msra.mxu0 0
    %2731 = vmatprep.subr.bf16.mxu0 0
    %2732 = vmatpush1.bf16.xpose.msra.mxu0 0
    %2733 = vmatprep.subr.bf16.mxu0 0
    %2734 = vmatpush1.bf16.xpose.msra.mxu0 0
    %2735 = vmatprep.subr.bf16.mxu0 0
    %2736 = vmatpush1.bf16.xpose.msra.mxu0 0
    %2737 = vmatprep.mubr.bf16.mxu0 0
    %2738 = vmatmul.mubr.bf16.gmra.mrb[0].mxu0 %v2700
    %v2739 = vpop.f32.mrb[0].mxu0
    %v2740 = vadd.f32 0.0, %v2739
    %v2741 = vpop.f32.mrb[0].mxu0
    %v2742 = vpop.f32.mrb[0].mxu0
    %v2743 = vadd.f32 0.0, %v2742
    %v2744 = vpop.f32.mrb[0].mxu0
    %2745 = vdwg.mxu0
    %v2746 = vsel %vm519, %v2740, -inf
    %2747 = vmax.xlane.f32.xlu0 %v2746
    %v2748 = vpop.xlane.xlu0 %2747
    %v2749 = vsel %vm519, %v2743, -inf
    %2750 = vmax.xlane.f32.xlu0 %v2749
    %v2751 = vpop.xlane.xlu0 %2750
    %v2752 = vsub.f32 %v2740, %v2748
    %v2753 = vsub.f32 %v2743, %v2751
    %v2754 = vmul.f32 %v2752, 1.442695
    %v2755 = vpow.pop %v2754
    %v2756 = vmul.f32 %v2753, 1.442695
    %v2757 = vpow.pop %v2756
    %v2758 = vsel %vm519, %v2755, 0.0
    %2759 = vadd.xlane.f32.xlu0 %v2758
    %v2760 = vpop.xlane.xlu0 %2759
    %v2761 = vsel %vm519, %v2757, 0.0
    %2762 = vadd.xlane.f32.xlu0 %v2761
    %v2763 = vpop.xlane.xlu0 %2762
    %v2764 = vrcp.pop %v2760
    %v2765 = vrcp.pop %v2763
    %v2766 = vmul.f32 %v2755, %v2764
    %v2767 = vmul.f32 %v2757, %v2765
    %v2768 = vpack.c.bf16 %v2767, %v2766
    %v2770 = vsel %vm519, %v2768, 0
    %2772 = vmatprep.subr.bf16.mxu0 0
    %2773 = vmatpush1.bf16.msra.mxu0 %v2520
    %2774 = vmatprep.subr.bf16.mxu0 0
    %2775 = vmatpush1.bf16.msra.mxu0 0
    %2776 = vmatprep.subr.bf16.mxu0 0
    %2777 = vmatpush1.bf16.msra.mxu0 0
    %2778 = vmatprep.subr.bf16.mxu0 0
    %2779 = vmatpush1.bf16.msra.mxu0 0
    %2780 = vmatprep.subr.bf16.mxu0 0
    %2781 = vmatpush1.bf16.msra.mxu0 0
    %2782 = vmatprep.subr.bf16.mxu0 0
    %2783 = vmatpush1.bf16.msra.mxu0 0
    %2784 = vmatprep.subr.bf16.mxu0 0
    %2785 = vmatpush1.bf16.msra.mxu0 0
    %2786 = vmatprep.subr.bf16.mxu0 0
    %2787 = vmatpush1.bf16.msra.mxu0 0
    %2788 = vmatprep.subr.bf16.mxu0 0
    %2789 = vmatpush1.bf16.msra.mxu0 0
    %2790 = vmatprep.subr.bf16.mxu0 0
    %2791 = vmatpush1.bf16.msra.mxu0 0
    %2792 = vmatprep.subr.bf16.mxu0 0
    %2793 = vmatpush1.bf16.msra.mxu0 0
    %2794 = vmatprep.subr.bf16.mxu0 0
    %2795 = vmatpush1.bf16.msra.mxu0 0
    %2796 = vmatprep.subr.bf16.mxu0 0
    %2797 = vmatpush1.bf16.msra.mxu0 0
    %2798 = vmatprep.subr.bf16.mxu0 0
    %2799 = vmatpush1.bf16.msra.mxu0 0
    %2800 = vmatprep.subr.bf16.mxu0 0
    %2801 = vmatpush1.bf16.msra.mxu0 0
    %2802 = vmatprep.subr.bf16.mxu0 0
    %2803 = vmatpush1.bf16.msra.mxu0 0
    %2804 = vmatprep.mubr.bf16.mxu0 0
    %2805 = vmatmul.mubr.bf16.gmra.mrb[0].mxu0 %v2770
    %v2806 = vpop.f32.mrb[0].mxu0
    %v2807 = vadd.f32 0.0, %v2806
    %v2808 = vpop.f32.mrb[0].mxu0
    %v2809 = vpop.f32.mrb[0].mxu0
    %v2810 = vadd.f32 0.0, %v2809
    %v2811 = vpop.f32.mrb[0].mxu0
    %2812 = vdwg.mxu0
    %v2813 = vpack.c.bf16 %v2810, %v2807
    %v2815 = vsel %vm471, %v2813, 0
    %2817 = vmatprep.subr.bf16.mxu0 0
    %2818 = vmatpush1.bf16.msra.mxu0 %v2649
    %2819 = vmatprep.subr.bf16.mxu0 0
    %2820 = vmatpush1.bf16.msra.mxu0 %v2650
    %2821 = vmatprep.subr.bf16.mxu0 0
    %2822 = vmatpush1.bf16.msra.mxu0 0
    %2823 = vmatprep.subr.bf16.mxu0 0
    %2824 = vmatpush1.bf16.msra.mxu0 0
    %2825 = vmatprep.subr.bf16.mxu0 0
    %2826 = vmatpush1.bf16.msra.mxu0 0
    %2827 = vmatprep.subr.bf16.mxu0 0
    %2828 = vmatpush1.bf16.msra.mxu0 0
    %2829 = vmatprep.subr.bf16.mxu0 0
    %2830 = vmatpush1.bf16.msra.mxu0 0
    %2831 = vmatprep.subr.bf16.mxu0 0
    %2832 = vmatpush1.bf16.msra.mxu0 0
    %2833 = vmatprep.subr.bf16.mxu0 0
    %2834 = vmatpush1.bf16.msra.mxu0 0
    %2835 = vmatprep.subr.bf16.mxu0 0
    %2836 = vmatpush1.bf16.msra.mxu0 0
    %2837 = vmatprep.subr.bf16.mxu0 0
    %2838 = vmatpush1.bf16.msra.mxu0 0
    %2839 = vmatprep.subr.bf16.mxu0 0
    %2840 = vmatpush1.bf16.msra.mxu0 0
    %2841 = vmatprep.subr.bf16.mxu0 0
    %2842 = vmatpush1.bf16.msra.mxu0 0
    %2843 = vmatprep.subr.bf16.mxu0 0
    %2844 = vmatpush1.bf16.msra.mxu0 0
    %2845 = vmatprep.subr.bf16.mxu0 0
    %2846 = vmatpush1.bf16.msra.mxu0 0
    %2847 = vmatprep.subr.bf16.mxu0 0
    %2848 = vmatpush1.bf16.msra.mxu0 0
    %2849 = vmatprep.mubr.bf16.mxu0 0
    %2850 = vmatmul.mubr.bf16.gmra.mrb[0].mxu0 %v2815
    %v2851 = vpop.f32.mrb[0].mxu0
    %v2852 = vadd.f32 0.0, %v2851
    %v2853 = vpop.f32.mrb[0].mxu0
    %v2854 = vpop.f32.mrb[0].mxu0
    %v2855 = vadd.f32 0.0, %v2854
    %v2856 = vpop.f32.mrb[0].mxu0
    %2857 = vdwg.mxu0
    %v2858 = vadd.f32 %v2171, %v2852
    %v2859 = vadd.f32 %v2172, %v2855
    %v2860 = vadd.f32 %v49, %v2697
    %v2861 = vadd.f32 %v50, %v2698
    %v2862 = vadd.f32 %v51, %v2858
    %v2863 = vadd.f32 %v52, %v2859
    %v2864 = vld [vmem:[%s7] sm:$0x1]
    %v2866 = vlaneseq
    %v2867 = vshrl.u32 %v2866, 7
    %v2868 = vsub.s32 0, %v2867
    %v2869 = vrot.slane %v2864, %v2868
    %v2871 = vadd.f32 %v2860, %v2869
    %v2872 = vadd.f32 %v2861, %v2869
    %v2873 = vadd.f32 %v2862, %v2869
    %v2874 = vadd.f32 %v2863, %v2869
    %v2875 = vld [vmem:[%s8] sm:$0x1]
    %v2876 = vld [vmem:[%s9] sm:$0x1]
    %2877 = vadd.xlane.f32.xlu0 %v2871
    %v2878 = vpop.xlane.xlu0 %2877
    %2879 = vadd.xlane.f32.xlu0 %v2872
    %v2880 = vpop.xlane.xlu0 %2879
    %2881 = vadd.xlane.f32.xlu0 %v2873
    %v2882 = vpop.xlane.xlu0 %2881
    %2883 = vadd.xlane.f32.xlu0 %v2874
    %v2884 = vpop.xlane.xlu0 %2883
    %v2885 = vmul.f32 %v2878, %v63
    %v2886 = vmul.f32 %v2880, %v63
    %v2887 = vmul.f32 %v2882, %v63
    %v2888 = vmul.f32 %v2884, %v63
    %v2889 = vsub.f32 %v2871, %v2885
    %v2890 = vsub.f32 %v2872, %v2886
    %v2891 = vsub.f32 %v2873, %v2887
    %v2892 = vsub.f32 %v2874, %v2888
    %v2893 = vmul.f32 %v2889, %v2889
    %v2894 = vmul.f32 %v2890, %v2890
    %v2895 = vmul.f32 %v2891, %v2891
    %v2896 = vmul.f32 %v2892, %v2892
    %2897 = vadd.xlane.f32.xlu0 %v2893
    %v2898 = vpop.xlane.xlu0 %2897
    %2899 = vadd.xlane.f32.xlu0 %v2894
    %v2900 = vpop.xlane.xlu0 %2899
    %2901 = vadd.xlane.f32.xlu0 %v2895
    %v2902 = vpop.xlane.xlu0 %2901
    %2903 = vadd.xlane.f32.xlu0 %v2896
    %v2904 = vpop.xlane.xlu0 %2903
    %v2905 = vmul.f32 %v2898, %v63
    %v2906 = vmul.f32 %v2900, %v63
    %v2907 = vmul.f32 %v2902, %v63
    %v2908 = vmul.f32 %v2904, %v63
    %v2909 = vadd.f32 %v2905, 1e-05
    %v2910 = vadd.f32 %v2906, 1e-05
    %v2911 = vadd.f32 %v2907, 1e-05
    %v2912 = vadd.f32 %v2908, 1e-05
    %v2913 = vrsqrt.pop %v2909
    %v2914 = vrsqrt.pop %v2910
    %v2915 = vrsqrt.pop %v2911
    %v2916 = vrsqrt.pop %v2912
    %v2917 = vmul.f32 %v2889, %v2913
    %v2918 = vmul.f32 %v2890, %v2914
    %v2919 = vmul.f32 %v2891, %v2915
    %v2920 = vmul.f32 %v2892, %v2916
    %v2922 = vlaneseq
    %v2923 = vshrl.u32 %v2922, 7
    %v2924 = vsub.s32 0, %v2923
    %v2925 = vrot.slane %v2875, %v2924
    %v2927 = vmul.f32 %v2917, %v2925
    %v2928 = vmul.f32 %v2918, %v2925
    %v2929 = vmul.f32 %v2919, %v2925
    %v2930 = vmul.f32 %v2920, %v2925
    %v2932 = vlaneseq
    %v2933 = vshrl.u32 %v2932, 7
    %v2934 = vsub.s32 0, %v2933
    %v2935 = vrot.slane %v2876, %v2934
    %v2937 = vadd.f32 %v2927, %v2935
    %v2938 = vadd.f32 %v2928, %v2935
    %v2939 = vadd.f32 %v2929, %v2935
    %v2940 = vadd.f32 %v2930, %v2935
    %v2941 = vpack.c.bf16 %v2938, %v2937
    %v2942 = vpack.c.bf16 %v2940, %v2939
    %v2943 = vld [vmem:[%s10] sm:$0xff]
    %v2944 = vld [vmem:[%s10 + $0x8] sm:$0xff]
    %v2945 = vld [vmem:[%s10 + $0x10] sm:$0xff]
    %v2946 = vld [vmem:[%s10 + $0x18] sm:$0xff]
    %v2947 = vld [vmem:[%s10 + $0x20] sm:$0xff]
    %v2948 = vld [vmem:[%s10 + $0x28] sm:$0xff]
    %v2949 = vld [vmem:[%s10 + $0x30] sm:$0xff]
    %v2950 = vld [vmem:[%s10 + $0x38] sm:$0xff]
    %v2951 = vld [vmem:[%s10 + $0x40] sm:$0xff]
    %v2952 = vld [vmem:[%s10 + $0x48] sm:$0xff]
    %v2953 = vld [vmem:[%s10 + $0x50] sm:$0xff]
    %v2954 = vld [vmem:[%s10 + $0x58] sm:$0xff]
    %v2955 = vld [vmem:[%s10 + $0x60] sm:$0xff]
    %v2956 = vld [vmem:[%s10 + $0x68] sm:$0xff]
    %v2957 = vld [vmem:[%s10 + $0x70] sm:$0xff]
    %v2958 = vld [vmem:[%s10 + $0x78] sm:$0xff]
    %v2959 = vld [vmem:[%s11] sm:$0x3]
    %v2961 = vlaneseq
    %v2962 = vshrl.u32 %v2961, 7
    %v2963 = vsub.s32 0, %v2962
    %v2964 = vrot.slane %v2959, %v2963
    %v2965 = vlaneseq
    %v2966 = vshrl.u32 %v2965, 7
    %v2967 = vsub.s32 1, %v2966
    %v2968 = vrot.slane %v2959, %v2967
    %v2987 = vunpack.c.l.b16 %v2943
    %v2988 = vunpack.c.h.b16 %v2943
    %v2989 = vunpack.c.l.b16 %v2944
    %v2990 = vunpack.c.h.b16 %v2944
    %v2991 = vunpack.c.l.b16 %v2945
    %v2992 = vunpack.c.h.b16 %v2945
    %v2993 = vunpack.c.l.b16 %v2946
    %v2994 = vunpack.c.h.b16 %v2946
    %v2995 = vunpack.c.l.b16 %v2947
    %v2996 = vunpack.c.h.b16 %v2947
    %v2997 = vunpack.c.l.b16 %v2948
    %v2998 = vunpack.c.h.b16 %v2948
    %v2999 = vunpack.c.l.b16 %v2949
    %v3000 = vunpack.c.h.b16 %v2949
    %v3001 = vunpack.c.l.b16 %v2950
    %v3002 = vunpack.c.h.b16 %v2950
    %v3003 = vunpack.c.l.b16 %v2951
    %v3004 = vunpack.c.h.b16 %v2951
    %v3005 = vunpack.c.l.b16 %v2952
    %v3006 = vunpack.c.h.b16 %v2952
    %v3007 = vunpack.c.l.b16 %v2953
    %v3008 = vunpack.c.h.b16 %v2953
    %v3009 = vunpack.c.l.b16 %v2954
    %v3010 = vunpack.c.h.b16 %v2954
    %v3011 = vunpack.c.l.b16 %v2955
    %v3012 = vunpack.c.h.b16 %v2955
    %v3013 = vunpack.c.l.b16 %v2956
    %v3014 = vunpack.c.h.b16 %v2956
    %v3015 = vunpack.c.l.b16 %v2957
    %v3016 = vunpack.c.h.b16 %v2957
    %v3017 = vunpack.c.l.b16 %v2958
    %v3018 = vunpack.c.h.b16 %v2958
    %v3019 = vpack.c.b16 %v2989, %v2987
    %v3020 = vpack.c.b16 %v2990, %v2988
    %v3021 = vpack.c.b16 %v2993, %v2991
    %v3022 = vpack.c.b16 %v2994, %v2992
    %v3023 = vpack.c.b16 %v2997, %v2995
    %v3024 = vpack.c.b16 %v2998, %v2996
    %v3025 = vpack.c.b16 %v3001, %v2999
    %v3026 = vpack.c.b16 %v3002, %v3000
    %v3027 = vpack.c.b16 %v3005, %v3003
    %v3028 = vpack.c.b16 %v3006, %v3004
    %v3029 = vpack.c.b16 %v3009, %v3007
    %v3030 = vpack.c.b16 %v3010, %v3008
    %v3031 = vpack.c.b16 %v3013, %v3011
    %v3032 = vpack.c.b16 %v3014, %v3012
    %v3033 = vpack.c.b16 %v3017, %v3015
    %v3034 = vpack.c.b16 %v3018, %v3016
    %3051 = vmatprep.subr.bf16.mxu0 %v3020
    %3052 = vmatpush1.bf16.msra.mxu0 %v3019
    %3053 = vmatprep.subr.bf16.mxu0 %v3022
    %3054 = vmatpush1.bf16.msra.mxu0 %v3021
    %3055 = vmatprep.subr.bf16.mxu0 %v3024
    %3056 = vmatpush1.bf16.msra.mxu0 %v3023
    %3057 = vmatprep.subr.bf16.mxu0 %v3026
    %3058 = vmatpush1.bf16.msra.mxu0 %v3025
    %3059 = vmatprep.subr.bf16.mxu0 %v3028
    %3060 = vmatpush1.bf16.msra.mxu0 %v3027
    %3061 = vmatprep.subr.bf16.mxu0 %v3030
    %3062 = vmatpush1.bf16.msra.mxu0 %v3029
    %3063 = vmatprep.subr.bf16.mxu0 %v3032
    %3064 = vmatpush1.bf16.msra.mxu0 %v3031
    %3065 = vmatprep.subr.bf16.mxu0 %v3034
    %3066 = vmatpush1.bf16.msra.mxu0 %v3033
    %3067 = vmatprep.subr.bf16.mxu0 0
    %3068 = vmatpush1.bf16.msra.mxu0 0
    %3069 = vmatprep.subr.bf16.mxu0 0
    %3070 = vmatpush1.bf16.msra.mxu0 0
    %3071 = vmatprep.subr.bf16.mxu0 0
    %3072 = vmatpush1.bf16.msra.mxu0 0
    %3073 = vmatprep.subr.bf16.mxu0 0
    %3074 = vmatpush1.bf16.msra.mxu0 0
    %3075 = vmatprep.subr.bf16.mxu0 0
    %3076 = vmatpush1.bf16.msra.mxu0 0
    %3077 = vmatprep.subr.bf16.mxu0 0
    %3078 = vmatpush1.bf16.msra.mxu0 0
    %3079 = vmatprep.subr.bf16.mxu0 0
    %3080 = vmatpush1.bf16.msra.mxu0 0
    %3081 = vmatprep.subr.bf16.mxu0 0
    %3082 = vmatpush1.bf16.msra.mxu0 0
    %3083 = vmatprep.mubr.bf16.mxu0 0
    %3084 = vmatmul.mubr.bf16.gmra.mrb[0].mxu0 %v2941
    %v3085 = vpop.f32.mrb[0].mxu0
    %v3086 = vadd.f32 %v2964, %v3085
    %v3087 = vpop.f32.mrb[0].mxu0
    %v3088 = vadd.f32 %v2968, %v3087
    %v3089 = vpop.f32.mrb[0].mxu0
    %v3090 = vadd.f32 %v2964, %v3089
    %v3091 = vpop.f32.mrb[0].mxu0
    %v3092 = vadd.f32 %v2968, %v3091
    %3093 = vmatprep.mubr.bf16.mxu0 0
    %3094 = vmatmul.mubr.bf16.gmra.mrb[0].mxu0 %v2942
    %v3095 = vpop.f32.mrb[0].mxu0
    %v3096 = vadd.f32 %v2964, %v3095
    %v3097 = vpop.f32.mrb[0].mxu0
    %v3098 = vadd.f32 %v2968, %v3097
    %v3099 = vpop.f32.mrb[0].mxu0
    %v3100 = vadd.f32 %v2964, %v3099
    %v3101 = vpop.f32.mrb[0].mxu0
    %v3102 = vadd.f32 %v2968, %v3101
    %3103 = vdwg.mxu0
    %v3104 = vmul.f32 %v3086, 0.5
    %v3105 = vmul.f32 %v3088, 0.5
    %v3106 = vmul.f32 %v3090, 0.5
    %v3107 = vmul.f32 %v3092, 0.5
    %v3108 = vmul.f32 %v3096, 0.5
    %v3109 = vmul.f32 %v3098, 0.5
    %v3110 = vmul.f32 %v3100, 0.5
    %v3111 = vmul.f32 %v3102, 0.5
    %v3112 = vmul.f32 %v3086, 0.044715
    %v3113 = vmul.f32 %v3088, 0.044715
    %v3114 = vmul.f32 %v3090, 0.044715
    %v3115 = vmul.f32 %v3092, 0.044715
    %v3116 = vmul.f32 %v3096, 0.044715
    %v3117 = vmul.f32 %v3098, 0.044715
    %v3118 = vmul.f32 %v3100, 0.044715
    %v3119 = vmul.f32 %v3102, 0.044715
    %v3120 = vmul.f32 %v3112, %v3086
    %v3121 = vmul.f32 %v3113, %v3088
    %v3122 = vmul.f32 %v3114, %v3090
    %v3123 = vmul.f32 %v3115, %v3092
    %v3124 = vmul.f32 %v3116, %v3096
    %v3125 = vmul.f32 %v3117, %v3098
    %v3126 = vmul.f32 %v3118, %v3100
    %v3127 = vmul.f32 %v3119, %v3102
    %v3128 = vmul.f32 %v3120, %v3086
    %v3129 = vmul.f32 %v3121, %v3088
    %v3130 = vmul.f32 %v3122, %v3090
    %v3131 = vmul.f32 %v3123, %v3092
    %v3132 = vmul.f32 %v3124, %v3096
    %v3133 = vmul.f32 %v3125, %v3098
    %v3134 = vmul.f32 %v3126, %v3100
    %v3135 = vmul.f32 %v3127, %v3102
    %v3136 = vadd.f32 %v3086, %v3128
    %v3137 = vadd.f32 %v3088, %v3129
    %v3138 = vadd.f32 %v3090, %v3130
    %v3139 = vadd.f32 %v3092, %v3131
    %v3140 = vadd.f32 %v3096, %v3132
    %v3141 = vadd.f32 %v3098, %v3133
    %v3142 = vadd.f32 %v3100, %v3134
    %v3143 = vadd.f32 %v3102, %v3135
    %v3144 = vmul.f32 %v3136, 0.7978846
    %v3145 = vmul.f32 %v3137, 0.7978846
    %v3146 = vmul.f32 %v3138, 0.7978846
    %v3147 = vmul.f32 %v3139, 0.7978846
    %v3148 = vmul.f32 %v3140, 0.7978846
    %v3149 = vmul.f32 %v3141, 0.7978846
    %v3150 = vmul.f32 %v3142, 0.7978846
    %v3151 = vmul.f32 %v3143, 0.7978846
    %v3152 = vtanh.pop %v3144
    %v3153 = vtanh.pop %v3145
    %v3154 = vtanh.pop %v3146
    %v3155 = vtanh.pop %v3147
    %v3156 = vtanh.pop %v3148
    %v3157 = vtanh.pop %v3149
    %v3158 = vtanh.pop %v3150
    %v3159 = vtanh.pop %v3151
    %v3160 = vadd.f32 %v3152, 1.0
    %v3161 = vadd.f32 %v3153, 1.0
    %v3162 = vadd.f32 %v3154, 1.0
    %v3163 = vadd.f32 %v3155, 1.0
    %v3164 = vadd.f32 %v3156, 1.0
    %v3165 = vadd.f32 %v3157, 1.0
    %v3166 = vadd.f32 %v3158, 1.0
    %v3167 = vadd.f32 %v3159, 1.0
    %v3168 = vmul.f32 %v3104, %v3160
    %v3169 = vmul.f32 %v3105, %v3161
    %v3170 = vmul.f32 %v3106, %v3162
    %v3171 = vmul.f32 %v3107, %v3163
    %v3172 = vmul.f32 %v3108, %v3164
    %v3173 = vmul.f32 %v3109, %v3165
    %v3174 = vmul.f32 %v3110, %v3166
    %v3175 = vmul.f32 %v3111, %v3167
    %v3176 = vpack.c.bf16 %v3170, %v3168
    %v3177 = vpack.c.bf16 %v3171, %v3169
    %v3178 = vpack.c.bf16 %v3174, %v3172
    %v3179 = vpack.c.bf16 %v3175, %v3173
    %v3180 = vld [vmem:[%s12] sm:$0xf]
    %v3181 = vld [vmem:[%s12 + $0x4] sm:$0xf]
    %v3182 = vld [vmem:[%s12 + $0x8] sm:$0xf]
    %v3183 = vld [vmem:[%s12 + $0xc] sm:$0xf]
    %v3184 = vld [vmem:[%s12 + $0x10] sm:$0xf]
    %v3185 = vld [vmem:[%s12 + $0x14] sm:$0xf]
    %v3186 = vld [vmem:[%s12 + $0x18] sm:$0xf]
    %v3187 = vld [vmem:[%s12 + $0x1c] sm:$0xf]
    %v3188 = vld [vmem:[%s12 + $0x20] sm:$0xf]
    %v3189 = vld [vmem:[%s12 + $0x24] sm:$0xf]
    %v3190 = vld [vmem:[%s12 + $0x28] sm:$0xf]
    %v3191 = vld [vmem:[%s12 + $0x2c] sm:$0xf]
    %v3192 = vld [vmem:[%s12 + $0x30] sm:$0xf]
    %v3193 = vld [vmem:[%s12 + $0x34] sm:$0xf]
    %v3194 = vld [vmem:[%s12 + $0x38] sm:$0xf]
    %v3195 = vld [vmem:[%s12 + $0x3c] sm:$0xf]
    %v3196 = vld [vmem:[%s12 + $0x40] sm:$0xf]
    %v3197 = vld [vmem:[%s12 + $0x44] sm:$0xf]
    %v3198 = vld [vmem:[%s12 + $0x48] sm:$0xf]
    %v3199 = vld [vmem:[%s12 + $0x4c] sm:$0xf]
    %v3200 = vld [vmem:[%s12 + $0x50] sm:$0xf]
    %v3201 = vld [vmem:[%s12 + $0x54] sm:$0xf]
    %v3202 = vld [vmem:[%s12 + $0x58] sm:$0xf]
    %v3203 = vld [vmem:[%s12 + $0x5c] sm:$0xf]
    %v3204 = vld [vmem:[%s12 + $0x60] sm:$0xf]
    %v3205 = vld [vmem:[%s12 + $0x64] sm:$0xf]
    %v3206 = vld [vmem:[%s12 + $0x68] sm:$0xf]
    %v3207 = vld [vmem:[%s12 + $0x6c] sm:$0xf]
    %v3208 = vld [vmem:[%s12 + $0x70] sm:$0xf]
    %v3209 = vld [vmem:[%s12 + $0x74] sm:$0xf]
    %v3210 = vld [vmem:[%s12 + $0x78] sm:$0xf]
    %v3211 = vld [vmem:[%s12 + $0x7c] sm:$0xf]
    %v3212 = vld [vmem:[%s13] sm:$0x1]
    %v3214 = vlaneseq
    %v3215 = vshrl.u32 %v3214, 7
    %v3216 = vsub.s32 0, %v3215
    %v3217 = vrot.slane %v3212, %v3216
    %v3251 = vunpack.c.l.b16 %v3180
    %v3252 = vunpack.c.l.b16 %v3181
    %v3253 = vunpack.c.l.b16 %v3182
    %v3254 = vunpack.c.l.b16 %v3183
    %v3255 = vunpack.c.l.b16 %v3184
    %v3256 = vunpack.c.l.b16 %v3185
    %v3257 = vunpack.c.l.b16 %v3186
    %v3258 = vunpack.c.l.b16 %v3187
    %v3259 = vunpack.c.l.b16 %v3188
    %v3260 = vunpack.c.l.b16 %v3189
    %v3261 = vunpack.c.l.b16 %v3190
    %v3262 = vunpack.c.l.b16 %v3191
    %v3263 = vunpack.c.l.b16 %v3192
    %v3264 = vunpack.c.l.b16 %v3193
    %v3265 = vunpack.c.l.b16 %v3194
    %v3266 = vunpack.c.l.b16 %v3195
    %v3267 = vunpack.c.l.b16 %v3196
    %v3268 = vunpack.c.l.b16 %v3197
    %v3269 = vunpack.c.l.b16 %v3198
    %v3270 = vunpack.c.l.b16 %v3199
    %v3271 = vunpack.c.l.b16 %v3200
    %v3272 = vunpack.c.l.b16 %v3201
    %v3273 = vunpack.c.l.b16 %v3202
    %v3274 = vunpack.c.l.b16 %v3203
    %v3275 = vunpack.c.l.b16 %v3204
    %v3276 = vunpack.c.l.b16 %v3205
    %v3277 = vunpack.c.l.b16 %v3206
    %v3278 = vunpack.c.l.b16 %v3207
    %v3279 = vunpack.c.l.b16 %v3208
    %v3280 = vunpack.c.l.b16 %v3209
    %v3281 = vunpack.c.l.b16 %v3210
    %v3282 = vunpack.c.l.b16 %v3211
    %v3283 = vpack.c.b16 %v3252, %v3251
    %v3284 = vpack.c.b16 %v3254, %v3253
    %v3285 = vpack.c.b16 %v3256, %v3255
    %v3286 = vpack.c.b16 %v3258, %v3257
    %v3287 = vpack.c.b16 %v3260, %v3259
    %v3288 = vpack.c.b16 %v3262, %v3261
    %v3289 = vpack.c.b16 %v3264, %v3263
    %v3290 = vpack.c.b16 %v3266, %v3265
    %v3291 = vpack.c.b16 %v3268, %v3267
    %v3292 = vpack.c.b16 %v3270, %v3269
    %v3293 = vpack.c.b16 %v3272, %v3271
    %v3294 = vpack.c.b16 %v3274, %v3273
    %v3295 = vpack.c.b16 %v3276, %v3275
    %v3296 = vpack.c.b16 %v3278, %v3277
    %v3297 = vpack.c.b16 %v3280, %v3279
    %v3298 = vpack.c.b16 %v3282, %v3281
    %3315 = vmatprep.subr.bf16.mxu0 0
    %3316 = vmatpush1.bf16.msra.mxu0 %v3283
    %3317 = vmatprep.subr.bf16.mxu0 0
    %3318 = vmatpush1.bf16.msra.mxu0 %v3284
    %3319 = vmatprep.subr.bf16.mxu0 0
    %3320 = vmatpush1.bf16.msra.mxu0 %v3285
    %3321 = vmatprep.subr.bf16.mxu0 0
    %3322 = vmatpush1.bf16.msra.mxu0 %v3286
    %3323 = vmatprep.subr.bf16.mxu0 0
    %3324 = vmatpush1.bf16.msra.mxu0 %v3287
    %3325 = vmatprep.subr.bf16.mxu0 0
    %3326 = vmatpush1.bf16.msra.mxu0 %v3288
    %3327 = vmatprep.subr.bf16.mxu0 0
    %3328 = vmatpush1.bf16.msra.mxu0 %v3289
    %3329 = vmatprep.subr.bf16.mxu0 0
    %3330 = vmatpush1.bf16.msra.mxu0 %v3290
    %3331 = vmatprep.subr.bf16.mxu0 0
    %3332 = vmatpush1.bf16.msra.mxu0 %v3291
    %3333 = vmatprep.subr.bf16.mxu0 0
    %3334 = vmatpush1.bf16.msra.mxu0 %v3292
    %3335 = vmatprep.subr.bf16.mxu0 0
    %3336 = vmatpush1.bf16.msra.mxu0 %v3293
    %3337 = vmatprep.subr.bf16.mxu0 0
    %3338 = vmatpush1.bf16.msra.mxu0 %v3294
    %3339 = vmatprep.subr.bf16.mxu0 0
    %3340 = vmatpush1.bf16.msra.mxu0 %v3295
    %3341 = vmatprep.subr.bf16.mxu0 0
    %3342 = vmatpush1.bf16.msra.mxu0 %v3296
    %3343 = vmatprep.subr.bf16.mxu0 0
    %3344 = vmatpush1.bf16.msra.mxu0 %v3297
    %3345 = vmatprep.subr.bf16.mxu0 0
    %3346 = vmatpush1.bf16.msra.mxu0 %v3298
    %3347 = vmatprep.mubr.bf16.mxu0 %v3177
    %3348 = vmatmul.mubr.bf16.gmra.mrb[0].mxu0 %v3176
    %v3349 = vpop.f32.mrb[0].mxu0
    %v3350 = vadd.f32 %v3217, %v3349
    %v3351 = vpop.f32.mrb[0].mxu0
    %v3352 = vpop.f32.mrb[0].mxu0
    %v3353 = vadd.f32 %v3217, %v3352
    %v3354 = vpop.f32.mrb[0].mxu0
    %3355 = vmatprep.mubr.bf16.mxu0 %v3179
    %3356 = vmatmul.mubr.bf16.gmra.mrb[0].mxu0 %v3178
    %v3357 = vpop.f32.mrb[0].mxu0
    %v3358 = vadd.f32 %v3217, %v3357
    %v3359 = vpop.f32.mrb[0].mxu0
    %v3360 = vpop.f32.mrb[0].mxu0
    %v3361 = vadd.f32 %v3217, %v3360
    %v3362 = vpop.f32.mrb[0].mxu0
    %3363 = vdwg.mxu0
    %v3364 = vadd.f32 %v2871, %v3350
    %v3365 = vadd.f32 %v2872, %v3353
    %v3366 = vadd.f32 %v2873, %v3358
    %v3367 = vadd.f32 %v2874, %v3361
    %3368 = vst [vmem:[#allocation2] sm:$0xff] %v3364
    %3369 = vst [vmem:[#allocation2 + $0x8] sm:$0xff] %v3365
    %3370 = vst [vmem:[#allocation2 + $0x10] sm:$0xff] %v3366
    %3371 = vst [vmem:[#allocation2 + $0x18] sm:$0xff] %v3367
    // Predicated region
    $region58: #{tpu_custom_call.1} parent=1 // pred_check
      _
    $region59: #{tpu_custom_call.1} parent=1 // pred_check_branch
      %3373 = sbr.rel (0) target = $region61
    $region60: #{tpu_custom_call.1} parent=1 // pred_region
      %s3375 = ssub.s32 512, 512
      %3376 = vsyncadd [#allocation3], %s3375
      %s3377 = sshll.u32 [#allocation2], 4
      %s3378 = int_to_ptr.vmem [resolvable:$true] %s3377
      %3383 = dma.vmem_to_hbm [thread:$0]  %s3378, 512, %s14, [#allocation3], 128, 128, 8
    $region61: #{tpu_custom_call.1} parent=1 // pred_fallthru
      _
    // Predicated region
    $region62: #{tpu_custom_call.1} parent=1 // pred_check
      _
    $region63: #{tpu_custom_call.1} parent=1 // pred_check_branch
      %3385 = sbr.rel (0) target = $region65
    $region64: #{tpu_custom_call.1} parent=1 // pred_region
      %3386 = dma.done [#allocation3], 512
    $region65: #{tpu_custom_call.1} parent=1 // pred_fallthru
      _
    %3387 = vsyncpa [#allocation3], 1

</llo_original>
